<compile_context>
chip_gen: v7x
topology: tpu7x:2x2x1
jax: 0.10.0
libtpu: 0.0.40
codegen_flags: <defaults>
</compile_context>

<pallas_src>
import math

import jax
import jax.numpy as jnp
from jax.experimental import pallas as pl
from jax.experimental.pallas import tpu as pltpu

# ---- config (small, consistent with TransformerConfig but scaled down) ----
D_MODEL = 32
D_FF = 64
NUM_HEADS = 4
NUM_LAYERS = 2
D_HEAD = D_MODEL // NUM_HEADS
LN_EPS = 1e-5            # torch.nn.LayerNorm default
NEG_INF = -1e9           # matches the module's NEG_INF


# ---------------- in-kernel helpers ----------------
def _layernorm(v, gamma, beta):
    # v: (N, D), gamma/beta: (1, D)
    mu = jnp.mean(v, axis=-1, keepdims=True)
    var = jnp.mean((v - mu) ** 2, axis=-1, keepdims=True)
    return (v - mu) * jax.lax.rsqrt(var + LN_EPS) * gamma + beta


# ---------------- the Pallas kernel: one batch element per grid step ----------------
def encoder_tower_kernel(x_ref, mask_ref, wqkv_ref, wo_ref, w1_ref, w2_ref,
                         b1_ref, vecd_ref, o_ref):
    L, D = x_ref.shape
    H, Dh, F = NUM_HEADS, D_HEAD, D_FF
    scale = 1.0 / math.sqrt(Dh)

    # Key-padding mask for this batch element -> additive row; matches
    # `mask = (mask * NEG_INF).unsqueeze(1).unsqueeze(1)` in EncoderTower.forward.
    madd = mask_ref[...] * NEG_INF                           # (1, L)

    # PositionEncoding rows live in vecd_ref[0:L, :].
    # TODO(synk): nn.Dropout layers are identity here (eval-mode semantics); the torch-side
    # `cache` memoization is host logic outside the kernel.
    x = x_ref[...] + vecd_ref[0:L, :]                        # (L, D)

    for layer in range(NUM_LAYERS):                          # statically unrolled (small)
        base = L + 5 * layer
        ln1_g = vecd_ref[base + 0:base + 1, :]
        ln1_b = vecd_ref[base + 1:base + 2, :]
        ln2_g = vecd_ref[base + 2:base + 3, :]
        ln2_b = vecd_ref[base + 3:base + 4, :]
        b2 = vecd_ref[base + 4:base + 5, :]
        b1 = b1_ref[layer:layer + 1, :]                      # (1, F)

        # ---- self-attention block: x = x + SelfAttn(LN(x)) ----
        xn = _layernorm(x, ln1_g, ln1_b)                                          # (L, D)
        # Fused QKV: one wide (L,D)@(D,3D) MXU pass (96-lane output).
        qkv = jnp.dot(xn, wqkv_ref[layer], preferred_element_type=jnp.float32)    # (L, 3D)
        # Cheap per-head split via static lane slices (columns are head-major Q|K|V).
        heads = jnp.stack([qkv[:, g * Dh:(g + 1) * Dh] for g in range(3 * H)],
                          axis=0)                                                  # (3H, L, Dh)
        q = heads[0:H] * scale                               # 1/sqrt(d_head) folded into Q once
        k = heads[H:2 * H]
        v = heads[2 * H:3 * H]
        s = jnp.einsum('hqd,hkd->hqk', q, k,
                       preferred_element_type=jnp.float32) + madd[None]           # (H, L, L)
        s = s - jnp.max(s, axis=-1, keepdims=True)
        p = jnp.exp(s)
        p = p / jnp.sum(p, axis=-1, keepdims=True)           # exact softmax (approx recip removed)
        ctx = jnp.einsum('hqk,hkd->hqd', p, v,
                         preferred_element_type=jnp.float32)                      # (H, L, Dh)
        # Fused output projection + head sum: concat heads once, single (L,D)@(D,D) dot.
        ctx_cat = jnp.concatenate([ctx[h] for h in range(H)], axis=-1)             # (L, D)
        x = x + jnp.dot(ctx_cat, wo_ref[layer], preferred_element_type=jnp.float32)

        # ---- FFN block: x = x + W2(relu(W1(LN(x)))) ----
        xn = _layernorm(x, ln2_g, ln2_b)
        hdn = jnp.maximum(
            jnp.dot(xn, w1_ref[layer], preferred_element_type=jnp.float32) + b1, 0.0)  # (L, F)
        x = x + jnp.dot(hdn, w2_ref[layer], preferred_element_type=jnp.float32) + b2

    # ---- final LayerNorm ----
    fin = L + 5 * NUM_LAYERS
    o_ref[...] = _layernorm(x, vecd_ref[fin:fin + 1, :],
                            vecd_ref[fin + 1:fin + 2, :]).astype(o_ref.dtype)


# ---------------- host-side packing (pure layout plumbing, runs under jit outside the kernel) ----------------
def position_encoding(L, D):
    pos = jnp.arange(L, dtype=jnp.float32)[:, None]
    sc = jnp.exp(-math.log(10000.0) * jnp.arange(0, D, 2, dtype=jnp.float32) / D)
    return jnp.concatenate([jnp.sin(pos * sc), jnp.cos(pos * sc)], axis=-1)      # (L, D)


def pack_params(params, L):
    wqkv, wo, w1s, w2s, b1s, rows_d = [], [], [], [], [], []
    rows_d.append(position_encoding(L, D_MODEL))                                # (L, D) — once, not per batch
    for (ln1_g, ln1_b, wq, wk, wv, wo_l, ln2_g, ln2_b, w1, b1, w2, b2) in params['layers']:
        wqkv.append(jnp.concatenate([wq, wk, wv], axis=1))                      # (D, 3D): head-major Q|K|V cols
        wo.append(wo_l)                                                         # (D, D)
        w1s.append(w1)                                                          # (D, F)
        w2s.append(w2)                                                          # (F, D) — no transposed packing
        b1s.append(b1[None, :])                                                 # (1, F)
        rows_d.append(jnp.stack([ln1_g, ln1_b, ln2_g, ln2_b, b2], axis=0))      # (5, D)
    rows_d.append(jnp.stack([params['final_g'], params['final_b']], axis=0))    # (2, D)
    return (jnp.stack(wqkv, axis=0),           # (NUM_LAYERS, D, 3D)
            jnp.stack(wo, axis=0),             # (NUM_LAYERS, D, D)
            jnp.stack(w1s, axis=0),            # (NUM_LAYERS, D, F)
            jnp.stack(w2s, axis=0),            # (NUM_LAYERS, F, D)
            jnp.concatenate(b1s, axis=0),      # (NUM_LAYERS, F)
            jnp.concatenate(rows_d, axis=0))   # (L + 5*NUM_LAYERS + 2, D)


@jax.jit
def encoder_tower_forward(src, mask, params):
    B, L, D = src.shape
    wqkv, wo, w1, w2, b1, vec_d = pack_params(params, L)
    mask3 = mask.astype(src.dtype).reshape(B, 1, L)          # raw 0/1 key-pad mask, per-batch row

    vmem = pl.BlockSpec(memory_space=pltpu.MemorySpace.VMEM)  # whole-array resident weight operands
    return pl.pallas_call(
        encoder_tower_kernel,
        out_shape=jax.ShapeDtypeStruct((B, L, D), src.dtype),
        grid=(B,),
        in_specs=[
            pl.BlockSpec((None, L, D), lambda b: (b, 0, 0)),  # x: one batch element per step
            pl.BlockSpec((None, 1, L), lambda b: (b, 0, 0)),  # key-pad mask row for this batch
            vmem, vmem, vmem, vmem, vmem, vmem,               # wqkv, wo, w1, w2, b1, vec_d
        ],
        out_specs=pl.BlockSpec((None, L, D), lambda b: (b, 0, 0)),
        compiler_params=pltpu.CompilerParams(dimension_semantics=("parallel",)),
    )(src, mask3, wqkv, wo, w1, w2, b1, vec_d)


# ---------------- pure-JAX reference (faithful to the PyTorch module) ----------------
def ref_encoder_tower(src, mask, params):
    B, L, D = src.shape
    H, Dh = NUM_HEADS, D_HEAD

    def ln(v, g, b):
        mu = v.mean(-1, keepdims=True)
        var = ((v - mu) ** 2).mean(-1, keepdims=True)
        return (v - mu) / jnp.sqrt(var + LN_EPS) * g + b

    x = src + position_encoding(L, D)[None]                                # PE; dropout = identity
    m = (mask.astype(jnp.float32) * NEG_INF)[:, None, None, :]             # (B, 1, 1, L)

    def split(t):
        return t.reshape(B, L, H, Dh).transpose(0, 2, 1, 3)

    for (ln1_g, ln1_b, wq, wk, wv, wo, ln2_g, ln2_b, w1, b1, w2, b2) in params['layers']:
        xn = ln(x, ln1_g, ln1_b)
        q, k, v = split(xn @ wq), split(xn @ wk), split(xn @ wv)
        s = q @ k.transpose(0, 1, 3, 2) / math.sqrt(Dh) + m
        p = jax.nn.softmax(s, axis=-1)
        ctx = (p @ v).transpose(0, 2, 1, 3).reshape(B, L, D)
        x = x + ctx @ wo
        xn = ln(x, ln2_g, ln2_b)
        x = x + (jax.nn.relu(xn @ w1 + b1) @ w2 + b2)

    return ln(x, params['final_g'], params['final_b'])


# ---------------- deterministic parameter init ----------------
def make_params(key):
    std = 0.05
    f32 = jnp.float32
    layer_keys = jax.random.split(key, NUM_LAYERS)
    layers = []
    for lk in layer_keys:
        ks = jax.random.split(lk, 8)
        layers.append((
            jnp.ones((D_MODEL,), f32),                                   # ln1 gamma
            jnp.zeros((D_MODEL,), f32),                                  # ln1 beta
            std * jax.random.normal(ks[0], (D_MODEL, D_MODEL), f32),     # Wq (in, out)
            std * jax.random.normal(ks[1], (D_MODEL, D_MODEL), f32),     # Wk
            std * jax.random.normal(ks[2], (D_MODEL, D_MODEL), f32),     # Wv
            std * jax.random.normal(ks[3], (D_MODEL, D_MODEL), f32),     # Wo
            jnp.ones((D_MODEL,), f32),                                   # ln2 gamma
            jnp.zeros((D_MODEL,), f32),                                  # ln2 beta
            std * jax.random.normal(ks[4], (D_MODEL, D_FF), f32),        # FFN W1
            std * jax.random.normal(ks[5], (D_FF,), f32),                # FFN b1
            std * jax.random.normal(ks[6], (D_FF, D_MODEL), f32),        # FFN W2
            std * jax.random.normal(ks[7], (D_MODEL,), f32),             # FFN b2
        ))
    return {'layers': layers,
            'final_g': jnp.ones((D_MODEL,), f32),
            'final_b': jnp.zeros((D_MODEL,), f32)}


if __name__ == "__main__":
    B, L = 2, 8

    key = jax.random.PRNGKey(0)
    kx, kp = jax.random.split(key, 2)

    src = jax.random.normal(kx, (B, L, D_MODEL), jnp.float32)
    # key-padding mask (1.0 = masked), as consumed by EncoderTower: mask the last 2 keys of batch 1
    mask = jnp.zeros((B, L), jnp.float32).at[1, L - 2:].set(1.0)

    params = make_params(kp)

    out = jax.block_until_ready(encoder_tower_forward(src, mask, params))

    with jax.default_matmul_precision("highest"):
        ref = ref_encoder_tower(src, mask, params)

    assert out.shape == (B, L, D_MODEL)
    max_err = jnp.max(jnp.abs(out - ref))
    # Softmax now uses an exact divide; remaining tolerance only covers MXU f32 matmul
    # pass-count / accumulation-order differences vs. the pure-JAX reference.
    assert jnp.allclose(out, ref, atol=1e-3, rtol=1e-3), f"max abs err = {max_err}"

    print("KERNEL_OK")
</pallas_src>

<mosaic_0001>
module attributes {stable_mosaic.version = 11 : i64} {
  func.func @encoder_tower_kernel(%arg0: i32, %arg1: memref<1x8x32xf32, #tpu.memory_space<vmem>>, %arg2: memref<1x1x8xf32, #tpu.memory_space<vmem>>, %arg3: memref<2x32x96xf32, #tpu.memory_space<vmem>>, %arg4: memref<2x32x32xf32, #tpu.memory_space<vmem>>, %arg5: memref<2x32x64xf32, #tpu.memory_space<vmem>>, %arg6: memref<2x64x32xf32, #tpu.memory_space<vmem>>, %arg7: memref<2x64xf32, #tpu.memory_space<vmem>>, %arg8: memref<20x32xf32, #tpu.memory_space<vmem>>, %arg9: memref<1x8x32xf32, #tpu.memory_space<vmem>>) attributes {dimension_semantics = [#tpu.dimension_semantics<parallel>], iteration_bounds = array<i64: 2>, scalar_prefetch = 0 : i64, scratch_operands = 0 : i64, tpu.core_type = #tpu.core_type<tc>, window_params = [{transform_indices = @transform_0, window_bounds = array<i64: 1, 8, 32>}, {transform_indices = @transform_1, window_bounds = array<i64: 1, 1, 8>}, {pipeline_mode = #tpu.pipeline_mode<synchronous>, transform_indices = @transform_2, window_bounds = array<i64: 2, 32, 96>}, {pipeline_mode = #tpu.pipeline_mode<synchronous>, transform_indices = @transform_3, window_bounds = array<i64: 2, 32, 32>}, {pipeline_mode = #tpu.pipeline_mode<synchronous>, transform_indices = @transform_4, window_bounds = array<i64: 2, 32, 64>}, {pipeline_mode = #tpu.pipeline_mode<synchronous>, transform_indices = @transform_5, window_bounds = array<i64: 2, 64, 32>}, {pipeline_mode = #tpu.pipeline_mode<synchronous>, transform_indices = @transform_6, window_bounds = array<i64: 2, 64>}, {pipeline_mode = #tpu.pipeline_mode<synchronous>, transform_indices = @transform_7, window_bounds = array<i64: 20, 32>}, {transform_indices = @transform_8, window_bounds = array<i64: 1, 8, 32>}]} {
    %c0 = arith.constant 0 : index
    %c0_0 = arith.constant 0 : index
    %c0_1 = arith.constant 0 : index
    %0 = vector.load %arg2[%c0, %c0_0, %c0_1] : memref<1x1x8xf32, #tpu.memory_space<vmem>>, vector<1x1x8xf32>
    %1 = vector.shape_cast %0 : vector<1x1x8xf32> to vector<1x8xf32>
    %cst = arith.constant -1.000000e+09 : f32
    %2 = vector.broadcast %cst : f32 to vector<1x8xf32>
    %3 = arith.mulf %1, %2 : vector<1x8xf32>
    %c0_2 = arith.constant 0 : index
    %c0_3 = arith.constant 0 : index
    %c0_4 = arith.constant 0 : index
    %4 = vector.load %arg1[%c0_2, %c0_3, %c0_4] : memref<1x8x32xf32, #tpu.memory_space<vmem>>, vector<1x8x32xf32>
    %5 = vector.shape_cast %4 : vector<1x8x32xf32> to vector<8x32xf32>
    %c0_5 = arith.constant 0 : index
    %c0_6 = arith.constant 0 : index
    %6 = vector.load %arg8[%c0_5, %c0_6] : memref<20x32xf32, #tpu.memory_space<vmem>>, vector<8x32xf32>
    %7 = arith.addf %5, %6 : vector<8x32xf32>
    %c8 = arith.constant 8 : index
    %c0_7 = arith.constant 0 : index
    %8 = vector.load %arg8[%c8, %c0_7] : memref<20x32xf32, #tpu.memory_space<vmem>>, vector<1x32xf32>
    %c9 = arith.constant 9 : index
    %c0_8 = arith.constant 0 : index
    %9 = vector.load %arg8[%c9, %c0_8] : memref<20x32xf32, #tpu.memory_space<vmem>>, vector<1x32xf32>
    %c10 = arith.constant 10 : index
    %c0_9 = arith.constant 0 : index
    %10 = vector.load %arg8[%c10, %c0_9] : memref<20x32xf32, #tpu.memory_space<vmem>>, vector<1x32xf32>
    %c11 = arith.constant 11 : index
    %c0_10 = arith.constant 0 : index
    %11 = vector.load %arg8[%c11, %c0_10] : memref<20x32xf32, #tpu.memory_space<vmem>>, vector<1x32xf32>
    %c12 = arith.constant 12 : index
    %c0_11 = arith.constant 0 : index
    %12 = vector.load %arg8[%c12, %c0_11] : memref<20x32xf32, #tpu.memory_space<vmem>>, vector<1x32xf32>
    %c0_12 = arith.constant 0 : index
    %c0_13 = arith.constant 0 : index
    %13 = vector.load %arg7[%c0_12, %c0_13] : memref<2x64xf32, #tpu.memory_space<vmem>>, vector<1x64xf32>
    %cst_14 = arith.constant dense<0.000000e+00> : vector<8xf32>
    %14 = vector.multi_reduction <add>, %7, %cst_14 [1] : vector<8x32xf32> to vector<8xf32>
    %15 = vector.shape_cast %14 : vector<8xf32> to vector<8x1xf32>
    %cst_15 = arith.constant 3.200000e+01 : f32
    %16 = vector.broadcast %cst_15 : f32 to vector<8x1xf32>
    %17 = arith.divf %15, %16 : vector<8x1xf32>
    %18 = vector.broadcast %17 : vector<8x1xf32> to vector<8x32xf32>
    %19 = arith.subf %7, %18 : vector<8x32xf32>
    %20 = arith.mulf %19, %19 : vector<8x32xf32>
    %cst_16 = arith.constant dense<0.000000e+00> : vector<8xf32>
    %21 = vector.multi_reduction <add>, %20, %cst_16 [1] : vector<8x32xf32> to vector<8xf32>
    %22 = vector.shape_cast %21 : vector<8xf32> to vector<8x1xf32>
    %cst_17 = arith.constant 3.200000e+01 : f32
    %23 = vector.broadcast %cst_17 : f32 to vector<8x1xf32>
    %24 = arith.divf %22, %23 : vector<8x1xf32>
    %25 = vector.broadcast %17 : vector<8x1xf32> to vector<8x32xf32>
    %26 = arith.subf %7, %25 : vector<8x32xf32>
    %cst_18 = arith.constant 9.99999974E-6 : f32
    %27 = vector.broadcast %cst_18 : f32 to vector<8x1xf32>
    %28 = arith.addf %24, %27 : vector<8x1xf32>
    %29 = math.rsqrt %28 : vector<8x1xf32>
    %30 = vector.broadcast %29 : vector<8x1xf32> to vector<8x32xf32>
    %31 = arith.mulf %26, %30 : vector<8x32xf32>
    %32 = vector.broadcast %8 : vector<1x32xf32> to vector<8x32xf32>
    %33 = arith.mulf %31, %32 : vector<8x32xf32>
    %34 = vector.broadcast %9 : vector<1x32xf32> to vector<8x32xf32>
    %35 = arith.addf %33, %34 : vector<8x32xf32>
    %c0_19 = arith.constant 0 : index
    %c0_20 = arith.constant 0 : index
    %c0_21 = arith.constant 0 : index
    %36 = vector.load %arg3[%c0_19, %c0_20, %c0_21] : memref<2x32x96xf32, #tpu.memory_space<vmem>>, vector<1x32x96xf32>
    %37 = vector.shape_cast %36 : vector<1x32x96xf32> to vector<32x96xf32>
    %cst_22 = arith.constant dense<0.000000e+00> : vector<8x96xf32>
    %38 = tpu.matmul %35, %37, %cst_22 {dimension_numbers = #tpu.dot_dimension_numbers<[1], [0], [0], [1], [0, 0, 1, 1], [], []>} : vector<8x32xf32>, vector<32x96xf32>, vector<8x96xf32> -> vector<8x96xf32>
    %39 = vector.extract_strided_slice %38 {offsets = [0, 0], sizes = [8, 8], strides = [1, 1]} : vector<8x96xf32> to vector<8x8xf32>
    %40 = vector.extract_strided_slice %38 {offsets = [0, 8], sizes = [8, 8], strides = [1, 1]} : vector<8x96xf32> to vector<8x8xf32>
    %41 = vector.extract_strided_slice %38 {offsets = [0, 16], sizes = [8, 8], strides = [1, 1]} : vector<8x96xf32> to vector<8x8xf32>
    %42 = vector.extract_strided_slice %38 {offsets = [0, 24], sizes = [8, 8], strides = [1, 1]} : vector<8x96xf32> to vector<8x8xf32>
    %43 = vector.extract_strided_slice %38 {offsets = [0, 32], sizes = [8, 8], strides = [1, 1]} : vector<8x96xf32> to vector<8x8xf32>
    %44 = vector.extract_strided_slice %38 {offsets = [0, 40], sizes = [8, 8], strides = [1, 1]} : vector<8x96xf32> to vector<8x8xf32>
    %45 = vector.extract_strided_slice %38 {offsets = [0, 48], sizes = [8, 8], strides = [1, 1]} : vector<8x96xf32> to vector<8x8xf32>
    %46 = vector.extract_strided_slice %38 {offsets = [0, 56], sizes = [8, 8], strides = [1, 1]} : vector<8x96xf32> to vector<8x8xf32>
    %47 = vector.extract_strided_slice %38 {offsets = [0, 64], sizes = [8, 8], strides = [1, 1]} : vector<8x96xf32> to vector<8x8xf32>
    %48 = vector.extract_strided_slice %38 {offsets = [0, 72], sizes = [8, 8], strides = [1, 1]} : vector<8x96xf32> to vector<8x8xf32>
    %49 = vector.extract_strided_slice %38 {offsets = [0, 80], sizes = [8, 8], strides = [1, 1]} : vector<8x96xf32> to vector<8x8xf32>
    %50 = vector.extract_strided_slice %38 {offsets = [0, 88], sizes = [8, 8], strides = [1, 1]} : vector<8x96xf32> to vector<8x8xf32>
    %51 = vector.shape_cast %39 : vector<8x8xf32> to vector<1x8x8xf32>
    %52 = vector.shape_cast %40 : vector<8x8xf32> to vector<1x8x8xf32>
    %53 = vector.shape_cast %41 : vector<8x8xf32> to vector<1x8x8xf32>
    %54 = vector.shape_cast %42 : vector<8x8xf32> to vector<1x8x8xf32>
    %55 = vector.shape_cast %43 : vector<8x8xf32> to vector<1x8x8xf32>
    %56 = vector.shape_cast %44 : vector<8x8xf32> to vector<1x8x8xf32>
    %57 = vector.shape_cast %45 : vector<8x8xf32> to vector<1x8x8xf32>
    %58 = vector.shape_cast %46 : vector<8x8xf32> to vector<1x8x8xf32>
    %59 = vector.shape_cast %47 : vector<8x8xf32> to vector<1x8x8xf32>
    %60 = vector.shape_cast %48 : vector<8x8xf32> to vector<1x8x8xf32>
    %61 = vector.shape_cast %49 : vector<8x8xf32> to vector<1x8x8xf32>
    %62 = vector.shape_cast %50 : vector<8x8xf32> to vector<1x8x8xf32>
    %63 = tpu.concatenate %51, %52, %53, %54, %55, %56, %57, %58, %59, %60, %61, %62 in 0 : vector<1x8x8xf32>, vector<1x8x8xf32>, vector<1x8x8xf32>, vector<1x8x8xf32>, vector<1x8x8xf32>, vector<1x8x8xf32>, vector<1x8x8xf32>, vector<1x8x8xf32>, vector<1x8x8xf32>, vector<1x8x8xf32>, vector<1x8x8xf32>, vector<1x8x8xf32> -> vector<12x8x8xf32>
    %64 = vector.extract_strided_slice %63 {offsets = [0, 0, 0], sizes = [4, 8, 8], strides = [1, 1, 1]} : vector<12x8x8xf32> to vector<4x8x8xf32>
    %cst_23 = arith.constant 0.353553385 : f32
    %65 = vector.broadcast %cst_23 : f32 to vector<4x8x8xf32>
    %66 = arith.mulf %64, %65 : vector<4x8x8xf32>
    %67 = vector.extract_strided_slice %63 {offsets = [4, 0, 0], sizes = [4, 8, 8], strides = [1, 1, 1]} : vector<12x8x8xf32> to vector<4x8x8xf32>
    %68 = vector.extract_strided_slice %63 {offsets = [8, 0, 0], sizes = [4, 8, 8], strides = [1, 1, 1]} : vector<12x8x8xf32> to vector<4x8x8xf32>
    "tpu.trace_start"() <{level = 10 : i32, message = "hqd,hkd->hqk"}> : () -> ()
    %cst_24 = arith.constant dense<0.000000e+00> : vector<4x8x8xf32>
    %69 = tpu.matmul %66, %67, %cst_24 {dimension_numbers = #tpu.dot_dimension_numbers<[2], [2], [1], [1], [0, 0, 0, 1, 1, 1], [0], [0]>} : vector<4x8x8xf32>, vector<4x8x8xf32>, vector<4x8x8xf32> -> vector<4x8x8xf32>
    "tpu.trace_stop"() : () -> ()
    %70 = vector.shape_cast %3 : vector<1x8xf32> to vector<1x1x8xf32>
    %71 = vector.broadcast %70 : vector<1x1x8xf32> to vector<4x8x8xf32>
    %72 = arith.addf %69, %71 : vector<4x8x8xf32>
    %cst_25 = arith.constant dense<0xFF800000> : vector<4x8xf32>
    %73 = vector.multi_reduction <maximumf>, %72, %cst_25 [2] : vector<4x8x8xf32> to vector<4x8xf32>
    %74 = vector.shape_cast %73 : vector<4x8xf32> to vector<4x8x1xf32>
    %75 = vector.broadcast %74 : vector<4x8x1xf32> to vector<4x8x8xf32>
    %76 = arith.subf %72, %75 : vector<4x8x8xf32>
    %77 = math.exp %76 : vector<4x8x8xf32>
    %cst_26 = arith.constant dense<0.000000e+00> : vector<4x8xf32>
    %78 = vector.multi_reduction <add>, %77, %cst_26 [2] : vector<4x8x8xf32> to vector<4x8xf32>
    %79 = vector.shape_cast %78 : vector<4x8xf32> to vector<4x8x1xf32>
    %80 = vector.broadcast %79 : vector<4x8x1xf32> to vector<4x8x8xf32>
    %81 = arith.divf %77, %80 : vector<4x8x8xf32>
    "tpu.trace_start"() <{level = 10 : i32, message = "hqk,hkd->hqd"}> : () -> ()
    %cst_27 = arith.constant dense<0.000000e+00> : vector<4x8x8xf32>
    %82 = tpu.matmul %81, %68, %cst_27 {dimension_numbers = #tpu.dot_dimension_numbers<[2], [1], [1], [2], [0, 0, 0, 1, 1, 2], [0], [0]>} : vector<4x8x8xf32>, vector<4x8x8xf32>, vector<4x8x8xf32> -> vector<4x8x8xf32>
    "tpu.trace_stop"() : () -> ()
    %83 = vector.extract_strided_slice %82 {offsets = [0, 0, 0], sizes = [1, 8, 8], strides = [1, 1, 1]} : vector<4x8x8xf32> to vector<1x8x8xf32>
    %84 = vector.shape_cast %83 : vector<1x8x8xf32> to vector<8x8xf32>
    %85 = vector.extract_strided_slice %82 {offsets = [1, 0, 0], sizes = [1, 8, 8], strides = [1, 1, 1]} : vector<4x8x8xf32> to vector<1x8x8xf32>
    %86 = vector.shape_cast %85 : vector<1x8x8xf32> to vector<8x8xf32>
    %87 = vector.extract_strided_slice %82 {offsets = [2, 0, 0], sizes = [1, 8, 8], strides = [1, 1, 1]} : vector<4x8x8xf32> to vector<1x8x8xf32>
    %88 = vector.shape_cast %87 : vector<1x8x8xf32> to vector<8x8xf32>
    %89 = vector.extract_strided_slice %82 {offsets = [3, 0, 0], sizes = [1, 8, 8], strides = [1, 1, 1]} : vector<4x8x8xf32> to vector<1x8x8xf32>
    %90 = vector.shape_cast %89 : vector<1x8x8xf32> to vector<8x8xf32>
    %91 = tpu.concatenate %84, %86, %88, %90 in 1 : vector<8x8xf32>, vector<8x8xf32>, vector<8x8xf32>, vector<8x8xf32> -> vector<8x32xf32>
    %c0_28 = arith.constant 0 : index
    %c0_29 = arith.constant 0 : index
    %c0_30 = arith.constant 0 : index
    %92 = vector.load %arg4[%c0_28, %c0_29, %c0_30] : memref<2x32x32xf32, #tpu.memory_space<vmem>>, vector<1x32x32xf32>
    %93 = vector.shape_cast %92 : vector<1x32x32xf32> to vector<32x32xf32>
    %cst_31 = arith.constant dense<0.000000e+00> : vector<8x32xf32>
    %94 = tpu.matmul %91, %93, %cst_31 {dimension_numbers = #tpu.dot_dimension_numbers<[1], [0], [0], [1], [0, 0, 1, 1], [], []>} : vector<8x32xf32>, vector<32x32xf32>, vector<8x32xf32> -> vector<8x32xf32>
    %95 = arith.addf %7, %94 : vector<8x32xf32>
    %cst_32 = arith.constant dense<0.000000e+00> : vector<8xf32>
    %96 = vector.multi_reduction <add>, %95, %cst_32 [1] : vector<8x32xf32> to vector<8xf32>
    %97 = vector.shape_cast %96 : vector<8xf32> to vector<8x1xf32>
    %cst_33 = arith.constant 3.200000e+01 : f32
    %98 = vector.broadcast %cst_33 : f32 to vector<8x1xf32>
    %99 = arith.divf %97, %98 : vector<8x1xf32>
    %100 = vector.broadcast %99 : vector<8x1xf32> to vector<8x32xf32>
    %101 = arith.subf %95, %100 : vector<8x32xf32>
    %102 = arith.mulf %101, %101 : vector<8x32xf32>
    %cst_34 = arith.constant dense<0.000000e+00> : vector<8xf32>
    %103 = vector.multi_reduction <add>, %102, %cst_34 [1] : vector<8x32xf32> to vector<8xf32>
    %104 = vector.shape_cast %103 : vector<8xf32> to vector<8x1xf32>
    %cst_35 = arith.constant 3.200000e+01 : f32
    %105 = vector.broadcast %cst_35 : f32 to vector<8x1xf32>
    %106 = arith.divf %104, %105 : vector<8x1xf32>
    %107 = vector.broadcast %99 : vector<8x1xf32> to vector<8x32xf32>
    %108 = arith.subf %95, %107 : vector<8x32xf32>
    %cst_36 = arith.constant 9.99999974E-6 : f32
    %109 = vector.broadcast %cst_36 : f32 to vector<8x1xf32>
    %110 = arith.addf %106, %109 : vector<8x1xf32>
    %111 = math.rsqrt %110 : vector<8x1xf32>
    %112 = vector.broadcast %111 : vector<8x1xf32> to vector<8x32xf32>
    %113 = arith.mulf %108, %112 : vector<8x32xf32>
    %114 = vector.broadcast %10 : vector<1x32xf32> to vector<8x32xf32>
    %115 = arith.mulf %113, %114 : vector<8x32xf32>
    %116 = vector.broadcast %11 : vector<1x32xf32> to vector<8x32xf32>
    %117 = arith.addf %115, %116 : vector<8x32xf32>
    %c0_37 = arith.constant 0 : index
    %c0_38 = arith.constant 0 : index
    %c0_39 = arith.constant 0 : index
    %118 = vector.load %arg5[%c0_37, %c0_38, %c0_39] : memref<2x32x64xf32, #tpu.memory_space<vmem>>, vector<1x32x64xf32>
    %119 = vector.shape_cast %118 : vector<1x32x64xf32> to vector<32x64xf32>
    %cst_40 = arith.constant dense<0.000000e+00> : vector<8x64xf32>
    %120 = tpu.matmul %117, %119, %cst_40 {dimension_numbers = #tpu.dot_dimension_numbers<[1], [0], [0], [1], [0, 0, 1, 1], [], []>} : vector<8x32xf32>, vector<32x64xf32>, vector<8x64xf32> -> vector<8x64xf32>
    %121 = vector.broadcast %13 : vector<1x64xf32> to vector<8x64xf32>
    %122 = arith.addf %120, %121 : vector<8x64xf32>
    %cst_41 = arith.constant 0.000000e+00 : f32
    %123 = vector.broadcast %cst_41 : f32 to vector<8x64xf32>
    %124 = arith.maximumf %122, %123 : vector<8x64xf32>
    %c0_42 = arith.constant 0 : index
    %c0_43 = arith.constant 0 : index
    %c0_44 = arith.constant 0 : index
    %125 = vector.load %arg6[%c0_42, %c0_43, %c0_44] : memref<2x64x32xf32, #tpu.memory_space<vmem>>, vector<1x64x32xf32>
    %126 = vector.shape_cast %125 : vector<1x64x32xf32> to vector<64x32xf32>
    %cst_45 = arith.constant dense<0.000000e+00> : vector<8x32xf32>
    %127 = tpu.matmul %124, %126, %cst_45 {dimension_numbers = #tpu.dot_dimension_numbers<[1], [0], [0], [1], [0, 0, 1, 1], [], []>} : vector<8x64xf32>, vector<64x32xf32>, vector<8x32xf32> -> vector<8x32xf32>
    %128 = arith.addf %95, %127 : vector<8x32xf32>
    %129 = vector.broadcast %12 : vector<1x32xf32> to vector<8x32xf32>
    %130 = arith.addf %128, %129 : vector<8x32xf32>
    %c13 = arith.constant 13 : index
    %c0_46 = arith.constant 0 : index
    %131 = vector.load %arg8[%c13, %c0_46] : memref<20x32xf32, #tpu.memory_space<vmem>>, vector<1x32xf32>
    %c14 = arith.constant 14 : index
    %c0_47 = arith.constant 0 : index
    %132 = vector.load %arg8[%c14, %c0_47] : memref<20x32xf32, #tpu.memory_space<vmem>>, vector<1x32xf32>
    %c15 = arith.constant 15 : index
    %c0_48 = arith.constant 0 : index
    %133 = vector.load %arg8[%c15, %c0_48] : memref<20x32xf32, #tpu.memory_space<vmem>>, vector<1x32xf32>
    %c16 = arith.constant 16 : index
    %c0_49 = arith.constant 0 : index
    %134 = vector.load %arg8[%c16, %c0_49] : memref<20x32xf32, #tpu.memory_space<vmem>>, vector<1x32xf32>
    %c17 = arith.constant 17 : index
    %c0_50 = arith.constant 0 : index
    %135 = vector.load %arg8[%c17, %c0_50] : memref<20x32xf32, #tpu.memory_space<vmem>>, vector<1x32xf32>
    %c1 = arith.constant 1 : index
    %c0_51 = arith.constant 0 : index
    %136 = vector.load %arg7[%c1, %c0_51] : memref<2x64xf32, #tpu.memory_space<vmem>>, vector<1x64xf32>
    %cst_52 = arith.constant dense<0.000000e+00> : vector<8xf32>
    %137 = vector.multi_reduction <add>, %130, %cst_52 [1] : vector<8x32xf32> to vector<8xf32>
    %138 = vector.shape_cast %137 : vector<8xf32> to vector<8x1xf32>
    %cst_53 = arith.constant 3.200000e+01 : f32
    %139 = vector.broadcast %cst_53 : f32 to vector<8x1xf32>
    %140 = arith.divf %138, %139 : vector<8x1xf32>
    %141 = vector.broadcast %140 : vector<8x1xf32> to vector<8x32xf32>
    %142 = arith.subf %130, %141 : vector<8x32xf32>
    %143 = arith.mulf %142, %142 : vector<8x32xf32>
    %cst_54 = arith.constant dense<0.000000e+00> : vector<8xf32>
    %144 = vector.multi_reduction <add>, %143, %cst_54 [1] : vector<8x32xf32> to vector<8xf32>
    %145 = vector.shape_cast %144 : vector<8xf32> to vector<8x1xf32>
    %cst_55 = arith.constant 3.200000e+01 : f32
    %146 = vector.broadcast %cst_55 : f32 to vector<8x1xf32>
    %147 = arith.divf %145, %146 : vector<8x1xf32>
    %148 = vector.broadcast %140 : vector<8x1xf32> to vector<8x32xf32>
    %149 = arith.subf %130, %148 : vector<8x32xf32>
    %cst_56 = arith.constant 9.99999974E-6 : f32
    %150 = vector.broadcast %cst_56 : f32 to vector<8x1xf32>
    %151 = arith.addf %147, %150 : vector<8x1xf32>
    %152 = math.rsqrt %151 : vector<8x1xf32>
    %153 = vector.broadcast %152 : vector<8x1xf32> to vector<8x32xf32>
    %154 = arith.mulf %149, %153 : vector<8x32xf32>
    %155 = vector.broadcast %131 : vector<1x32xf32> to vector<8x32xf32>
    %156 = arith.mulf %154, %155 : vector<8x32xf32>
    %157 = vector.broadcast %132 : vector<1x32xf32> to vector<8x32xf32>
    %158 = arith.addf %156, %157 : vector<8x32xf32>
    %c1_57 = arith.constant 1 : index
    %c0_58 = arith.constant 0 : index
    %c0_59 = arith.constant 0 : index
    %159 = vector.load %arg3[%c1_57, %c0_58, %c0_59] : memref<2x32x96xf32, #tpu.memory_space<vmem>>, vector<1x32x96xf32>
    %160 = vector.shape_cast %159 : vector<1x32x96xf32> to vector<32x96xf32>
    %cst_60 = arith.constant dense<0.000000e+00> : vector<8x96xf32>
    %161 = tpu.matmul %158, %160, %cst_60 {dimension_numbers = #tpu.dot_dimension_numbers<[1], [0], [0], [1], [0, 0, 1, 1], [], []>} : vector<8x32xf32>, vector<32x96xf32>, vector<8x96xf32> -> vector<8x96xf32>
    %162 = vector.extract_strided_slice %161 {offsets = [0, 0], sizes = [8, 8], strides = [1, 1]} : vector<8x96xf32> to vector<8x8xf32>
    %163 = vector.extract_strided_slice %161 {offsets = [0, 8], sizes = [8, 8], strides = [1, 1]} : vector<8x96xf32> to vector<8x8xf32>
    %164 = vector.extract_strided_slice %161 {offsets = [0, 16], sizes = [8, 8], strides = [1, 1]} : vector<8x96xf32> to vector<8x8xf32>
    %165 = vector.extract_strided_slice %161 {offsets = [0, 24], sizes = [8, 8], strides = [1, 1]} : vector<8x96xf32> to vector<8x8xf32>
    %166 = vector.extract_strided_slice %161 {offsets = [0, 32], sizes = [8, 8], strides = [1, 1]} : vector<8x96xf32> to vector<8x8xf32>
    %167 = vector.extract_strided_slice %161 {offsets = [0, 40], sizes = [8, 8], strides = [1, 1]} : vector<8x96xf32> to vector<8x8xf32>
    %168 = vector.extract_strided_slice %161 {offsets = [0, 48], sizes = [8, 8], strides = [1, 1]} : vector<8x96xf32> to vector<8x8xf32>
    %169 = vector.extract_strided_slice %161 {offsets = [0, 56], sizes = [8, 8], strides = [1, 1]} : vector<8x96xf32> to vector<8x8xf32>
    %170 = vector.extract_strided_slice %161 {offsets = [0, 64], sizes = [8, 8], strides = [1, 1]} : vector<8x96xf32> to vector<8x8xf32>
    %171 = vector.extract_strided_slice %161 {offsets = [0, 72], sizes = [8, 8], strides = [1, 1]} : vector<8x96xf32> to vector<8x8xf32>
    %172 = vector.extract_strided_slice %161 {offsets = [0, 80], sizes = [8, 8], strides = [1, 1]} : vector<8x96xf32> to vector<8x8xf32>
    %173 = vector.extract_strided_slice %161 {offsets = [0, 88], sizes = [8, 8], strides = [1, 1]} : vector<8x96xf32> to vector<8x8xf32>
    %174 = vector.shape_cast %162 : vector<8x8xf32> to vector<1x8x8xf32>
    %175 = vector.shape_cast %163 : vector<8x8xf32> to vector<1x8x8xf32>
    %176 = vector.shape_cast %164 : vector<8x8xf32> to vector<1x8x8xf32>
    %177 = vector.shape_cast %165 : vector<8x8xf32> to vector<1x8x8xf32>
    %178 = vector.shape_cast %166 : vector<8x8xf32> to vector<1x8x8xf32>
    %179 = vector.shape_cast %167 : vector<8x8xf32> to vector<1x8x8xf32>
    %180 = vector.shape_cast %168 : vector<8x8xf32> to vector<1x8x8xf32>
    %181 = vector.shape_cast %169 : vector<8x8xf32> to vector<1x8x8xf32>
    %182 = vector.shape_cast %170 : vector<8x8xf32> to vector<1x8x8xf32>
    %183 = vector.shape_cast %171 : vector<8x8xf32> to vector<1x8x8xf32>
    %184 = vector.shape_cast %172 : vector<8x8xf32> to vector<1x8x8xf32>
    %185 = vector.shape_cast %173 : vector<8x8xf32> to vector<1x8x8xf32>
    %186 = tpu.concatenate %174, %175, %176, %177, %178, %179, %180, %181, %182, %183, %184, %185 in 0 : vector<1x8x8xf32>, vector<1x8x8xf32>, vector<1x8x8xf32>, vector<1x8x8xf32>, vector<1x8x8xf32>, vector<1x8x8xf32>, vector<1x8x8xf32>, vector<1x8x8xf32>, vector<1x8x8xf32>, vector<1x8x8xf32>, vector<1x8x8xf32>, vector<1x8x8xf32> -> vector<12x8x8xf32>
    %187 = vector.extract_strided_slice %186 {offsets = [0, 0, 0], sizes = [4, 8, 8], strides = [1, 1, 1]} : vector<12x8x8xf32> to vector<4x8x8xf32>
    %cst_61 = arith.constant 0.353553385 : f32
    %188 = vector.broadcast %cst_61 : f32 to vector<4x8x8xf32>
    %189 = arith.mulf %187, %188 : vector<4x8x8xf32>
    %190 = vector.extract_strided_slice %186 {offsets = [4, 0, 0], sizes = [4, 8, 8], strides = [1, 1, 1]} : vector<12x8x8xf32> to vector<4x8x8xf32>
    %191 = vector.extract_strided_slice %186 {offsets = [8, 0, 0], sizes = [4, 8, 8], strides = [1, 1, 1]} : vector<12x8x8xf32> to vector<4x8x8xf32>
    "tpu.trace_start"() <{level = 10 : i32, message = "hqd,hkd->hqk"}> : () -> ()
    %cst_62 = arith.constant dense<0.000000e+00> : vector<4x8x8xf32>
    %192 = tpu.matmul %189, %190, %cst_62 {dimension_numbers = #tpu.dot_dimension_numbers<[2], [2], [1], [1], [0, 0, 0, 1, 1, 1], [0], [0]>} : vector<4x8x8xf32>, vector<4x8x8xf32>, vector<4x8x8xf32> -> vector<4x8x8xf32>
    "tpu.trace_stop"() : () -> ()
    %193 = vector.shape_cast %3 : vector<1x8xf32> to vector<1x1x8xf32>
    %194 = vector.broadcast %193 : vector<1x1x8xf32> to vector<4x8x8xf32>
    %195 = arith.addf %192, %194 : vector<4x8x8xf32>
    %cst_63 = arith.constant dense<0xFF800000> : vector<4x8xf32>
    %196 = vector.multi_reduction <maximumf>, %195, %cst_63 [2] : vector<4x8x8xf32> to vector<4x8xf32>
    %197 = vector.shape_cast %196 : vector<4x8xf32> to vector<4x8x1xf32>
    %198 = vector.broadcast %197 : vector<4x8x1xf32> to vector<4x8x8xf32>
    %199 = arith.subf %195, %198 : vector<4x8x8xf32>
    %200 = math.exp %199 : vector<4x8x8xf32>
    %cst_64 = arith.constant dense<0.000000e+00> : vector<4x8xf32>
    %201 = vector.multi_reduction <add>, %200, %cst_64 [2] : vector<4x8x8xf32> to vector<4x8xf32>
    %202 = vector.shape_cast %201 : vector<4x8xf32> to vector<4x8x1xf32>
    %203 = vector.broadcast %202 : vector<4x8x1xf32> to vector<4x8x8xf32>
    %204 = arith.divf %200, %203 : vector<4x8x8xf32>
    "tpu.trace_start"() <{level = 10 : i32, message = "hqk,hkd->hqd"}> : () -> ()
    %cst_65 = arith.constant dense<0.000000e+00> : vector<4x8x8xf32>
    %205 = tpu.matmul %204, %191, %cst_65 {dimension_numbers = #tpu.dot_dimension_numbers<[2], [1], [1], [2], [0, 0, 0, 1, 1, 2], [0], [0]>} : vector<4x8x8xf32>, vector<4x8x8xf32>, vector<4x8x8xf32> -> vector<4x8x8xf32>
    "tpu.trace_stop"() : () -> ()
    %206 = vector.extract_strided_slice %205 {offsets = [0, 0, 0], sizes = [1, 8, 8], strides = [1, 1, 1]} : vector<4x8x8xf32> to vector<1x8x8xf32>
    %207 = vector.shape_cast %206 : vector<1x8x8xf32> to vector<8x8xf32>
    %208 = vector.extract_strided_slice %205 {offsets = [1, 0, 0], sizes = [1, 8, 8], strides = [1, 1, 1]} : vector<4x8x8xf32> to vector<1x8x8xf32>
    %209 = vector.shape_cast %208 : vector<1x8x8xf32> to vector<8x8xf32>
    %210 = vector.extract_strided_slice %205 {offsets = [2, 0, 0], sizes = [1, 8, 8], strides = [1, 1, 1]} : vector<4x8x8xf32> to vector<1x8x8xf32>
    %211 = vector.shape_cast %210 : vector<1x8x8xf32> to vector<8x8xf32>
    %212 = vector.extract_strided_slice %205 {offsets = [3, 0, 0], sizes = [1, 8, 8], strides = [1, 1, 1]} : vector<4x8x8xf32> to vector<1x8x8xf32>
    %213 = vector.shape_cast %212 : vector<1x8x8xf32> to vector<8x8xf32>
    %214 = tpu.concatenate %207, %209, %211, %213 in 1 : vector<8x8xf32>, vector<8x8xf32>, vector<8x8xf32>, vector<8x8xf32> -> vector<8x32xf32>
    %c1_66 = arith.constant 1 : index
    %c0_67 = arith.constant 0 : index
    %c0_68 = arith.constant 0 : index
    %215 = vector.load %arg4[%c1_66, %c0_67, %c0_68] : memref<2x32x32xf32, #tpu.memory_space<vmem>>, vector<1x32x32xf32>
    %216 = vector.shape_cast %215 : vector<1x32x32xf32> to vector<32x32xf32>
    %cst_69 = arith.constant dense<0.000000e+00> : vector<8x32xf32>
    %217 = tpu.matmul %214, %216, %cst_69 {dimension_numbers = #tpu.dot_dimension_numbers<[1], [0], [0], [1], [0, 0, 1, 1], [], []>} : vector<8x32xf32>, vector<32x32xf32>, vector<8x32xf32> -> vector<8x32xf32>
    %218 = arith.addf %130, %217 : vector<8x32xf32>
    %cst_70 = arith.constant dense<0.000000e+00> : vector<8xf32>
    %219 = vector.multi_reduction <add>, %218, %cst_70 [1] : vector<8x32xf32> to vector<8xf32>
    %220 = vector.shape_cast %219 : vector<8xf32> to vector<8x1xf32>
    %cst_71 = arith.constant 3.200000e+01 : f32
    %221 = vector.broadcast %cst_71 : f32 to vector<8x1xf32>
    %222 = arith.divf %220, %221 : vector<8x1xf32>
    %223 = vector.broadcast %222 : vector<8x1xf32> to vector<8x32xf32>
    %224 = arith.subf %218, %223 : vector<8x32xf32>
    %225 = arith.mulf %224, %224 : vector<8x32xf32>
    %cst_72 = arith.constant dense<0.000000e+00> : vector<8xf32>
    %226 = vector.multi_reduction <add>, %225, %cst_72 [1] : vector<8x32xf32> to vector<8xf32>
    %227 = vector.shape_cast %226 : vector<8xf32> to vector<8x1xf32>
    %cst_73 = arith.constant 3.200000e+01 : f32
    %228 = vector.broadcast %cst_73 : f32 to vector<8x1xf32>
    %229 = arith.divf %227, %228 : vector<8x1xf32>
    %230 = vector.broadcast %222 : vector<8x1xf32> to vector<8x32xf32>
    %231 = arith.subf %218, %230 : vector<8x32xf32>
    %cst_74 = arith.constant 9.99999974E-6 : f32
    %232 = vector.broadcast %cst_74 : f32 to vector<8x1xf32>
    %233 = arith.addf %229, %232 : vector<8x1xf32>
    %234 = math.rsqrt %233 : vector<8x1xf32>
    %235 = vector.broadcast %234 : vector<8x1xf32> to vector<8x32xf32>
    %236 = arith.mulf %231, %235 : vector<8x32xf32>
    %237 = vector.broadcast %133 : vector<1x32xf32> to vector<8x32xf32>
    %238 = arith.mulf %236, %237 : vector<8x32xf32>
    %239 = vector.broadcast %134 : vector<1x32xf32> to vector<8x32xf32>
    %240 = arith.addf %238, %239 : vector<8x32xf32>
    %c1_75 = arith.constant 1 : index
    %c0_76 = arith.constant 0 : index
    %c0_77 = arith.constant 0 : index
    %241 = vector.load %arg5[%c1_75, %c0_76, %c0_77] : memref<2x32x64xf32, #tpu.memory_space<vmem>>, vector<1x32x64xf32>
    %242 = vector.shape_cast %241 : vector<1x32x64xf32> to vector<32x64xf32>
    %cst_78 = arith.constant dense<0.000000e+00> : vector<8x64xf32>
    %243 = tpu.matmul %240, %242, %cst_78 {dimension_numbers = #tpu.dot_dimension_numbers<[1], [0], [0], [1], [0, 0, 1, 1], [], []>} : vector<8x32xf32>, vector<32x64xf32>, vector<8x64xf32> -> vector<8x64xf32>
    %244 = vector.broadcast %136 : vector<1x64xf32> to vector<8x64xf32>
    %245 = arith.addf %243, %244 : vector<8x64xf32>
    %cst_79 = arith.constant 0.000000e+00 : f32
    %246 = vector.broadcast %cst_79 : f32 to vector<8x64xf32>
    %247 = arith.maximumf %245, %246 : vector<8x64xf32>
    %c1_80 = arith.constant 1 : index
    %c0_81 = arith.constant 0 : index
    %c0_82 = arith.constant 0 : index
    %248 = vector.load %arg6[%c1_80, %c0_81, %c0_82] : memref<2x64x32xf32, #tpu.memory_space<vmem>>, vector<1x64x32xf32>
    %249 = vector.shape_cast %248 : vector<1x64x32xf32> to vector<64x32xf32>
    %cst_83 = arith.constant dense<0.000000e+00> : vector<8x32xf32>
    %250 = tpu.matmul %247, %249, %cst_83 {dimension_numbers = #tpu.dot_dimension_numbers<[1], [0], [0], [1], [0, 0, 1, 1], [], []>} : vector<8x64xf32>, vector<64x32xf32>, vector<8x32xf32> -> vector<8x32xf32>
    %251 = arith.addf %218, %250 : vector<8x32xf32>
    %252 = vector.broadcast %135 : vector<1x32xf32> to vector<8x32xf32>
    %253 = arith.addf %251, %252 : vector<8x32xf32>
    %c18 = arith.constant 18 : index
    %c0_84 = arith.constant 0 : index
    %254 = vector.load %arg8[%c18, %c0_84] : memref<20x32xf32, #tpu.memory_space<vmem>>, vector<1x32xf32>
    %c19 = arith.constant 19 : index
    %c0_85 = arith.constant 0 : index
    %255 = vector.load %arg8[%c19, %c0_85] : memref<20x32xf32, #tpu.memory_space<vmem>>, vector<1x32xf32>
    %cst_86 = arith.constant dense<0.000000e+00> : vector<8xf32>
    %256 = vector.multi_reduction <add>, %253, %cst_86 [1] : vector<8x32xf32> to vector<8xf32>
    %257 = vector.shape_cast %256 : vector<8xf32> to vector<8x1xf32>
    %cst_87 = arith.constant 3.200000e+01 : f32
    %258 = vector.broadcast %cst_87 : f32 to vector<8x1xf32>
    %259 = arith.divf %257, %258 : vector<8x1xf32>
    %260 = vector.broadcast %259 : vector<8x1xf32> to vector<8x32xf32>
    %261 = arith.subf %253, %260 : vector<8x32xf32>
    %262 = arith.mulf %261, %261 : vector<8x32xf32>
    %cst_88 = arith.constant dense<0.000000e+00> : vector<8xf32>
    %263 = vector.multi_reduction <add>, %262, %cst_88 [1] : vector<8x32xf32> to vector<8xf32>
    %264 = vector.shape_cast %263 : vector<8xf32> to vector<8x1xf32>
    %cst_89 = arith.constant 3.200000e+01 : f32
    %265 = vector.broadcast %cst_89 : f32 to vector<8x1xf32>
    %266 = arith.divf %264, %265 : vector<8x1xf32>
    %267 = vector.broadcast %259 : vector<8x1xf32> to vector<8x32xf32>
    %268 = arith.subf %253, %267 : vector<8x32xf32>
    %cst_90 = arith.constant 9.99999974E-6 : f32
    %269 = vector.broadcast %cst_90 : f32 to vector<8x1xf32>
    %270 = arith.addf %266, %269 : vector<8x1xf32>
    %271 = math.rsqrt %270 : vector<8x1xf32>
    %272 = vector.broadcast %271 : vector<8x1xf32> to vector<8x32xf32>
    %273 = arith.mulf %268, %272 : vector<8x32xf32>
    %274 = vector.broadcast %254 : vector<1x32xf32> to vector<8x32xf32>
    %275 = arith.mulf %273, %274 : vector<8x32xf32>
    %276 = vector.broadcast %255 : vector<1x32xf32> to vector<8x32xf32>
    %277 = arith.addf %275, %276 : vector<8x32xf32>
    %c0_91 = arith.constant 0 : index
    %c0_92 = arith.constant 0 : index
    %c0_93 = arith.constant 0 : index
    %278 = vector.load %arg9[%c0_91, %c0_92, %c0_93] : memref<1x8x32xf32, #tpu.memory_space<vmem>>, vector<1x8x32xf32>
    %279 = vector.shape_cast %278 : vector<1x8x32xf32> to vector<8x32xf32>
    %280 = vector.shape_cast %277 : vector<8x32xf32> to vector<1x8x32xf32>
    tpu.vector_store %arg9[%c0_91, %c0_92, %c0_93], %280 {strides = array<i32>} : memref<1x8x32xf32, #tpu.memory_space<vmem>>, vector<1x8x32xf32>,
    return
  }
  func.func @transform_0(%arg0: i32) -> (i32, i32, i32) {
    %c0_i32 = arith.constant 0 : i32
    %c0_i32_0 = arith.constant 0 : i32
    %c0_i32_1 = arith.constant 0 : i32
    return %arg0, %c0_i32, %c0_i32_0 : i32, i32, i32
  }
  func.func @transform_1(%arg0: i32) -> (i32, i32, i32) {
    %c0_i32 = arith.constant 0 : i32
    %c0_i32_0 = arith.constant 0 : i32
    %c0_i32_1 = arith.constant 0 : i32
    return %arg0, %c0_i32, %c0_i32_0 : i32, i32, i32
  }
  func.func @transform_2(%arg0: i32) -> (i32, i32, i32) {
    %c0_i32 = arith.constant 0 : i32
    %c0_i32_0 = arith.constant 0 : i32
    %c0_i32_1 = arith.constant 0 : i32
    %c0_i32_2 = arith.constant 0 : i32
    return %c0_i32, %c0_i32_0, %c0_i32_1 : i32, i32, i32
  }
  func.func @transform_3(%arg0: i32) -> (i32, i32, i32) {
    %c0_i32 = arith.constant 0 : i32
    %c0_i32_0 = arith.constant 0 : i32
    %c0_i32_1 = arith.constant 0 : i32
    %c0_i32_2 = arith.constant 0 : i32
    return %c0_i32, %c0_i32_0, %c0_i32_1 : i32, i32, i32
  }
  func.func @transform_4(%arg0: i32) -> (i32, i32, i32) {
    %c0_i32 = arith.constant 0 : i32
    %c0_i32_0 = arith.constant 0 : i32
    %c0_i32_1 = arith.constant 0 : i32
    %c0_i32_2 = arith.constant 0 : i32
    return %c0_i32, %c0_i32_0, %c0_i32_1 : i32, i32, i32
  }
  func.func @transform_5(%arg0: i32) -> (i32, i32, i32) {
    %c0_i32 = arith.constant 0 : i32
    %c0_i32_0 = arith.constant 0 : i32
    %c0_i32_1 = arith.constant 0 : i32
    %c0_i32_2 = arith.constant 0 : i32
    return %c0_i32, %c0_i32_0, %c0_i32_1 : i32, i32, i32
  }
  func.func @transform_6(%arg0: i32) -> (i32, i32) {
    %c0_i32 = arith.constant 0 : i32
    %c0_i32_0 = arith.constant 0 : i32
    %c0_i32_1 = arith.constant 0 : i32
    return %c0_i32, %c0_i32_0 : i32, i32
  }
  func.func @transform_7(%arg0: i32) -> (i32, i32) {
    %c0_i32 = arith.constant 0 : i32
    %c0_i32_0 = arith.constant 0 : i32
    %c0_i32_1 = arith.constant 0 : i32
    return %c0_i32, %c0_i32_0 : i32, i32
  }
  func.func @transform_8(%arg0: i32) -> (i32, i32, i32) {
    %c0_i32 = arith.constant 0 : i32
    %c0_i32_0 = arith.constant 0 : i32
    %c0_i32_1 = arith.constant 0 : i32
    return %arg0, %c0_i32, %c0_i32_0 : i32, i32, i32
  }
}

</mosaic_0001>

<llo_original>
// kernel: encoder_tower_forward.1
$region0: #{encoder_tower_forward.1}
  #allocation0 [shape = 'u32[]', space=smem, size = 0x4, offset = 0x4, fixed_abs, tag = 'smem constant byte address 0x4 - core index']
  #allocation1 [shape = 'u32[144,128]{1,0:T(1,128)}', space=vmem, size = 0x12000, scoped, tag = 'internal scratch']
  %s0 = inlined_call_operand.vmem [shape: f32[2,8,32], index: 0, kind: input, shape index: {}]
  %s1 = inlined_call_operand.vmem [shape: f32[2,1,8], index: 1, kind: input, shape index: {}]
  %s2 = inlined_call_operand.vmem [shape: f32[2,32,96], index: 2, kind: input, shape index: {}]
  %s3 = inlined_call_operand.vmem [shape: f32[2,32,32], index: 3, kind: input, shape index: {}]
  %s4 = inlined_call_operand.vmem [shape: f32[2,32,64], index: 4, kind: input, shape index: {}]
  %s5 = inlined_call_operand.vmem [shape: f32[2,64,32], index: 5, kind: input, shape index: {}]
  %s6 = inlined_call_operand.vmem [shape: f32[2,64], index: 6, kind: input, shape index: {}]
  %s7 = inlined_call_operand.vmem [shape: f32[20,32], index: 7, kind: input, shape index: {}]
  %s8 = inlined_call_operand.hbm [shape: f32[2,8,32], index: 8, kind: output, shape index: {}]
  %s9 = sld [smem:[#allocation0]]
  $region65: #{encoder_tower_forward.1} parent=0
    _
  %s11 = ssub.s32 1, %s9
  %s12 = scalar_select 0, %s11, %s9
  $region1: #{encoder_tower_forward.1} parent=0
    #allocation2 [shape = 'u8[8192]{0}', space=vmem, size = 0x2000, scoped, tag = 'output window, operand 0']
    #allocation3 [shape = 's32[2]{0}', space=sflag, size = 0x8, scoped, tag = 'scoped memory for encoder_tower_forward.1']
    %13 = vsyncpa [#allocation3], 0
    %s14 = scalar_lea.sflag [#allocation3], 1
    %15 = vsyncpa %s14, 0
    loop: start=0, step=1, limit=4
    $region2: #{encoder_tower_forward.1} parent=1 // loop_pre_header
      _
    $region3: #{encoder_tower_forward.1} parent=1 // loop_header
      %s17 = sphi 0, %s21
      %p18 = scmp.ge.s32.totalorder %s17, 4
      %s27 = sphi 0, %s29
      %s30 = sphi 0, %s27
      %s31 = sphi 0, %s30
      %s47 = sphi 0, %s31
      %s53 = sphi 0, %s55
      %s56 = sphi 0, %s53
      %s57 = sphi 0, %s56
      %s73 = sphi 0, %s57
      %s77 = sphi 0, %s77
      %s79 = sphi 0, %s77
      %s80 = sphi 0, %s79
      %s94 = sphi 0, %s80
      %s98 = sphi 0, %s98
      %s100 = sphi 0, %s98
      %s101 = sphi 0, %s100
      %s115 = sphi 0, %s101
      %s119 = sphi 0, %s119
      %s121 = sphi 0, %s119
      %s122 = sphi 0, %s121
      %s136 = sphi 0, %s122
      %s140 = sphi 0, %s140
      %s142 = sphi 0, %s140
      %s143 = sphi 0, %s142
      %s157 = sphi 0, %s143
      %s161 = sphi 0, %s161
      %s163 = sphi 0, %s161
      %s164 = sphi 0, %s163
      %s178 = sphi 0, %s164
      %s182 = sphi 0, %s182
      %s184 = sphi 0, %s182
      %s185 = sphi 0, %s184
      %s199 = sphi 0, %s185
      %s205 = sphi 0, %s207
      %s208 = sphi 0, %s205
      %s209 = sphi 0, %s208
      %s225 = sphi 0, %s209
    $region4: #{encoder_tower_forward.1} parent=1 // loop_header_branch
      %20 = sbr.rel (%p18) target = $region8
    $region5: #{encoder_tower_forward.1} parent=1 // loop_body
      %s22 = ssub.s32 %s17, 1
      %s23 = ssub.s32 %s17, 2
      %s24 = sadd.s32 %s17, 1
      %s25 = ssub.s32 %s17, %s24
      %p26 = scmp.eq.s32.totalorder %s25, 0
      %s28 = sadd.s32 %s27, 1
      %s29 = scalar_select %p26, %s27, %s28
      %p32 = pneg %p26
      %p33 = scmp.eq.s32.totalorder %s17, 1
      %p34 = por %p32, %p33
      %p35 = scmp.ne.s32.totalorder %s27, %s30
      %p36 = scmp.eq.s32.totalorder %s17, 0
      %p37 = por %p35, %p36
      %p38 = scmp.ne.s32.totalorder %s27, %s30
      %p39 = scmp.eq.s32.totalorder %s22, 1
      %p40 = por %p38, %p39
      %p41 = scmp.ne.s32.totalorder %s30, %s31
      %p42 = scmp.eq.s32.totalorder %s22, 0
      %p43 = por %p41, %p42
      %p44 = scmp.ne.s32.totalorder %s30, %s31
      %p45 = scmp.eq.s32.totalorder %s23, 1
      %p46 = por %p44, %p45
      %p48 = scmp.ne.s32.totalorder %s31, %s47
      %p49 = scmp.eq.s32.totalorder %s23, 0
      %p50 = por %p48, %p49
      %s51 = ssub.s32 %s17, %s24
      %p52 = scmp.eq.s32.totalorder %s51, 0
      %s54 = sadd.s32 %s53, 1
      %s55 = scalar_select %p52, %s53, %s54
      %p58 = pneg %p52
      %p59 = scmp.eq.s32.totalorder %s17, 1
      %p60 = por %p58, %p59
      %p61 = scmp.ne.s32.totalorder %s53, %s56
      %p62 = scmp.eq.s32.totalorder %s17, 0
      %p63 = por %p61, %p62
      %p64 = scmp.ne.s32.totalorder %s53, %s56
      %p65 = scmp.eq.s32.totalorder %s22, 1
      %p66 = por %p64, %p65
      %p67 = scmp.ne.s32.totalorder %s56, %s57
      %p68 = scmp.eq.s32.totalorder %s22, 0
      %p69 = por %p67, %p68
      %p70 = scmp.ne.s32.totalorder %s56, %s57
      %p71 = scmp.eq.s32.totalorder %s23, 1
      %p72 = por %p70, %p71
      %p74 = scmp.ne.s32.totalorder %s57, %s73
      %p75 = scmp.eq.s32.totalorder %s23, 0
      %p76 = por %p74, %p75
      %s78 = sadd.s32 %s77, 1
      %p81 = scmp.eq.s32.totalorder %s17, 1
      %p82 = scmp.ne.s32.totalorder %s77, %s79
      %p83 = scmp.eq.s32.totalorder %s17, 0
      %p84 = por %p82, %p83
      %p85 = scmp.ne.s32.totalorder %s77, %s79
      %p86 = scmp.eq.s32.totalorder %s22, 1
      %p87 = por %p85, %p86
      %p88 = scmp.ne.s32.totalorder %s79, %s80
      %p89 = scmp.eq.s32.totalorder %s22, 0
      %p90 = por %p88, %p89
      %p91 = scmp.ne.s32.totalorder %s79, %s80
      %p92 = scmp.eq.s32.totalorder %s23, 1
      %p93 = por %p91, %p92
      %p95 = scmp.ne.s32.totalorder %s80, %s94
      %p96 = scmp.eq.s32.totalorder %s23, 0
      %p97 = por %p95, %p96
      %s99 = sadd.s32 %s98, 1
      %p102 = scmp.eq.s32.totalorder %s17, 1
      %p103 = scmp.ne.s32.totalorder %s98, %s100
      %p104 = scmp.eq.s32.totalorder %s17, 0
      %p105 = por %p103, %p104
      %p106 = scmp.ne.s32.totalorder %s98, %s100
      %p107 = scmp.eq.s32.totalorder %s22, 1
      %p108 = por %p106, %p107
      %p109 = scmp.ne.s32.totalorder %s100, %s101
      %p110 = scmp.eq.s32.totalorder %s22, 0
      %p111 = por %p109, %p110
      %p112 = scmp.ne.s32.totalorder %s100, %s101
      %p113 = scmp.eq.s32.totalorder %s23, 1
      %p114 = por %p112, %p113
      %p116 = scmp.ne.s32.totalorder %s101, %s115
      %p117 = scmp.eq.s32.totalorder %s23, 0
      %p118 = por %p116, %p117
      %s120 = sadd.s32 %s119, 1
      %p123 = scmp.eq.s32.totalorder %s17, 1
      %p124 = scmp.ne.s32.totalorder %s119, %s121
      %p125 = scmp.eq.s32.totalorder %s17, 0
      %p126 = por %p124, %p125
      %p127 = scmp.ne.s32.totalorder %s119, %s121
      %p128 = scmp.eq.s32.totalorder %s22, 1
      %p129 = por %p127, %p128
      %p130 = scmp.ne.s32.totalorder %s121, %s122
      %p131 = scmp.eq.s32.totalorder %s22, 0
      %p132 = por %p130, %p131
      %p133 = scmp.ne.s32.totalorder %s121, %s122
      %p134 = scmp.eq.s32.totalorder %s23, 1
      %p135 = por %p133, %p134
      %p137 = scmp.ne.s32.totalorder %s122, %s136
      %p138 = scmp.eq.s32.totalorder %s23, 0
      %p139 = por %p137, %p138
      %s141 = sadd.s32 %s140, 1
      %p144 = scmp.eq.s32.totalorder %s17, 1
      %p145 = scmp.ne.s32.totalorder %s140, %s142
      %p146 = scmp.eq.s32.totalorder %s17, 0
      %p147 = por %p145, %p146
      %p148 = scmp.ne.s32.totalorder %s140, %s142
      %p149 = scmp.eq.s32.totalorder %s22, 1
      %p150 = por %p148, %p149
      %p151 = scmp.ne.s32.totalorder %s142, %s143
      %p152 = scmp.eq.s32.totalorder %s22, 0
      %p153 = por %p151, %p152
      %p154 = scmp.ne.s32.totalorder %s142, %s143
      %p155 = scmp.eq.s32.totalorder %s23, 1
      %p156 = por %p154, %p155
      %p158 = scmp.ne.s32.totalorder %s143, %s157
      %p159 = scmp.eq.s32.totalorder %s23, 0
      %p160 = por %p158, %p159
      %s162 = sadd.s32 %s161, 1
      %p165 = scmp.eq.s32.totalorder %s17, 1
      %p166 = scmp.ne.s32.totalorder %s161, %s163
      %p167 = scmp.eq.s32.totalorder %s17, 0
      %p168 = por %p166, %p167
      %p169 = scmp.ne.s32.totalorder %s161, %s163
      %p170 = scmp.eq.s32.totalorder %s22, 1
      %p171 = por %p169, %p170
      %p172 = scmp.ne.s32.totalorder %s163, %s164
      %p173 = scmp.eq.s32.totalorder %s22, 0
      %p174 = por %p172, %p173
      %p175 = scmp.ne.s32.totalorder %s163, %s164
      %p176 = scmp.eq.s32.totalorder %s23, 1
      %p177 = por %p175, %p176
      %p179 = scmp.ne.s32.totalorder %s164, %s178
      %p180 = scmp.eq.s32.totalorder %s23, 0
      %p181 = por %p179, %p180
      %s183 = sadd.s32 %s182, 1
      %p186 = scmp.eq.s32.totalorder %s17, 1
      %p187 = scmp.ne.s32.totalorder %s182, %s184
      %p188 = scmp.eq.s32.totalorder %s17, 0
      %p189 = por %p187, %p188
      %p190 = scmp.ne.s32.totalorder %s182, %s184
      %p191 = scmp.eq.s32.totalorder %s22, 1
      %p192 = por %p190, %p191
      %p193 = scmp.ne.s32.totalorder %s184, %s185
      %p194 = scmp.eq.s32.totalorder %s22, 0
      %p195 = por %p193, %p194
      %p196 = scmp.ne.s32.totalorder %s184, %s185
      %p197 = scmp.eq.s32.totalorder %s23, 1
      %p198 = por %p196, %p197
      %p200 = scmp.ne.s32.totalorder %s185, %s199
      %p201 = scmp.eq.s32.totalorder %s23, 0
      %p202 = por %p200, %p201
      %s203 = ssub.s32 %s17, %s24
      %p204 = scmp.eq.s32.totalorder %s203, 0
      %s206 = sadd.s32 %s205, 1
      %s207 = scalar_select %p204, %s205, %s206
      %p210 = pneg %p204
      %p211 = scmp.eq.s32.totalorder %s17, 1
      %p212 = por %p210, %p211
      %p213 = scmp.ne.s32.totalorder %s205, %s208
      %p214 = scmp.eq.s32.totalorder %s17, 0
      %p215 = por %p213, %p214
      %p216 = scmp.ne.s32.totalorder %s205, %s208
      %p217 = scmp.eq.s32.totalorder %s22, 1
      %p218 = por %p216, %p217
      %p219 = scmp.ne.s32.totalorder %s208, %s209
      %p220 = scmp.eq.s32.totalorder %s22, 0
      %p221 = por %p219, %p220
      %p222 = scmp.ne.s32.totalorder %s208, %s209
      %p223 = scmp.eq.s32.totalorder %s23, 1
      %p224 = por %p222, %p223
      %p226 = scmp.ne.s32.totalorder %s209, %s225
      %p227 = scmp.eq.s32.totalorder %s23, 0
      %p228 = por %p226, %p227
      %p229 = scmp.le.s32.totalorder 1, %s17
      %p230 = scmp.lt.s32.totalorder %s17, 3
      %p231 = pnand %p229, %p230
      %p232 = pneg %p231
      // Predicated region
      $region9: #{encoder_tower_forward.1} parent=5 // pred_check
        _
      $region10: #{encoder_tower_forward.1} parent=5 // pred_check_branch
        %234 = sbr.rel (%p231) target = $region12
      $region11: #{encoder_tower_forward.1} parent=5 // pred_region
        %s235 = ssub.s32 %s17, 1
        // Predicated region
        $region13: #{encoder_tower_forward.1} parent=11 // pred_check
          %p236 = pneg %p90
        $region14: #{encoder_tower_forward.1} parent=11 // pred_check_branch
          %238 = sbr.rel (%p236) target = $region16
        $region15: #{encoder_tower_forward.1} parent=11 // pred_region
          _
        $region16: #{encoder_tower_forward.1} parent=11 // pred_fallthru
          _
        // Predicated region
        $region17: #{encoder_tower_forward.1} parent=11 // pred_check
          %p239 = pneg %p111
        $region18: #{encoder_tower_forward.1} parent=11 // pred_check_branch
          %241 = sbr.rel (%p239) target = $region20
        $region19: #{encoder_tower_forward.1} parent=11 // pred_region
          _
        $region20: #{encoder_tower_forward.1} parent=11 // pred_fallthru
          _
        // Predicated region
        $region21: #{encoder_tower_forward.1} parent=11 // pred_check
          %p242 = pneg %p132
        $region22: #{encoder_tower_forward.1} parent=11 // pred_check_branch
          %244 = sbr.rel (%p242) target = $region24
        $region23: #{encoder_tower_forward.1} parent=11 // pred_region
          _
        $region24: #{encoder_tower_forward.1} parent=11 // pred_fallthru
          _
        // Predicated region
        $region25: #{encoder_tower_forward.1} parent=11 // pred_check
          %p245 = pneg %p153
        $region26: #{encoder_tower_forward.1} parent=11 // pred_check_branch
          %247 = sbr.rel (%p245) target = $region28
        $region27: #{encoder_tower_forward.1} parent=11 // pred_region
          _
        $region28: #{encoder_tower_forward.1} parent=11 // pred_fallthru
          _
        // Predicated region
        $region29: #{encoder_tower_forward.1} parent=11 // pred_check
          %p248 = pneg %p174
        $region30: #{encoder_tower_forward.1} parent=11 // pred_check_branch
          %250 = sbr.rel (%p248) target = $region32
        $region31: #{encoder_tower_forward.1} parent=11 // pred_region
          _
        $region32: #{encoder_tower_forward.1} parent=11 // pred_fallthru
          _
        // Predicated region
        $region33: #{encoder_tower_forward.1} parent=11 // pred_check
          %p251 = pneg %p195
        $region34: #{encoder_tower_forward.1} parent=11 // pred_check_branch
          %253 = sbr.rel (%p251) target = $region36
        $region35: #{encoder_tower_forward.1} parent=11 // pred_region
          _
        $region36: #{encoder_tower_forward.1} parent=11 // pred_fallthru
          _
      $region12: #{encoder_tower_forward.1} parent=5 // pred_fallthru
        _
      %p254 = scmp.lt.s32.totalorder %s17, 2
      // Predicated region
      $region37: #{encoder_tower_forward.1} parent=5 // pred_check
        %p255 = pneg %p254
      $region38: #{encoder_tower_forward.1} parent=5 // pred_check_branch
        %257 = sbr.rel (%p255) target = $region40
      $region39: #{encoder_tower_forward.1} parent=5 // pred_region
        // Predicated region
        $region41: #{encoder_tower_forward.1} parent=39 // pred_check
          %p258 = pneg %p37
        $region42: #{encoder_tower_forward.1} parent=39 // pred_check_branch
          %260 = sbr.rel (%p258) target = $region44
        $region43: #{encoder_tower_forward.1} parent=39 // pred_region
          %p261 = scmp.lt.s32.totalorder %s17, 1
          %s262 = scalar_select %p261, %s17, 1
          %s263 = smul.addr %s262, 8
          %s264 = scalar_lea.vmem %s0, %s263
        $region44: #{encoder_tower_forward.1} parent=39 // pred_fallthru
          _
        // Predicated region
        $region45: #{encoder_tower_forward.1} parent=39 // pred_check
          %p265 = pneg %p63
        $region46: #{encoder_tower_forward.1} parent=39 // pred_check_branch
          %267 = sbr.rel (%p265) target = $region48
        $region47: #{encoder_tower_forward.1} parent=39 // pred_region
          %p268 = scmp.lt.s32.totalorder %s17, 1
          %s269 = scalar_select %p268, %s17, 1
          %s270 = scalar_lea.vmem %s1, %s269
        $region48: #{encoder_tower_forward.1} parent=39 // pred_fallthru
          _
      $region40: #{encoder_tower_forward.1} parent=5 // pred_fallthru
        _
      %p271 = scmp.le.s32.totalorder 1, %s17
      %p272 = scmp.lt.s32.totalorder %s17, 3
      %p273 = pnand %p271, %p272
      %p274 = pneg %p273
      // Predicated region
      $region49: #{encoder_tower_forward.1} parent=5 // pred_check
        _
      $region50: #{encoder_tower_forward.1} parent=5 // pred_check_branch
        %276 = sbr.rel (%p273) target = $region52
      $region51: #{encoder_tower_forward.1} parent=5 // pred_region
        %s277 = ssub.s32 %s17, 1
        %p278 = scmp.lt.s32.totalorder %s22, 1
        %s279 = scalar_select %p278, %s22, 1
        %s280 = smul.addr %s279, 8
        %s281 = scalar_lea.vmem %s0, %s280
        %p282 = pneg %p43
        %p283 = pneg %p40
        %p284 = scmp.lt.s32.totalorder %s22, 1
        %s285 = scalar_select %p284, %s22, 1
        %s286 = scalar_lea.vmem %s1, %s285
        %p287 = pneg %p69
        %p288 = pneg %p66
        %p289 = pneg %p90
        %p290 = pneg %p87
        %p291 = pneg %p111
        %p292 = pneg %p108
        %p293 = pneg %p132
        %p294 = pneg %p129
        %p295 = pneg %p153
        %p296 = pneg %p150
        %p297 = pneg %p174
        %p298 = pneg %p171
        %p299 = pneg %p195
        %p300 = pneg %p192
        %p301 = pneg %p221
        %p302 = pneg %p218
        %s303 = sand.u32 %s208, 1
        %s304 = scalar_lea.sflag [#allocation3], %s303
        %s305 = sand.u32 %s208, 1
        %s306 = smul.addr %s305, 8
        %s307 = scalar_lea.vmem [#allocation2], %s306
        %p308 = scmp.lt.s32.totalorder %s22, 1
        %s309 = scalar_select %p308, %s22, 1
        %s310 = smul.addr %s309, 8
        %s311 = scalar_lea.vmem %s0, %s310
        %p312 = scmp.lt.s32.totalorder %s22, 1
        %s313 = scalar_select %p312, %s22, 1
        %s314 = scalar_lea.vmem %s1, %s313
        %v315 = vld [vmem:[%s314] sm:$0x1]
        %v316 = vmul.f32 %v315, -1e+09
        %v317 = vld [vmem:[%s311] sm:$0xff]
        %v318 = vld [vmem:[%s7] sm:$0xff]
        %v319 = vadd.f32 %v317, %v318
        %v320 = vld [vmem:[%s7 + $0x8] sm:$0x1]
        %v321 = vld [vmem:[%s7 + $0x9] sm:$0x1]
        %v322 = vld [vmem:[%s7 + $0xa] sm:$0x1]
        %v323 = vld [vmem:[%s7 + $0xb] sm:$0x1]
        %v324 = vld [vmem:[%s7 + $0xc] sm:$0x1]
        %v325 = vld [vmem:[%s6] sm:$0x1]
        %vm326 = vcmask 261120
        %v327 = vsel %vm326, %v319, 0.0
        %328 = vadd.xlane.f32.xlu0 %v327
        %v329 = vpop.xlane.xlu0 %328
        %v330 = vrcp.pop 32.0
        %v331 = vmul.f32 %v329, %v330
        %v332 = vsub.f32 %v319, %v331
        %v333 = vmul.f32 %v332, %v332
        %v334 = vsel %vm326, %v333, 0.0
        %335 = vadd.xlane.f32.xlu0 %v334
        %v336 = vpop.xlane.xlu0 %335
        %v337 = vmul.f32 %v336, %v330
        %v338 = vadd.f32 %v337, 1e-05
        %v339 = vrsqrt.pop %v338
        %v340 = vmul.f32 %v332, %v339
        %v341 = vlaneseq
        %v342 = vshrl.u32 %v341, 7
        %v343 = vsub.s32 0, %v342
        %v344 = vrot.slane %v320, %v343
        %v345 = vmul.f32 %v340, %v344
        %v346 = vlaneseq
        %v347 = vshrl.u32 %v346, 7
        %v348 = vsub.s32 0, %v347
        %v349 = vrot.slane %v321, %v348
        %v350 = vadd.f32 %v345, %v349
        %v351 = vld [vmem:[%s2] sm:$0xff]
        %v352 = vld [vmem:[%s2 + $0x8] sm:$0xff]
        %v353 = vld [vmem:[%s2 + $0x10] sm:$0xff]
        %v354 = vld [vmem:[%s2 + $0x18] sm:$0xff]
        %v356 = vsel %vm326, %v350, 0
        %358 = vmatprep.subr.mxu0 0.0
        %359 = vmatpush1.msra.mxu0 %v351
        %360 = vmatprep.subr.mxu0 0.0
        %361 = vmatpush1.msra.mxu0 %v352
        %362 = vmatprep.subr.mxu0 0.0
        %363 = vmatpush1.msra.mxu0 %v353
        %364 = vmatprep.subr.mxu0 0.0
        %365 = vmatpush1.msra.mxu0 %v354
        %366 = vmatprep.subr.mxu0 0.0
        %367 = vmatpush1.msra.mxu0 0.0
        %368 = vmatprep.subr.mxu0 0.0
        %369 = vmatpush1.msra.mxu0 0.0
        %370 = vmatprep.subr.mxu0 0.0
        %371 = vmatpush1.msra.mxu0 0.0
        %372 = vmatprep.subr.mxu0 0.0
        %373 = vmatpush1.msra.mxu0 0.0
        %374 = vmatprep.subr.mxu0 0.0
        %375 = vmatpush1.msra.mxu0 0.0
        %376 = vmatprep.subr.mxu0 0.0
        %377 = vmatpush1.msra.mxu0 0.0
        %378 = vmatprep.subr.mxu0 0.0
        %379 = vmatpush1.msra.mxu0 0.0
        %380 = vmatprep.subr.mxu0 0.0
        %381 = vmatpush1.msra.mxu0 0.0
        %382 = vmatprep.subr.mxu0 0.0
        %383 = vmatpush1.msra.mxu0 0.0
        %384 = vmatprep.subr.mxu0 0.0
        %385 = vmatpush1.msra.mxu0 0.0
        %386 = vmatprep.subr.mxu0 0.0
        %387 = vmatpush1.msra.mxu0 0.0
        %388 = vmatprep.subr.mxu0 0.0
        %389 = vmatpush1.msra.mxu0 0.0
        %390 = vmatprep.subr.mxu0 0.0
        %391 = vmatpush1.msra.mxu0 0.0
        %392 = vmatprep.subr.mxu0 0.0
        %393 = vmatpush1.msra.mxu0 0.0
        %394 = vmatprep.subr.mxu0 0.0
        %395 = vmatpush1.msra.mxu0 0.0
        %396 = vmatprep.subr.mxu0 0.0
        %397 = vmatpush1.msra.mxu0 0.0
        %398 = vmatprep.subr.mxu0 0.0
        %399 = vmatpush1.msra.mxu0 0.0
        %400 = vmatprep.subr.mxu0 0.0
        %401 = vmatpush1.msra.mxu0 0.0
        %402 = vmatprep.subr.mxu0 0.0
        %403 = vmatpush1.msra.mxu0 0.0
        %404 = vmatprep.subr.mxu0 0.0
        %405 = vmatpush1.msra.mxu0 0.0
        %406 = vmatprep.subr.mxu0 0.0
        %407 = vmatpush1.msra.mxu0 0.0
        %408 = vmatprep.subr.mxu0 0.0
        %409 = vmatpush1.msra.mxu0 0.0
        %410 = vmatprep.subr.mxu0 0.0
        %411 = vmatpush1.msra.mxu0 0.0
        %412 = vmatprep.subr.mxu0 0.0
        %413 = vmatpush1.msra.mxu0 0.0
        %414 = vmatprep.subr.mxu0 0.0
        %415 = vmatpush1.msra.mxu0 0.0
        %416 = vmatprep.subr.mxu0 0.0
        %417 = vmatpush1.msra.mxu0 0.0
        %418 = vmatprep.subr.mxu0 0.0
        %419 = vmatpush1.msra.mxu0 0.0
        %420 = vmatprep.subr.mxu0 0.0
        %421 = vmatpush1.msra.mxu0 0.0
        %422 = vmatprep.mubr.f32.mxu0 0.0
        %423 = vmatmul.mubr.f32.gmra.mrb[0].mxu0 %v356
        %v424 = vpop.f32.mrb[0].mxu0
        %v425 = vadd.f32 0.0, %v424
        %v426 = vpop.f32.mrb[0].mxu0
        %427 = vdwg.mxu0
        %429 = vrot.lane.b32.xlu0 %v425, 120
        %v430 = vpop.permute.xlu0 %429
        %432 = vrot.lane.b32.xlu0 %v425, 112
        %v433 = vpop.permute.xlu0 %432
        %435 = vrot.lane.b32.xlu0 %v425, 104
        %v436 = vpop.permute.xlu0 %435
        %438 = vrot.lane.b32.xlu0 %v425, 96
        %v439 = vpop.permute.xlu0 %438
        %440 = vrot.lane.b32.xlu0 %v425, 88
        %v441 = vpop.permute.xlu0 %440
        %442 = vrot.lane.b32.xlu0 %v425, 80
        %v443 = vpop.permute.xlu0 %442
        %444 = vrot.lane.b32.xlu0 %v425, 72
        %v445 = vpop.permute.xlu0 %444
        %446 = vrot.lane.b32.xlu0 %v425, 64
        %v447 = vpop.permute.xlu0 %446
        %449 = vrot.lane.b32.xlu0 %v425, 56
        %v450 = vpop.permute.xlu0 %449
        %452 = vrot.lane.b32.xlu0 %v425, 48
        %v453 = vpop.permute.xlu0 %452
        %455 = vrot.lane.b32.xlu0 %v425, 40
        %v456 = vpop.permute.xlu0 %455
        %v458 = vmul.f32 %v425, 0.35355338
        %v459 = vmul.f32 %v430, 0.35355338
        %v460 = vmul.f32 %v433, 0.35355338
        %v461 = vmul.f32 %v436, 0.35355338
        %v463 = vlaneseq
        %v464 = vshrl.u32 %v463, 7
        %v465 = vsub.s32 0, %v464
        %v466 = vrot.slane %v316, %v465
        %vm468 = vcmask 64512
        %v470 = vsel %vm468, %v458, 0
        %v472 = vsel %vm468, %v439, 0
        %474 = vmatprep.subr.mxu0 0.0
        %475 = vmatpush1.xpose.msra.mxu0 %v472
        %476 = vmatprep.subr.mxu0 0.0
        %477 = vmatpush1.xpose.msra.mxu0 0.0
        %478 = vmatprep.subr.mxu0 0.0
        %479 = vmatpush1.xpose.msra.mxu0 0.0
        %480 = vmatprep.subr.mxu0 0.0
        %481 = vmatpush1.xpose.msra.mxu0 0.0
        %482 = vmatprep.subr.mxu0 0.0
        %483 = vmatpush1.xpose.msra.mxu0 0.0
        %484 = vmatprep.subr.mxu0 0.0
        %485 = vmatpush1.xpose.msra.mxu0 0.0
        %486 = vmatprep.subr.mxu0 0.0
        %487 = vmatpush1.xpose.msra.mxu0 0.0
        %488 = vmatprep.subr.mxu0 0.0
        %489 = vmatpush1.xpose.msra.mxu0 0.0
        %490 = vmatprep.subr.mxu0 0.0
        %491 = vmatpush1.xpose.msra.mxu0 0.0
        %492 = vmatprep.subr.mxu0 0.0
        %493 = vmatpush1.xpose.msra.mxu0 0.0
        %494 = vmatprep.subr.mxu0 0.0
        %495 = vmatpush1.xpose.msra.mxu0 0.0
        %496 = vmatprep.subr.mxu0 0.0
        %497 = vmatpush1.xpose.msra.mxu0 0.0
        %498 = vmatprep.subr.mxu0 0.0
        %499 = vmatpush1.xpose.msra.mxu0 0.0
        %500 = vmatprep.subr.mxu0 0.0
        %501 = vmatpush1.xpose.msra.mxu0 0.0
        %502 = vmatprep.subr.mxu0 0.0
        %503 = vmatpush1.xpose.msra.mxu0 0.0
        %504 = vmatprep.subr.mxu0 0.0
        %505 = vmatpush1.xpose.msra.mxu0 0.0
        %506 = vmatprep.subr.mxu0 0.0
        %507 = vmatpush1.xpose.msra.mxu0 0.0
        %508 = vmatprep.subr.mxu0 0.0
        %509 = vmatpush1.xpose.msra.mxu0 0.0
        %510 = vmatprep.subr.mxu0 0.0
        %511 = vmatpush1.xpose.msra.mxu0 0.0
        %512 = vmatprep.subr.mxu0 0.0
        %513 = vmatpush1.xpose.msra.mxu0 0.0
        %514 = vmatprep.subr.mxu0 0.0
        %515 = vmatpush1.xpose.msra.mxu0 0.0
        %516 = vmatprep.subr.mxu0 0.0
        %517 = vmatpush1.xpose.msra.mxu0 0.0
        %518 = vmatprep.subr.mxu0 0.0
        %519 = vmatpush1.xpose.msra.mxu0 0.0
        %520 = vmatprep.subr.mxu0 0.0
        %521 = vmatpush1.xpose.msra.mxu0 0.0
        %522 = vmatprep.subr.mxu0 0.0
        %523 = vmatpush1.xpose.msra.mxu0 0.0
        %524 = vmatprep.subr.mxu0 0.0
        %525 = vmatpush1.xpose.msra.mxu0 0.0
        %526 = vmatprep.subr.mxu0 0.0
        %527 = vmatpush1.xpose.msra.mxu0 0.0
        %528 = vmatprep.subr.mxu0 0.0
        %529 = vmatpush1.xpose.msra.mxu0 0.0
        %530 = vmatprep.subr.mxu0 0.0
        %531 = vmatpush1.xpose.msra.mxu0 0.0
        %532 = vmatprep.subr.mxu0 0.0
        %533 = vmatpush1.xpose.msra.mxu0 0.0
        %534 = vmatprep.subr.mxu0 0.0
        %535 = vmatpush1.xpose.msra.mxu0 0.0
        %536 = vmatprep.subr.mxu0 0.0
        %537 = vmatpush1.xpose.msra.mxu0 0.0
        %538 = vmatprep.mubr.f32.mxu0 0.0
        %539 = vmatmul.mubr.f32.gmra.mrb[0].mxu0 %v470
        %v540 = vpop.f32.mrb[0].mxu0
        %v541 = vadd.f32 %v466, %v540
        %v542 = vpop.f32.mrb[0].mxu0
        %543 = vdwg.mxu0
        %v545 = vsel %vm468, %v459, 0
        %v547 = vsel %vm468, %v441, 0
        %549 = vmatprep.subr.mxu0 0.0
        %550 = vmatpush1.xpose.msra.mxu0 %v547
        %551 = vmatprep.subr.mxu0 0.0
        %552 = vmatpush1.xpose.msra.mxu0 0.0
        %553 = vmatprep.subr.mxu0 0.0
        %554 = vmatpush1.xpose.msra.mxu0 0.0
        %555 = vmatprep.subr.mxu0 0.0
        %556 = vmatpush1.xpose.msra.mxu0 0.0
        %557 = vmatprep.subr.mxu0 0.0
        %558 = vmatpush1.xpose.msra.mxu0 0.0
        %559 = vmatprep.subr.mxu0 0.0
        %560 = vmatpush1.xpose.msra.mxu0 0.0
        %561 = vmatprep.subr.mxu0 0.0
        %562 = vmatpush1.xpose.msra.mxu0 0.0
        %563 = vmatprep.subr.mxu0 0.0
        %564 = vmatpush1.xpose.msra.mxu0 0.0
        %565 = vmatprep.subr.mxu0 0.0
        %566 = vmatpush1.xpose.msra.mxu0 0.0
        %567 = vmatprep.subr.mxu0 0.0
        %568 = vmatpush1.xpose.msra.mxu0 0.0
        %569 = vmatprep.subr.mxu0 0.0
        %570 = vmatpush1.xpose.msra.mxu0 0.0
        %571 = vmatprep.subr.mxu0 0.0
        %572 = vmatpush1.xpose.msra.mxu0 0.0
        %573 = vmatprep.subr.mxu0 0.0
        %574 = vmatpush1.xpose.msra.mxu0 0.0
        %575 = vmatprep.subr.mxu0 0.0
        %576 = vmatpush1.xpose.msra.mxu0 0.0
        %577 = vmatprep.subr.mxu0 0.0
        %578 = vmatpush1.xpose.msra.mxu0 0.0
        %579 = vmatprep.subr.mxu0 0.0
        %580 = vmatpush1.xpose.msra.mxu0 0.0
        %581 = vmatprep.subr.mxu0 0.0
        %582 = vmatpush1.xpose.msra.mxu0 0.0
        %583 = vmatprep.subr.mxu0 0.0
        %584 = vmatpush1.xpose.msra.mxu0 0.0
        %585 = vmatprep.subr.mxu0 0.0
        %586 = vmatpush1.xpose.msra.mxu0 0.0
        %587 = vmatprep.subr.mxu0 0.0
        %588 = vmatpush1.xpose.msra.mxu0 0.0
        %589 = vmatprep.subr.mxu0 0.0
        %590 = vmatpush1.xpose.msra.mxu0 0.0
        %591 = vmatprep.subr.mxu0 0.0
        %592 = vmatpush1.xpose.msra.mxu0 0.0
        %593 = vmatprep.subr.mxu0 0.0
        %594 = vmatpush1.xpose.msra.mxu0 0.0
        %595 = vmatprep.subr.mxu0 0.0
        %596 = vmatpush1.xpose.msra.mxu0 0.0
        %597 = vmatprep.subr.mxu0 0.0
        %598 = vmatpush1.xpose.msra.mxu0 0.0
        %599 = vmatprep.subr.mxu0 0.0
        %600 = vmatpush1.xpose.msra.mxu0 0.0
        %601 = vmatprep.subr.mxu0 0.0
        %602 = vmatpush1.xpose.msra.mxu0 0.0
        %603 = vmatprep.subr.mxu0 0.0
        %604 = vmatpush1.xpose.msra.mxu0 0.0
        %605 = vmatprep.subr.mxu0 0.0
        %606 = vmatpush1.xpose.msra.mxu0 0.0
        %607 = vmatprep.subr.mxu0 0.0
        %608 = vmatpush1.xpose.msra.mxu0 0.0
        %609 = vmatprep.subr.mxu0 0.0
        %610 = vmatpush1.xpose.msra.mxu0 0.0
        %611 = vmatprep.subr.mxu0 0.0
        %612 = vmatpush1.xpose.msra.mxu0 0.0
        %613 = vmatprep.mubr.f32.mxu0 0.0
        %614 = vmatmul.mubr.f32.gmra.mrb[0].mxu0 %v545
        %v615 = vpop.f32.mrb[0].mxu0
        %v616 = vadd.f32 %v466, %v615
        %v617 = vpop.f32.mrb[0].mxu0
        %618 = vdwg.mxu0
        %v620 = vsel %vm468, %v460, 0
        %v622 = vsel %vm468, %v443, 0
        %624 = vmatprep.subr.mxu0 0.0
        %625 = vmatpush1.xpose.msra.mxu0 %v622
        %626 = vmatprep.subr.mxu0 0.0
        %627 = vmatpush1.xpose.msra.mxu0 0.0
        %628 = vmatprep.subr.mxu0 0.0
        %629 = vmatpush1.xpose.msra.mxu0 0.0
        %630 = vmatprep.subr.mxu0 0.0
        %631 = vmatpush1.xpose.msra.mxu0 0.0
        %632 = vmatprep.subr.mxu0 0.0
        %633 = vmatpush1.xpose.msra.mxu0 0.0
        %634 = vmatprep.subr.mxu0 0.0
        %635 = vmatpush1.xpose.msra.mxu0 0.0
        %636 = vmatprep.subr.mxu0 0.0
        %637 = vmatpush1.xpose.msra.mxu0 0.0
        %638 = vmatprep.subr.mxu0 0.0
        %639 = vmatpush1.xpose.msra.mxu0 0.0
        %640 = vmatprep.subr.mxu0 0.0
        %641 = vmatpush1.xpose.msra.mxu0 0.0
        %642 = vmatprep.subr.mxu0 0.0
        %643 = vmatpush1.xpose.msra.mxu0 0.0
        %644 = vmatprep.subr.mxu0 0.0
        %645 = vmatpush1.xpose.msra.mxu0 0.0
        %646 = vmatprep.subr.mxu0 0.0
        %647 = vmatpush1.xpose.msra.mxu0 0.0
        %648 = vmatprep.subr.mxu0 0.0
        %649 = vmatpush1.xpose.msra.mxu0 0.0
        %650 = vmatprep.subr.mxu0 0.0
        %651 = vmatpush1.xpose.msra.mxu0 0.0
        %652 = vmatprep.subr.mxu0 0.0
        %653 = vmatpush1.xpose.msra.mxu0 0.0
        %654 = vmatprep.subr.mxu0 0.0
        %655 = vmatpush1.xpose.msra.mxu0 0.0
        %656 = vmatprep.subr.mxu0 0.0
        %657 = vmatpush1.xpose.msra.mxu0 0.0
        %658 = vmatprep.subr.mxu0 0.0
        %659 = vmatpush1.xpose.msra.mxu0 0.0
        %660 = vmatprep.subr.mxu0 0.0
        %661 = vmatpush1.xpose.msra.mxu0 0.0
        %662 = vmatprep.subr.mxu0 0.0
        %663 = vmatpush1.xpose.msra.mxu0 0.0
        %664 = vmatprep.subr.mxu0 0.0
        %665 = vmatpush1.xpose.msra.mxu0 0.0
        %666 = vmatprep.subr.mxu0 0.0
        %667 = vmatpush1.xpose.msra.mxu0 0.0
        %668 = vmatprep.subr.mxu0 0.0
        %669 = vmatpush1.xpose.msra.mxu0 0.0
        %670 = vmatprep.subr.mxu0 0.0
        %671 = vmatpush1.xpose.msra.mxu0 0.0
        %672 = vmatprep.subr.mxu0 0.0
        %673 = vmatpush1.xpose.msra.mxu0 0.0
        %674 = vmatprep.subr.mxu0 0.0
        %675 = vmatpush1.xpose.msra.mxu0 0.0
        %676 = vmatprep.subr.mxu0 0.0
        %677 = vmatpush1.xpose.msra.mxu0 0.0
        %678 = vmatprep.subr.mxu0 0.0
        %679 = vmatpush1.xpose.msra.mxu0 0.0
        %680 = vmatprep.subr.mxu0 0.0
        %681 = vmatpush1.xpose.msra.mxu0 0.0
        %682 = vmatprep.subr.mxu0 0.0
        %683 = vmatpush1.xpose.msra.mxu0 0.0
        %684 = vmatprep.subr.mxu0 0.0
        %685 = vmatpush1.xpose.msra.mxu0 0.0
        %686 = vmatprep.subr.mxu0 0.0
        %687 = vmatpush1.xpose.msra.mxu0 0.0
        %688 = vmatprep.mubr.f32.mxu0 0.0
        %689 = vmatmul.mubr.f32.gmra.mrb[0].mxu0 %v620
        %v690 = vpop.f32.mrb[0].mxu0
        %v691 = vadd.f32 %v466, %v690
        %v692 = vpop.f32.mrb[0].mxu0
        %693 = vdwg.mxu0
        %v695 = vsel %vm468, %v461, 0
        %v697 = vsel %vm468, %v445, 0
        %699 = vmatprep.subr.mxu0 0.0
        %700 = vmatpush1.xpose.msra.mxu0 %v697
        %701 = vmatprep.subr.mxu0 0.0
        %702 = vmatpush1.xpose.msra.mxu0 0.0
        %703 = vmatprep.subr.mxu0 0.0
        %704 = vmatpush1.xpose.msra.mxu0 0.0
        %705 = vmatprep.subr.mxu0 0.0
        %706 = vmatpush1.xpose.msra.mxu0 0.0
        %707 = vmatprep.subr.mxu0 0.0
        %708 = vmatpush1.xpose.msra.mxu0 0.0
        %709 = vmatprep.subr.mxu0 0.0
        %710 = vmatpush1.xpose.msra.mxu0 0.0
        %711 = vmatprep.subr.mxu0 0.0
        %712 = vmatpush1.xpose.msra.mxu0 0.0
        %713 = vmatprep.subr.mxu0 0.0
        %714 = vmatpush1.xpose.msra.mxu0 0.0
        %715 = vmatprep.subr.mxu0 0.0
        %716 = vmatpush1.xpose.msra.mxu0 0.0
        %717 = vmatprep.subr.mxu0 0.0
        %718 = vmatpush1.xpose.msra.mxu0 0.0
        %719 = vmatprep.subr.mxu0 0.0
        %720 = vmatpush1.xpose.msra.mxu0 0.0
        %721 = vmatprep.subr.mxu0 0.0
        %722 = vmatpush1.xpose.msra.mxu0 0.0
        %723 = vmatprep.subr.mxu0 0.0
        %724 = vmatpush1.xpose.msra.mxu0 0.0
        %725 = vmatprep.subr.mxu0 0.0
        %726 = vmatpush1.xpose.msra.mxu0 0.0
        %727 = vmatprep.subr.mxu0 0.0
        %728 = vmatpush1.xpose.msra.mxu0 0.0
        %729 = vmatprep.subr.mxu0 0.0
        %730 = vmatpush1.xpose.msra.mxu0 0.0
        %731 = vmatprep.subr.mxu0 0.0
        %732 = vmatpush1.xpose.msra.mxu0 0.0
        %733 = vmatprep.subr.mxu0 0.0
        %734 = vmatpush1.xpose.msra.mxu0 0.0
        %735 = vmatprep.subr.mxu0 0.0
        %736 = vmatpush1.xpose.msra.mxu0 0.0
        %737 = vmatprep.subr.mxu0 0.0
        %738 = vmatpush1.xpose.msra.mxu0 0.0
        %739 = vmatprep.subr.mxu0 0.0
        %740 = vmatpush1.xpose.msra.mxu0 0.0
        %741 = vmatprep.subr.mxu0 0.0
        %742 = vmatpush1.xpose.msra.mxu0 0.0
        %743 = vmatprep.subr.mxu0 0.0
        %744 = vmatpush1.xpose.msra.mxu0 0.0
        %745 = vmatprep.subr.mxu0 0.0
        %746 = vmatpush1.xpose.msra.mxu0 0.0
        %747 = vmatprep.subr.mxu0 0.0
        %748 = vmatpush1.xpose.msra.mxu0 0.0
        %749 = vmatprep.subr.mxu0 0.0
        %750 = vmatpush1.xpose.msra.mxu0 0.0
        %751 = vmatprep.subr.mxu0 0.0
        %752 = vmatpush1.xpose.msra.mxu0 0.0
        %753 = vmatprep.subr.mxu0 0.0
        %754 = vmatpush1.xpose.msra.mxu0 0.0
        %755 = vmatprep.subr.mxu0 0.0
        %756 = vmatpush1.xpose.msra.mxu0 0.0
        %757 = vmatprep.subr.mxu0 0.0
        %758 = vmatpush1.xpose.msra.mxu0 0.0
        %759 = vmatprep.subr.mxu0 0.0
        %760 = vmatpush1.xpose.msra.mxu0 0.0
        %761 = vmatprep.subr.mxu0 0.0
        %762 = vmatpush1.xpose.msra.mxu0 0.0
        %763 = vmatprep.mubr.f32.mxu0 0.0
        %764 = vmatmul.mubr.f32.gmra.mrb[0].mxu0 %v695
        %v765 = vpop.f32.mrb[0].mxu0
        %v766 = vadd.f32 %v466, %v765
        %v767 = vpop.f32.mrb[0].mxu0
        %768 = vdwg.mxu0
        %v769 = vsel %vm468, %v541, -inf
        %770 = vmax.xlane.f32.xlu0 %v769
        %v771 = vpop.xlane.xlu0 %770
        %v772 = vsel %vm468, %v616, -inf
        %773 = vmax.xlane.f32.xlu0 %v772
        %v774 = vpop.xlane.xlu0 %773
        %v775 = vsel %vm468, %v691, -inf
        %776 = vmax.xlane.f32.xlu0 %v775
        %v777 = vpop.xlane.xlu0 %776
        %v778 = vsel %vm468, %v766, -inf
        %779 = vmax.xlane.f32.xlu0 %v778
        %v780 = vpop.xlane.xlu0 %779
        %v781 = vsub.f32 %v541, %v771
        %v782 = vsub.f32 %v616, %v774
        %v783 = vsub.f32 %v691, %v777
        %v784 = vsub.f32 %v766, %v780
        %v785 = vmul.f32 %v781, 1.442695
        %v786 = vpow.pop %v785
        %v787 = vmul.f32 %v782, 1.442695
        %v788 = vpow.pop %v787
        %v789 = vmul.f32 %v783, 1.442695
        %v790 = vpow.pop %v789
        %v791 = vmul.f32 %v784, 1.442695
        %v792 = vpow.pop %v791
        %v793 = vsel %vm468, %v786, 0.0
        %794 = vadd.xlane.f32.xlu0 %v793
        %v795 = vpop.xlane.xlu0 %794
        %v796 = vsel %vm468, %v788, 0.0
        %797 = vadd.xlane.f32.xlu0 %v796
        %v798 = vpop.xlane.xlu0 %797
        %v799 = vsel %vm468, %v790, 0.0
        %800 = vadd.xlane.f32.xlu0 %v799
        %v801 = vpop.xlane.xlu0 %800
        %v802 = vsel %vm468, %v792, 0.0
        %803 = vadd.xlane.f32.xlu0 %v802
        %v804 = vpop.xlane.xlu0 %803
        %v805 = vrcp.pop %v795
        %v806 = vmul.f32 %v786, %v805
        %v807 = vrcp.pop %v798
        %v808 = vmul.f32 %v788, %v807
        %v809 = vrcp.pop %v801
        %v810 = vmul.f32 %v790, %v809
        %v811 = vrcp.pop %v804
        %v812 = vmul.f32 %v792, %v811
        %v814 = vsel %vm468, %v806, 0
        %816 = vmatprep.subr.mxu0 0.0
        %817 = vmatpush1.msra.mxu0 %v447
        %818 = vmatprep.subr.mxu0 0.0
        %819 = vmatpush1.msra.mxu0 0.0
        %820 = vmatprep.subr.mxu0 0.0
        %821 = vmatpush1.msra.mxu0 0.0
        %822 = vmatprep.subr.mxu0 0.0
        %823 = vmatpush1.msra.mxu0 0.0
        %824 = vmatprep.subr.mxu0 0.0
        %825 = vmatpush1.msra.mxu0 0.0
        %826 = vmatprep.subr.mxu0 0.0
        %827 = vmatpush1.msra.mxu0 0.0
        %828 = vmatprep.subr.mxu0 0.0
        %829 = vmatpush1.msra.mxu0 0.0
        %830 = vmatprep.subr.mxu0 0.0
        %831 = vmatpush1.msra.mxu0 0.0
        %832 = vmatprep.subr.mxu0 0.0
        %833 = vmatpush1.msra.mxu0 0.0
        %834 = vmatprep.subr.mxu0 0.0
        %835 = vmatpush1.msra.mxu0 0.0
        %836 = vmatprep.subr.mxu0 0.0
        %837 = vmatpush1.msra.mxu0 0.0
        %838 = vmatprep.subr.mxu0 0.0
        %839 = vmatpush1.msra.mxu0 0.0
        %840 = vmatprep.subr.mxu0 0.0
        %841 = vmatpush1.msra.mxu0 0.0
        %842 = vmatprep.subr.mxu0 0.0
        %843 = vmatpush1.msra.mxu0 0.0
        %844 = vmatprep.subr.mxu0 0.0
        %845 = vmatpush1.msra.mxu0 0.0
        %846 = vmatprep.subr.mxu0 0.0
        %847 = vmatpush1.msra.mxu0 0.0
        %848 = vmatprep.subr.mxu0 0.0
        %849 = vmatpush1.msra.mxu0 0.0
        %850 = vmatprep.subr.mxu0 0.0
        %851 = vmatpush1.msra.mxu0 0.0
        %852 = vmatprep.subr.mxu0 0.0
        %853 = vmatpush1.msra.mxu0 0.0
        %854 = vmatprep.subr.mxu0 0.0
        %855 = vmatpush1.msra.mxu0 0.0
        %856 = vmatprep.subr.mxu0 0.0
        %857 = vmatpush1.msra.mxu0 0.0
        %858 = vmatprep.subr.mxu0 0.0
        %859 = vmatpush1.msra.mxu0 0.0
        %860 = vmatprep.subr.mxu0 0.0
        %861 = vmatpush1.msra.mxu0 0.0
        %862 = vmatprep.subr.mxu0 0.0
        %863 = vmatpush1.msra.mxu0 0.0
        %864 = vmatprep.subr.mxu0 0.0
        %865 = vmatpush1.msra.mxu0 0.0
        %866 = vmatprep.subr.mxu0 0.0
        %867 = vmatpush1.msra.mxu0 0.0
        %868 = vmatprep.subr.mxu0 0.0
        %869 = vmatpush1.msra.mxu0 0.0
        %870 = vmatprep.subr.mxu0 0.0
        %871 = vmatpush1.msra.mxu0 0.0
        %872 = vmatprep.subr.mxu0 0.0
        %873 = vmatpush1.msra.mxu0 0.0
        %874 = vmatprep.subr.mxu0 0.0
        %875 = vmatpush1.msra.mxu0 0.0
        %876 = vmatprep.subr.mxu0 0.0
        %877 = vmatpush1.msra.mxu0 0.0
        %878 = vmatprep.subr.mxu0 0.0
        %879 = vmatpush1.msra.mxu0 0.0
        %880 = vmatprep.mubr.f32.mxu0 0.0
        %881 = vmatmul.mubr.f32.gmra.mrb[0].mxu0 %v814
        %v882 = vpop.f32.mrb[0].mxu0
        %v883 = vadd.f32 0.0, %v882
        %v884 = vpop.f32.mrb[0].mxu0
        %885 = vdwg.mxu0
        %v887 = vsel %vm468, %v808, 0
        %889 = vmatprep.subr.mxu0 0.0
        %890 = vmatpush1.msra.mxu0 %v450
        %891 = vmatprep.subr.mxu0 0.0
        %892 = vmatpush1.msra.mxu0 0.0
        %893 = vmatprep.subr.mxu0 0.0
        %894 = vmatpush1.msra.mxu0 0.0
        %895 = vmatprep.subr.mxu0 0.0
        %896 = vmatpush1.msra.mxu0 0.0
        %897 = vmatprep.subr.mxu0 0.0
        %898 = vmatpush1.msra.mxu0 0.0
        %899 = vmatprep.subr.mxu0 0.0
        %900 = vmatpush1.msra.mxu0 0.0
        %901 = vmatprep.subr.mxu0 0.0
        %902 = vmatpush1.msra.mxu0 0.0
        %903 = vmatprep.subr.mxu0 0.0
        %904 = vmatpush1.msra.mxu0 0.0
        %905 = vmatprep.subr.mxu0 0.0
        %906 = vmatpush1.msra.mxu0 0.0
        %907 = vmatprep.subr.mxu0 0.0
        %908 = vmatpush1.msra.mxu0 0.0
        %909 = vmatprep.subr.mxu0 0.0
        %910 = vmatpush1.msra.mxu0 0.0
        %911 = vmatprep.subr.mxu0 0.0
        %912 = vmatpush1.msra.mxu0 0.0
        %913 = vmatprep.subr.mxu0 0.0
        %914 = vmatpush1.msra.mxu0 0.0
        %915 = vmatprep.subr.mxu0 0.0
        %916 = vmatpush1.msra.mxu0 0.0
        %917 = vmatprep.subr.mxu0 0.0
        %918 = vmatpush1.msra.mxu0 0.0
        %919 = vmatprep.subr.mxu0 0.0
        %920 = vmatpush1.msra.mxu0 0.0
        %921 = vmatprep.subr.mxu0 0.0
        %922 = vmatpush1.msra.mxu0 0.0
        %923 = vmatprep.subr.mxu0 0.0
        %924 = vmatpush1.msra.mxu0 0.0
        %925 = vmatprep.subr.mxu0 0.0
        %926 = vmatpush1.msra.mxu0 0.0
        %927 = vmatprep.subr.mxu0 0.0
        %928 = vmatpush1.msra.mxu0 0.0
        %929 = vmatprep.subr.mxu0 0.0
        %930 = vmatpush1.msra.mxu0 0.0
        %931 = vmatprep.subr.mxu0 0.0
        %932 = vmatpush1.msra.mxu0 0.0
        %933 = vmatprep.subr.mxu0 0.0
        %934 = vmatpush1.msra.mxu0 0.0
        %935 = vmatprep.subr.mxu0 0.0
        %936 = vmatpush1.msra.mxu0 0.0
        %937 = vmatprep.subr.mxu0 0.0
        %938 = vmatpush1.msra.mxu0 0.0
        %939 = vmatprep.subr.mxu0 0.0
        %940 = vmatpush1.msra.mxu0 0.0
        %941 = vmatprep.subr.mxu0 0.0
        %942 = vmatpush1.msra.mxu0 0.0
        %943 = vmatprep.subr.mxu0 0.0
        %944 = vmatpush1.msra.mxu0 0.0
        %945 = vmatprep.subr.mxu0 0.0
        %946 = vmatpush1.msra.mxu0 0.0
        %947 = vmatprep.subr.mxu0 0.0
        %948 = vmatpush1.msra.mxu0 0.0
        %949 = vmatprep.subr.mxu0 0.0
        %950 = vmatpush1.msra.mxu0 0.0
        %951 = vmatprep.subr.mxu0 0.0
        %952 = vmatpush1.msra.mxu0 0.0
        %953 = vmatprep.mubr.f32.mxu0 0.0
        %954 = vmatmul.mubr.f32.gmra.mrb[0].mxu0 %v887
        %v955 = vpop.f32.mrb[0].mxu0
        %v956 = vadd.f32 0.0, %v955
        %v957 = vpop.f32.mrb[0].mxu0
        %958 = vdwg.mxu0
        %v960 = vsel %vm468, %v810, 0
        %962 = vmatprep.subr.mxu0 0.0
        %963 = vmatpush1.msra.mxu0 %v453
        %964 = vmatprep.subr.mxu0 0.0
        %965 = vmatpush1.msra.mxu0 0.0
        %966 = vmatprep.subr.mxu0 0.0
        %967 = vmatpush1.msra.mxu0 0.0
        %968 = vmatprep.subr.mxu0 0.0
        %969 = vmatpush1.msra.mxu0 0.0
        %970 = vmatprep.subr.mxu0 0.0
        %971 = vmatpush1.msra.mxu0 0.0
        %972 = vmatprep.subr.mxu0 0.0
        %973 = vmatpush1.msra.mxu0 0.0
        %974 = vmatprep.subr.mxu0 0.0
        %975 = vmatpush1.msra.mxu0 0.0
        %976 = vmatprep.subr.mxu0 0.0
        %977 = vmatpush1.msra.mxu0 0.0
        %978 = vmatprep.subr.mxu0 0.0
        %979 = vmatpush1.msra.mxu0 0.0
        %980 = vmatprep.subr.mxu0 0.0
        %981 = vmatpush1.msra.mxu0 0.0
        %982 = vmatprep.subr.mxu0 0.0
        %983 = vmatpush1.msra.mxu0 0.0
        %984 = vmatprep.subr.mxu0 0.0
        %985 = vmatpush1.msra.mxu0 0.0
        %986 = vmatprep.subr.mxu0 0.0
        %987 = vmatpush1.msra.mxu0 0.0
        %988 = vmatprep.subr.mxu0 0.0
        %989 = vmatpush1.msra.mxu0 0.0
        %990 = vmatprep.subr.mxu0 0.0
        %991 = vmatpush1.msra.mxu0 0.0
        %992 = vmatprep.subr.mxu0 0.0
        %993 = vmatpush1.msra.mxu0 0.0
        %994 = vmatprep.subr.mxu0 0.0
        %995 = vmatpush1.msra.mxu0 0.0
        %996 = vmatprep.subr.mxu0 0.0
        %997 = vmatpush1.msra.mxu0 0.0
        %998 = vmatprep.subr.mxu0 0.0
        %999 = vmatpush1.msra.mxu0 0.0
        %1000 = vmatprep.subr.mxu0 0.0
        %1001 = vmatpush1.msra.mxu0 0.0
        %1002 = vmatprep.subr.mxu0 0.0
        %1003 = vmatpush1.msra.mxu0 0.0
        %1004 = vmatprep.subr.mxu0 0.0
        %1005 = vmatpush1.msra.mxu0 0.0
        %1006 = vmatprep.subr.mxu0 0.0
        %1007 = vmatpush1.msra.mxu0 0.0
        %1008 = vmatprep.subr.mxu0 0.0
        %1009 = vmatpush1.msra.mxu0 0.0
        %1010 = vmatprep.subr.mxu0 0.0
        %1011 = vmatpush1.msra.mxu0 0.0
        %1012 = vmatprep.subr.mxu0 0.0
        %1013 = vmatpush1.msra.mxu0 0.0
        %1014 = vmatprep.subr.mxu0 0.0
        %1015 = vmatpush1.msra.mxu0 0.0
        %1016 = vmatprep.subr.mxu0 0.0
        %1017 = vmatpush1.msra.mxu0 0.0
        %1018 = vmatprep.subr.mxu0 0.0
        %1019 = vmatpush1.msra.mxu0 0.0
        %1020 = vmatprep.subr.mxu0 0.0
        %1021 = vmatpush1.msra.mxu0 0.0
        %1022 = vmatprep.subr.mxu0 0.0
        %1023 = vmatpush1.msra.mxu0 0.0
        %1024 = vmatprep.subr.mxu0 0.0
        %1025 = vmatpush1.msra.mxu0 0.0
        %1026 = vmatprep.mubr.f32.mxu0 0.0
        %1027 = vmatmul.mubr.f32.gmra.mrb[0].mxu0 %v960
        %v1028 = vpop.f32.mrb[0].mxu0
        %v1029 = vadd.f32 0.0, %v1028
        %v1030 = vpop.f32.mrb[0].mxu0
        %1031 = vdwg.mxu0
        %v1033 = vsel %vm468, %v812, 0
        %1035 = vmatprep.subr.mxu0 0.0
        %1036 = vmatpush1.msra.mxu0 %v456
        %1037 = vmatprep.subr.mxu0 0.0
        %1038 = vmatpush1.msra.mxu0 0.0
        %1039 = vmatprep.subr.mxu0 0.0
        %1040 = vmatpush1.msra.mxu0 0.0
        %1041 = vmatprep.subr.mxu0 0.0
        %1042 = vmatpush1.msra.mxu0 0.0
        %1043 = vmatprep.subr.mxu0 0.0
        %1044 = vmatpush1.msra.mxu0 0.0
        %1045 = vmatprep.subr.mxu0 0.0
        %1046 = vmatpush1.msra.mxu0 0.0
        %1047 = vmatprep.subr.mxu0 0.0
        %1048 = vmatpush1.msra.mxu0 0.0
        %1049 = vmatprep.subr.mxu0 0.0
        %1050 = vmatpush1.msra.mxu0 0.0
        %1051 = vmatprep.subr.mxu0 0.0
        %1052 = vmatpush1.msra.mxu0 0.0
        %1053 = vmatprep.subr.mxu0 0.0
        %1054 = vmatpush1.msra.mxu0 0.0
        %1055 = vmatprep.subr.mxu0 0.0
        %1056 = vmatpush1.msra.mxu0 0.0
        %1057 = vmatprep.subr.mxu0 0.0
        %1058 = vmatpush1.msra.mxu0 0.0
        %1059 = vmatprep.subr.mxu0 0.0
        %1060 = vmatpush1.msra.mxu0 0.0
        %1061 = vmatprep.subr.mxu0 0.0
        %1062 = vmatpush1.msra.mxu0 0.0
        %1063 = vmatprep.subr.mxu0 0.0
        %1064 = vmatpush1.msra.mxu0 0.0
        %1065 = vmatprep.subr.mxu0 0.0
        %1066 = vmatpush1.msra.mxu0 0.0
        %1067 = vmatprep.subr.mxu0 0.0
        %1068 = vmatpush1.msra.mxu0 0.0
        %1069 = vmatprep.subr.mxu0 0.0
        %1070 = vmatpush1.msra.mxu0 0.0
        %1071 = vmatprep.subr.mxu0 0.0
        %1072 = vmatpush1.msra.mxu0 0.0
        %1073 = vmatprep.subr.mxu0 0.0
        %1074 = vmatpush1.msra.mxu0 0.0
        %1075 = vmatprep.subr.mxu0 0.0
        %1076 = vmatpush1.msra.mxu0 0.0
        %1077 = vmatprep.subr.mxu0 0.0
        %1078 = vmatpush1.msra.mxu0 0.0
        %1079 = vmatprep.subr.mxu0 0.0
        %1080 = vmatpush1.msra.mxu0 0.0
        %1081 = vmatprep.subr.mxu0 0.0
        %1082 = vmatpush1.msra.mxu0 0.0
        %1083 = vmatprep.subr.mxu0 0.0
        %1084 = vmatpush1.msra.mxu0 0.0
        %1085 = vmatprep.subr.mxu0 0.0
        %1086 = vmatpush1.msra.mxu0 0.0
        %1087 = vmatprep.subr.mxu0 0.0
        %1088 = vmatpush1.msra.mxu0 0.0
        %1089 = vmatprep.subr.mxu0 0.0
        %1090 = vmatpush1.msra.mxu0 0.0
        %1091 = vmatprep.subr.mxu0 0.0
        %1092 = vmatpush1.msra.mxu0 0.0
        %1093 = vmatprep.subr.mxu0 0.0
        %1094 = vmatpush1.msra.mxu0 0.0
        %1095 = vmatprep.subr.mxu0 0.0
        %1096 = vmatpush1.msra.mxu0 0.0
        %1097 = vmatprep.subr.mxu0 0.0
        %1098 = vmatpush1.msra.mxu0 0.0
        %1099 = vmatprep.mubr.f32.mxu0 0.0
        %1100 = vmatmul.mubr.f32.gmra.mrb[0].mxu0 %v1033
        %v1101 = vpop.f32.mrb[0].mxu0
        %v1102 = vadd.f32 0.0, %v1101
        %v1103 = vpop.f32.mrb[0].mxu0
        %1104 = vdwg.mxu0
        %1106 = vrot.lane.b32.xlu0 %v956, 8
        %v1107 = vpop.permute.xlu0 %1106
        %1110 = vrot.lane.b32.xlu0 %v1029, 16
        %v1111 = vpop.permute.xlu0 %1110
        %1114 = vrot.lane.b32.xlu0 %v1102, 24
        %v1115 = vpop.permute.xlu0 %1114
        %v1117 = vsel %vm468, %v883, %v1107
        %vm1118 = vcmask 130048
        %v1119 = vsel %vm1118, %v1117, %v1111
        %vm1120 = vcmask 195584
        %v1121 = vsel %vm1120, %v1119, %v1115
        %v1122 = vld [vmem:[%s3] sm:$0xff]
        %v1123 = vld [vmem:[%s3 + $0x8] sm:$0xff]
        %v1124 = vld [vmem:[%s3 + $0x10] sm:$0xff]
        %v1125 = vld [vmem:[%s3 + $0x18] sm:$0xff]
        %v1127 = vsel %vm326, %v1121, 0
        %1129 = vmatprep.subr.mxu0 0.0
        %1130 = vmatpush1.msra.mxu0 %v1122
        %1131 = vmatprep.subr.mxu0 0.0
        %1132 = vmatpush1.msra.mxu0 %v1123
        %1133 = vmatprep.subr.mxu0 0.0
        %1134 = vmatpush1.msra.mxu0 %v1124
        %1135 = vmatprep.subr.mxu0 0.0
        %1136 = vmatpush1.msra.mxu0 %v1125
        %1137 = vmatprep.subr.mxu0 0.0
        %1138 = vmatpush1.msra.mxu0 0.0
        %1139 = vmatprep.subr.mxu0 0.0
        %1140 = vmatpush1.msra.mxu0 0.0
        %1141 = vmatprep.subr.mxu0 0.0
        %1142 = vmatpush1.msra.mxu0 0.0
        %1143 = vmatprep.subr.mxu0 0.0
        %1144 = vmatpush1.msra.mxu0 0.0
        %1145 = vmatprep.subr.mxu0 0.0
        %1146 = vmatpush1.msra.mxu0 0.0
        %1147 = vmatprep.subr.mxu0 0.0
        %1148 = vmatpush1.msra.mxu0 0.0
        %1149 = vmatprep.subr.mxu0 0.0
        %1150 = vmatpush1.msra.mxu0 0.0
        %1151 = vmatprep.subr.mxu0 0.0
        %1152 = vmatpush1.msra.mxu0 0.0
        %1153 = vmatprep.subr.mxu0 0.0
        %1154 = vmatpush1.msra.mxu0 0.0
        %1155 = vmatprep.subr.mxu0 0.0
        %1156 = vmatpush1.msra.mxu0 0.0
        %1157 = vmatprep.subr.mxu0 0.0
        %1158 = vmatpush1.msra.mxu0 0.0
        %1159 = vmatprep.subr.mxu0 0.0
        %1160 = vmatpush1.msra.mxu0 0.0
        %1161 = vmatprep.subr.mxu0 0.0
        %1162 = vmatpush1.msra.mxu0 0.0
        %1163 = vmatprep.subr.mxu0 0.0
        %1164 = vmatpush1.msra.mxu0 0.0
        %1165 = vmatprep.subr.mxu0 0.0
        %1166 = vmatpush1.msra.mxu0 0.0
        %1167 = vmatprep.subr.mxu0 0.0
        %1168 = vmatpush1.msra.mxu0 0.0
        %1169 = vmatprep.subr.mxu0 0.0
        %1170 = vmatpush1.msra.mxu0 0.0
        %1171 = vmatprep.subr.mxu0 0.0
        %1172 = vmatpush1.msra.mxu0 0.0
        %1173 = vmatprep.subr.mxu0 0.0
        %1174 = vmatpush1.msra.mxu0 0.0
        %1175 = vmatprep.subr.mxu0 0.0
        %1176 = vmatpush1.msra.mxu0 0.0
        %1177 = vmatprep.subr.mxu0 0.0
        %1178 = vmatpush1.msra.mxu0 0.0
        %1179 = vmatprep.subr.mxu0 0.0
        %1180 = vmatpush1.msra.mxu0 0.0
        %1181 = vmatprep.subr.mxu0 0.0
        %1182 = vmatpush1.msra.mxu0 0.0
        %1183 = vmatprep.subr.mxu0 0.0
        %1184 = vmatpush1.msra.mxu0 0.0
        %1185 = vmatprep.subr.mxu0 0.0
        %1186 = vmatpush1.msra.mxu0 0.0
        %1187 = vmatprep.subr.mxu0 0.0
        %1188 = vmatpush1.msra.mxu0 0.0
        %1189 = vmatprep.subr.mxu0 0.0
        %1190 = vmatpush1.msra.mxu0 0.0
        %1191 = vmatprep.subr.mxu0 0.0
        %1192 = vmatpush1.msra.mxu0 0.0
        %1193 = vmatprep.mubr.f32.mxu0 0.0
        %1194 = vmatmul.mubr.f32.gmra.mrb[0].mxu0 %v1127
        %v1195 = vpop.f32.mrb[0].mxu0
        %v1196 = vadd.f32 0.0, %v1195
        %v1197 = vpop.f32.mrb[0].mxu0
        %1198 = vdwg.mxu0
        %v1199 = vadd.f32 %v319, %v1196
        %v1200 = vsel %vm326, %v1199, 0.0
        %1201 = vadd.xlane.f32.xlu0 %v1200
        %v1202 = vpop.xlane.xlu0 %1201
        %v1203 = vmul.f32 %v1202, %v330
        %v1204 = vsub.f32 %v1199, %v1203
        %v1205 = vmul.f32 %v1204, %v1204
        %v1206 = vsel %vm326, %v1205, 0.0
        %1207 = vadd.xlane.f32.xlu0 %v1206
        %v1208 = vpop.xlane.xlu0 %1207
        %v1209 = vmul.f32 %v1208, %v330
        %v1210 = vadd.f32 %v1209, 1e-05
        %v1211 = vrsqrt.pop %v1210
        %v1212 = vmul.f32 %v1204, %v1211
        %v1213 = vlaneseq
        %v1214 = vshrl.u32 %v1213, 7
        %v1215 = vsub.s32 0, %v1214
        %v1216 = vrot.slane %v322, %v1215
        %v1217 = vmul.f32 %v1212, %v1216
        %v1218 = vlaneseq
        %v1219 = vshrl.u32 %v1218, 7
        %v1220 = vsub.s32 0, %v1219
        %v1221 = vrot.slane %v323, %v1220
        %v1222 = vadd.f32 %v1217, %v1221
        %v1223 = vld [vmem:[%s4] sm:$0xff]
        %v1224 = vld [vmem:[%s4 + $0x8] sm:$0xff]
        %v1225 = vld [vmem:[%s4 + $0x10] sm:$0xff]
        %v1226 = vld [vmem:[%s4 + $0x18] sm:$0xff]
        %v1227 = vlaneseq
        %v1228 = vshrl.u32 %v1227, 7
        %v1229 = vsub.s32 0, %v1228
        %v1230 = vrot.slane %v325, %v1229
        %v1232 = vsel %vm326, %v1222, 0
        %1234 = vmatprep.subr.mxu0 0.0
        %1235 = vmatpush1.msra.mxu0 %v1223
        %1236 = vmatprep.subr.mxu0 0.0
        %1237 = vmatpush1.msra.mxu0 %v1224
        %1238 = vmatprep.subr.mxu0 0.0
        %1239 = vmatpush1.msra.mxu0 %v1225
        %1240 = vmatprep.subr.mxu0 0.0
        %1241 = vmatpush1.msra.mxu0 %v1226
        %1242 = vmatprep.subr.mxu0 0.0
        %1243 = vmatpush1.msra.mxu0 0.0
        %1244 = vmatprep.subr.mxu0 0.0
        %1245 = vmatpush1.msra.mxu0 0.0
        %1246 = vmatprep.subr.mxu0 0.0
        %1247 = vmatpush1.msra.mxu0 0.0
        %1248 = vmatprep.subr.mxu0 0.0
        %1249 = vmatpush1.msra.mxu0 0.0
        %1250 = vmatprep.subr.mxu0 0.0
        %1251 = vmatpush1.msra.mxu0 0.0
        %1252 = vmatprep.subr.mxu0 0.0
        %1253 = vmatpush1.msra.mxu0 0.0
        %1254 = vmatprep.subr.mxu0 0.0
        %1255 = vmatpush1.msra.mxu0 0.0
        %1256 = vmatprep.subr.mxu0 0.0
        %1257 = vmatpush1.msra.mxu0 0.0
        %1258 = vmatprep.subr.mxu0 0.0
        %1259 = vmatpush1.msra.mxu0 0.0
        %1260 = vmatprep.subr.mxu0 0.0
        %1261 = vmatpush1.msra.mxu0 0.0
        %1262 = vmatprep.subr.mxu0 0.0
        %1263 = vmatpush1.msra.mxu0 0.0
        %1264 = vmatprep.subr.mxu0 0.0
        %1265 = vmatpush1.msra.mxu0 0.0
        %1266 = vmatprep.subr.mxu0 0.0
        %1267 = vmatpush1.msra.mxu0 0.0
        %1268 = vmatprep.subr.mxu0 0.0
        %1269 = vmatpush1.msra.mxu0 0.0
        %1270 = vmatprep.subr.mxu0 0.0
        %1271 = vmatpush1.msra.mxu0 0.0
        %1272 = vmatprep.subr.mxu0 0.0
        %1273 = vmatpush1.msra.mxu0 0.0
        %1274 = vmatprep.subr.mxu0 0.0
        %1275 = vmatpush1.msra.mxu0 0.0
        %1276 = vmatprep.subr.mxu0 0.0
        %1277 = vmatpush1.msra.mxu0 0.0
        %1278 = vmatprep.subr.mxu0 0.0
        %1279 = vmatpush1.msra.mxu0 0.0
        %1280 = vmatprep.subr.mxu0 0.0
        %1281 = vmatpush1.msra.mxu0 0.0
        %1282 = vmatprep.subr.mxu0 0.0
        %1283 = vmatpush1.msra.mxu0 0.0
        %1284 = vmatprep.subr.mxu0 0.0
        %1285 = vmatpush1.msra.mxu0 0.0
        %1286 = vmatprep.subr.mxu0 0.0
        %1287 = vmatpush1.msra.mxu0 0.0
        %1288 = vmatprep.subr.mxu0 0.0
        %1289 = vmatpush1.msra.mxu0 0.0
        %1290 = vmatprep.subr.mxu0 0.0
        %1291 = vmatpush1.msra.mxu0 0.0
        %1292 = vmatprep.subr.mxu0 0.0
        %1293 = vmatpush1.msra.mxu0 0.0
        %1294 = vmatprep.subr.mxu0 0.0
        %1295 = vmatpush1.msra.mxu0 0.0
        %1296 = vmatprep.subr.mxu0 0.0
        %1297 = vmatpush1.msra.mxu0 0.0
        %1298 = vmatprep.mubr.f32.mxu0 0.0
        %1299 = vmatmul.mubr.f32.gmra.mrb[0].mxu0 %v1232
        %v1300 = vpop.f32.mrb[0].mxu0
        %v1301 = vadd.f32 %v1230, %v1300
        %v1302 = vpop.f32.mrb[0].mxu0
        %1303 = vdwg.mxu0
        %v1304 = vmax.f32 %v1301, 0.0
        %v1305 = vld [vmem:[%s5] sm:$0xff]
        %v1306 = vld [vmem:[%s5 + $0x8] sm:$0xff]
        %v1307 = vld [vmem:[%s5 + $0x10] sm:$0xff]
        %v1308 = vld [vmem:[%s5 + $0x18] sm:$0xff]
        %v1309 = vld [vmem:[%s5 + $0x20] sm:$0xff]
        %v1310 = vld [vmem:[%s5 + $0x28] sm:$0xff]
        %v1311 = vld [vmem:[%s5 + $0x30] sm:$0xff]
        %v1312 = vld [vmem:[%s5 + $0x38] sm:$0xff]
        %vm1313 = vcmask 523264
        %v1315 = vsel %vm1313, %v1304, 0
        %1317 = vmatprep.subr.mxu0 0.0
        %1318 = vmatpush1.msra.mxu0 %v1305
        %1319 = vmatprep.subr.mxu0 0.0
        %1320 = vmatpush1.msra.mxu0 %v1306
        %1321 = vmatprep.subr.mxu0 0.0
        %1322 = vmatpush1.msra.mxu0 %v1307
        %1323 = vmatprep.subr.mxu0 0.0
        %1324 = vmatpush1.msra.mxu0 %v1308
        %1325 = vmatprep.subr.mxu0 0.0
        %1326 = vmatpush1.msra.mxu0 %v1309
        %1327 = vmatprep.subr.mxu0 0.0
        %1328 = vmatpush1.msra.mxu0 %v1310
        %1329 = vmatprep.subr.mxu0 0.0
        %1330 = vmatpush1.msra.mxu0 %v1311
        %1331 = vmatprep.subr.mxu0 0.0
        %1332 = vmatpush1.msra.mxu0 %v1312
        %1333 = vmatprep.subr.mxu0 0.0
        %1334 = vmatpush1.msra.mxu0 0.0
        %1335 = vmatprep.subr.mxu0 0.0
        %1336 = vmatpush1.msra.mxu0 0.0
        %1337 = vmatprep.subr.mxu0 0.0
        %1338 = vmatpush1.msra.mxu0 0.0
        %1339 = vmatprep.subr.mxu0 0.0
        %1340 = vmatpush1.msra.mxu0 0.0
        %1341 = vmatprep.subr.mxu0 0.0
        %1342 = vmatpush1.msra.mxu0 0.0
        %1343 = vmatprep.subr.mxu0 0.0
        %1344 = vmatpush1.msra.mxu0 0.0
        %1345 = vmatprep.subr.mxu0 0.0
        %1346 = vmatpush1.msra.mxu0 0.0
        %1347 = vmatprep.subr.mxu0 0.0
        %1348 = vmatpush1.msra.mxu0 0.0
        %1349 = vmatprep.subr.mxu0 0.0
        %1350 = vmatpush1.msra.mxu0 0.0
        %1351 = vmatprep.subr.mxu0 0.0
        %1352 = vmatpush1.msra.mxu0 0.0
        %1353 = vmatprep.subr.mxu0 0.0
        %1354 = vmatpush1.msra.mxu0 0.0
        %1355 = vmatprep.subr.mxu0 0.0
        %1356 = vmatpush1.msra.mxu0 0.0
        %1357 = vmatprep.subr.mxu0 0.0
        %1358 = vmatpush1.msra.mxu0 0.0
        %1359 = vmatprep.subr.mxu0 0.0
        %1360 = vmatpush1.msra.mxu0 0.0
        %1361 = vmatprep.subr.mxu0 0.0
        %1362 = vmatpush1.msra.mxu0 0.0
        %1363 = vmatprep.subr.mxu0 0.0
        %1364 = vmatpush1.msra.mxu0 0.0
        %1365 = vmatprep.subr.mxu0 0.0
        %1366 = vmatpush1.msra.mxu0 0.0
        %1367 = vmatprep.subr.mxu0 0.0
        %1368 = vmatpush1.msra.mxu0 0.0
        %1369 = vmatprep.subr.mxu0 0.0
        %1370 = vmatpush1.msra.mxu0 0.0
        %1371 = vmatprep.subr.mxu0 0.0
        %1372 = vmatpush1.msra.mxu0 0.0
        %1373 = vmatprep.subr.mxu0 0.0
        %1374 = vmatpush1.msra.mxu0 0.0
        %1375 = vmatprep.subr.mxu0 0.0
        %1376 = vmatpush1.msra.mxu0 0.0
        %1377 = vmatprep.subr.mxu0 0.0
        %1378 = vmatpush1.msra.mxu0 0.0
        %1379 = vmatprep.subr.mxu0 0.0
        %1380 = vmatpush1.msra.mxu0 0.0
        %1381 = vmatprep.mubr.f32.mxu0 0.0
        %1382 = vmatmul.mubr.f32.gmra.mrb[0].mxu0 %v1315
        %v1383 = vpop.f32.mrb[0].mxu0
        %v1384 = vadd.f32 0.0, %v1383
        %v1385 = vpop.f32.mrb[0].mxu0
        %1386 = vdwg.mxu0
        %v1387 = vadd.f32 %v1199, %v1384
        %v1388 = vlaneseq
        %v1389 = vshrl.u32 %v1388, 7
        %v1390 = vsub.s32 0, %v1389
        %v1391 = vrot.slane %v324, %v1390
        %v1392 = vadd.f32 %v1387, %v1391
        %v1393 = vld [vmem:[%s7 + $0xd] sm:$0x1]
        %v1394 = vld [vmem:[%s7 + $0xe] sm:$0x1]
        %v1395 = vld [vmem:[%s7 + $0xf] sm:$0x1]
        %v1396 = vld [vmem:[%s7 + $0x10] sm:$0x1]
        %v1397 = vld [vmem:[%s7 + $0x11] sm:$0x1]
        %v1398 = vld [vmem:[%s6 + $0x1] sm:$0x1]
        %v1399 = vsel %vm326, %v1392, 0.0
        %1400 = vadd.xlane.f32.xlu0 %v1399
        %v1401 = vpop.xlane.xlu0 %1400
        %v1402 = vmul.f32 %v1401, %v330
        %v1403 = vsub.f32 %v1392, %v1402
        %v1404 = vmul.f32 %v1403, %v1403
        %v1405 = vsel %vm326, %v1404, 0.0
        %1406 = vadd.xlane.f32.xlu0 %v1405
        %v1407 = vpop.xlane.xlu0 %1406
        %v1408 = vmul.f32 %v1407, %v330
        %v1409 = vadd.f32 %v1408, 1e-05
        %v1410 = vrsqrt.pop %v1409
        %v1411 = vmul.f32 %v1403, %v1410
        %v1412 = vlaneseq
        %v1413 = vshrl.u32 %v1412, 7
        %v1414 = vsub.s32 0, %v1413
        %v1415 = vrot.slane %v1393, %v1414
        %v1416 = vmul.f32 %v1411, %v1415
        %v1417 = vlaneseq
        %v1418 = vshrl.u32 %v1417, 7
        %v1419 = vsub.s32 0, %v1418
        %v1420 = vrot.slane %v1394, %v1419
        %v1421 = vadd.f32 %v1416, %v1420
        %s1422 = scalar_lea.vmem %s2, 32
        %v1423 = vld [vmem:[%s1422] sm:$0xff]
        %v1424 = vld [vmem:[%s1422 + $0x8] sm:$0xff]
        %v1425 = vld [vmem:[%s1422 + $0x10] sm:$0xff]
        %v1426 = vld [vmem:[%s1422 + $0x18] sm:$0xff]
        %v1428 = vsel %vm326, %v1421, 0
        %1430 = vmatprep.subr.mxu0 0.0
        %1431 = vmatpush1.msra.mxu0 %v1423
        %1432 = vmatprep.subr.mxu0 0.0
        %1433 = vmatpush1.msra.mxu0 %v1424
        %1434 = vmatprep.subr.mxu0 0.0
        %1435 = vmatpush1.msra.mxu0 %v1425
        %1436 = vmatprep.subr.mxu0 0.0
        %1437 = vmatpush1.msra.mxu0 %v1426
        %1438 = vmatprep.subr.mxu0 0.0
        %1439 = vmatpush1.msra.mxu0 0.0
        %1440 = vmatprep.subr.mxu0 0.0
        %1441 = vmatpush1.msra.mxu0 0.0
        %1442 = vmatprep.subr.mxu0 0.0
        %1443 = vmatpush1.msra.mxu0 0.0
        %1444 = vmatprep.subr.mxu0 0.0
        %1445 = vmatpush1.msra.mxu0 0.0
        %1446 = vmatprep.subr.mxu0 0.0
        %1447 = vmatpush1.msra.mxu0 0.0
        %1448 = vmatprep.subr.mxu0 0.0
        %1449 = vmatpush1.msra.mxu0 0.0
        %1450 = vmatprep.subr.mxu0 0.0
        %1451 = vmatpush1.msra.mxu0 0.0
        %1452 = vmatprep.subr.mxu0 0.0
        %1453 = vmatpush1.msra.mxu0 0.0
        %1454 = vmatprep.subr.mxu0 0.0
        %1455 = vmatpush1.msra.mxu0 0.0
        %1456 = vmatprep.subr.mxu0 0.0
        %1457 = vmatpush1.msra.mxu0 0.0
        %1458 = vmatprep.subr.mxu0 0.0
        %1459 = vmatpush1.msra.mxu0 0.0
        %1460 = vmatprep.subr.mxu0 0.0
        %1461 = vmatpush1.msra.mxu0 0.0
        %1462 = vmatprep.subr.mxu0 0.0
        %1463 = vmatpush1.msra.mxu0 0.0
        %1464 = vmatprep.subr.mxu0 0.0
        %1465 = vmatpush1.msra.mxu0 0.0
        %1466 = vmatprep.subr.mxu0 0.0
        %1467 = vmatpush1.msra.mxu0 0.0
        %1468 = vmatprep.subr.mxu0 0.0
        %1469 = vmatpush1.msra.mxu0 0.0
        %1470 = vmatprep.subr.mxu0 0.0
        %1471 = vmatpush1.msra.mxu0 0.0
        %1472 = vmatprep.subr.mxu0 0.0
        %1473 = vmatpush1.msra.mxu0 0.0
        %1474 = vmatprep.subr.mxu0 0.0
        %1475 = vmatpush1.msra.mxu0 0.0
        %1476 = vmatprep.subr.mxu0 0.0
        %1477 = vmatpush1.msra.mxu0 0.0
        %1478 = vmatprep.subr.mxu0 0.0
        %1479 = vmatpush1.msra.mxu0 0.0
        %1480 = vmatprep.subr.mxu0 0.0
        %1481 = vmatpush1.msra.mxu0 0.0
        %1482 = vmatprep.subr.mxu0 0.0
        %1483 = vmatpush1.msra.mxu0 0.0
        %1484 = vmatprep.subr.mxu0 0.0
        %1485 = vmatpush1.msra.mxu0 0.0
        %1486 = vmatprep.subr.mxu0 0.0
        %1487 = vmatpush1.msra.mxu0 0.0
        %1488 = vmatprep.subr.mxu0 0.0
        %1489 = vmatpush1.msra.mxu0 0.0
        %1490 = vmatprep.subr.mxu0 0.0
        %1491 = vmatpush1.msra.mxu0 0.0
        %1492 = vmatprep.subr.mxu0 0.0
        %1493 = vmatpush1.msra.mxu0 0.0
        %1494 = vmatprep.mubr.f32.mxu0 0.0
        %1495 = vmatmul.mubr.f32.gmra.mrb[0].mxu0 %v1428
        %v1496 = vpop.f32.mrb[0].mxu0
        %v1497 = vadd.f32 0.0, %v1496
        %v1498 = vpop.f32.mrb[0].mxu0
        %1499 = vdwg.mxu0
        %1501 = vrot.lane.b32.xlu0 %v1497, 120
        %v1502 = vpop.permute.xlu0 %1501
        %1504 = vrot.lane.b32.xlu0 %v1497, 112
        %v1505 = vpop.permute.xlu0 %1504
        %1507 = vrot.lane.b32.xlu0 %v1497, 104
        %v1508 = vpop.permute.xlu0 %1507
        %1510 = vrot.lane.b32.xlu0 %v1497, 96
        %v1511 = vpop.permute.xlu0 %1510
        %1512 = vrot.lane.b32.xlu0 %v1497, 88
        %v1513 = vpop.permute.xlu0 %1512
        %1514 = vrot.lane.b32.xlu0 %v1497, 80
        %v1515 = vpop.permute.xlu0 %1514
        %1516 = vrot.lane.b32.xlu0 %v1497, 72
        %v1517 = vpop.permute.xlu0 %1516
        %1518 = vrot.lane.b32.xlu0 %v1497, 64
        %v1519 = vpop.permute.xlu0 %1518
        %1521 = vrot.lane.b32.xlu0 %v1497, 56
        %v1522 = vpop.permute.xlu0 %1521
        %1524 = vrot.lane.b32.xlu0 %v1497, 48
        %v1525 = vpop.permute.xlu0 %1524
        %1527 = vrot.lane.b32.xlu0 %v1497, 40
        %v1528 = vpop.permute.xlu0 %1527
        %v1530 = vmul.f32 %v1497, 0.35355338
        %v1531 = vmul.f32 %v1502, 0.35355338
        %v1532 = vmul.f32 %v1505, 0.35355338
        %v1533 = vmul.f32 %v1508, 0.35355338
        %v1535 = vsel %vm468, %v1530, 0
        %v1537 = vsel %vm468, %v1511, 0
        %1539 = vmatprep.subr.mxu0 0.0
        %1540 = vmatpush1.xpose.msra.mxu0 %v1537
        %1541 = vmatprep.subr.mxu0 0.0
        %1542 = vmatpush1.xpose.msra.mxu0 0.0
        %1543 = vmatprep.subr.mxu0 0.0
        %1544 = vmatpush1.xpose.msra.mxu0 0.0
        %1545 = vmatprep.subr.mxu0 0.0
        %1546 = vmatpush1.xpose.msra.mxu0 0.0
        %1547 = vmatprep.subr.mxu0 0.0
        %1548 = vmatpush1.xpose.msra.mxu0 0.0
        %1549 = vmatprep.subr.mxu0 0.0
        %1550 = vmatpush1.xpose.msra.mxu0 0.0
        %1551 = vmatprep.subr.mxu0 0.0
        %1552 = vmatpush1.xpose.msra.mxu0 0.0
        %1553 = vmatprep.subr.mxu0 0.0
        %1554 = vmatpush1.xpose.msra.mxu0 0.0
        %1555 = vmatprep.subr.mxu0 0.0
        %1556 = vmatpush1.xpose.msra.mxu0 0.0
        %1557 = vmatprep.subr.mxu0 0.0
        %1558 = vmatpush1.xpose.msra.mxu0 0.0
        %1559 = vmatprep.subr.mxu0 0.0
        %1560 = vmatpush1.xpose.msra.mxu0 0.0
        %1561 = vmatprep.subr.mxu0 0.0
        %1562 = vmatpush1.xpose.msra.mxu0 0.0
        %1563 = vmatprep.subr.mxu0 0.0
        %1564 = vmatpush1.xpose.msra.mxu0 0.0
        %1565 = vmatprep.subr.mxu0 0.0
        %1566 = vmatpush1.xpose.msra.mxu0 0.0
        %1567 = vmatprep.subr.mxu0 0.0
        %1568 = vmatpush1.xpose.msra.mxu0 0.0
        %1569 = vmatprep.subr.mxu0 0.0
        %1570 = vmatpush1.xpose.msra.mxu0 0.0
        %1571 = vmatprep.subr.mxu0 0.0
        %1572 = vmatpush1.xpose.msra.mxu0 0.0
        %1573 = vmatprep.subr.mxu0 0.0
        %1574 = vmatpush1.xpose.msra.mxu0 0.0
        %1575 = vmatprep.subr.mxu0 0.0
        %1576 = vmatpush1.xpose.msra.mxu0 0.0
        %1577 = vmatprep.subr.mxu0 0.0
        %1578 = vmatpush1.xpose.msra.mxu0 0.0
        %1579 = vmatprep.subr.mxu0 0.0
        %1580 = vmatpush1.xpose.msra.mxu0 0.0
        %1581 = vmatprep.subr.mxu0 0.0
        %1582 = vmatpush1.xpose.msra.mxu0 0.0
        %1583 = vmatprep.subr.mxu0 0.0
        %1584 = vmatpush1.xpose.msra.mxu0 0.0
        %1585 = vmatprep.subr.mxu0 0.0
        %1586 = vmatpush1.xpose.msra.mxu0 0.0
        %1587 = vmatprep.subr.mxu0 0.0
        %1588 = vmatpush1.xpose.msra.mxu0 0.0
        %1589 = vmatprep.subr.mxu0 0.0
        %1590 = vmatpush1.xpose.msra.mxu0 0.0
        %1591 = vmatprep.subr.mxu0 0.0
        %1592 = vmatpush1.xpose.msra.mxu0 0.0
        %1593 = vmatprep.subr.mxu0 0.0
        %1594 = vmatpush1.xpose.msra.mxu0 0.0
        %1595 = vmatprep.subr.mxu0 0.0
        %1596 = vmatpush1.xpose.msra.mxu0 0.0
        %1597 = vmatprep.subr.mxu0 0.0
        %1598 = vmatpush1.xpose.msra.mxu0 0.0
        %1599 = vmatprep.subr.mxu0 0.0
        %1600 = vmatpush1.xpose.msra.mxu0 0.0
        %1601 = vmatprep.subr.mxu0 0.0
        %1602 = vmatpush1.xpose.msra.mxu0 0.0
        %1603 = vmatprep.mubr.f32.mxu0 0.0
        %1604 = vmatmul.mubr.f32.gmra.mrb[0].mxu0 %v1535
        %v1605 = vpop.f32.mrb[0].mxu0
        %v1606 = vadd.f32 %v466, %v1605
        %v1607 = vpop.f32.mrb[0].mxu0
        %1608 = vdwg.mxu0
        %v1610 = vsel %vm468, %v1531, 0
        %v1612 = vsel %vm468, %v1513, 0
        %1614 = vmatprep.subr.mxu0 0.0
        %1615 = vmatpush1.xpose.msra.mxu0 %v1612
        %1616 = vmatprep.subr.mxu0 0.0
        %1617 = vmatpush1.xpose.msra.mxu0 0.0
        %1618 = vmatprep.subr.mxu0 0.0
        %1619 = vmatpush1.xpose.msra.mxu0 0.0
        %1620 = vmatprep.subr.mxu0 0.0
        %1621 = vmatpush1.xpose.msra.mxu0 0.0
        %1622 = vmatprep.subr.mxu0 0.0
        %1623 = vmatpush1.xpose.msra.mxu0 0.0
        %1624 = vmatprep.subr.mxu0 0.0
        %1625 = vmatpush1.xpose.msra.mxu0 0.0
        %1626 = vmatprep.subr.mxu0 0.0
        %1627 = vmatpush1.xpose.msra.mxu0 0.0
        %1628 = vmatprep.subr.mxu0 0.0
        %1629 = vmatpush1.xpose.msra.mxu0 0.0
        %1630 = vmatprep.subr.mxu0 0.0
        %1631 = vmatpush1.xpose.msra.mxu0 0.0
        %1632 = vmatprep.subr.mxu0 0.0
        %1633 = vmatpush1.xpose.msra.mxu0 0.0
        %1634 = vmatprep.subr.mxu0 0.0
        %1635 = vmatpush1.xpose.msra.mxu0 0.0
        %1636 = vmatprep.subr.mxu0 0.0
        %1637 = vmatpush1.xpose.msra.mxu0 0.0
        %1638 = vmatprep.subr.mxu0 0.0
        %1639 = vmatpush1.xpose.msra.mxu0 0.0
        %1640 = vmatprep.subr.mxu0 0.0
        %1641 = vmatpush1.xpose.msra.mxu0 0.0
        %1642 = vmatprep.subr.mxu0 0.0
        %1643 = vmatpush1.xpose.msra.mxu0 0.0
        %1644 = vmatprep.subr.mxu0 0.0
        %1645 = vmatpush1.xpose.msra.mxu0 0.0
        %1646 = vmatprep.subr.mxu0 0.0
        %1647 = vmatpush1.xpose.msra.mxu0 0.0
        %1648 = vmatprep.subr.mxu0 0.0
        %1649 = vmatpush1.xpose.msra.mxu0 0.0
        %1650 = vmatprep.subr.mxu0 0.0
        %1651 = vmatpush1.xpose.msra.mxu0 0.0
        %1652 = vmatprep.subr.mxu0 0.0
        %1653 = vmatpush1.xpose.msra.mxu0 0.0
        %1654 = vmatprep.subr.mxu0 0.0
        %1655 = vmatpush1.xpose.msra.mxu0 0.0
        %1656 = vmatprep.subr.mxu0 0.0
        %1657 = vmatpush1.xpose.msra.mxu0 0.0
        %1658 = vmatprep.subr.mxu0 0.0
        %1659 = vmatpush1.xpose.msra.mxu0 0.0
        %1660 = vmatprep.subr.mxu0 0.0
        %1661 = vmatpush1.xpose.msra.mxu0 0.0
        %1662 = vmatprep.subr.mxu0 0.0
        %1663 = vmatpush1.xpose.msra.mxu0 0.0
        %1664 = vmatprep.subr.mxu0 0.0
        %1665 = vmatpush1.xpose.msra.mxu0 0.0
        %1666 = vmatprep.subr.mxu0 0.0
        %1667 = vmatpush1.xpose.msra.mxu0 0.0
        %1668 = vmatprep.subr.mxu0 0.0
        %1669 = vmatpush1.xpose.msra.mxu0 0.0
        %1670 = vmatprep.subr.mxu0 0.0
        %1671 = vmatpush1.xpose.msra.mxu0 0.0
        %1672 = vmatprep.subr.mxu0 0.0
        %1673 = vmatpush1.xpose.msra.mxu0 0.0
        %1674 = vmatprep.subr.mxu0 0.0
        %1675 = vmatpush1.xpose.msra.mxu0 0.0
        %1676 = vmatprep.subr.mxu0 0.0
        %1677 = vmatpush1.xpose.msra.mxu0 0.0
        %1678 = vmatprep.mubr.f32.mxu0 0.0
        %1679 = vmatmul.mubr.f32.gmra.mrb[0].mxu0 %v1610
        %v1680 = vpop.f32.mrb[0].mxu0
        %v1681 = vadd.f32 %v466, %v1680
        %v1682 = vpop.f32.mrb[0].mxu0
        %1683 = vdwg.mxu0
        %v1685 = vsel %vm468, %v1532, 0
        %v1687 = vsel %vm468, %v1515, 0
        %1689 = vmatprep.subr.mxu0 0.0
        %1690 = vmatpush1.xpose.msra.mxu0 %v1687
        %1691 = vmatprep.subr.mxu0 0.0
        %1692 = vmatpush1.xpose.msra.mxu0 0.0
        %1693 = vmatprep.subr.mxu0 0.0
        %1694 = vmatpush1.xpose.msra.mxu0 0.0
        %1695 = vmatprep.subr.mxu0 0.0
        %1696 = vmatpush1.xpose.msra.mxu0 0.0
        %1697 = vmatprep.subr.mxu0 0.0
        %1698 = vmatpush1.xpose.msra.mxu0 0.0
        %1699 = vmatprep.subr.mxu0 0.0
        %1700 = vmatpush1.xpose.msra.mxu0 0.0
        %1701 = vmatprep.subr.mxu0 0.0
        %1702 = vmatpush1.xpose.msra.mxu0 0.0
        %1703 = vmatprep.subr.mxu0 0.0
        %1704 = vmatpush1.xpose.msra.mxu0 0.0
        %1705 = vmatprep.subr.mxu0 0.0
        %1706 = vmatpush1.xpose.msra.mxu0 0.0
        %1707 = vmatprep.subr.mxu0 0.0
        %1708 = vmatpush1.xpose.msra.mxu0 0.0
        %1709 = vmatprep.subr.mxu0 0.0
        %1710 = vmatpush1.xpose.msra.mxu0 0.0
        %1711 = vmatprep.subr.mxu0 0.0
        %1712 = vmatpush1.xpose.msra.mxu0 0.0
        %1713 = vmatprep.subr.mxu0 0.0
        %1714 = vmatpush1.xpose.msra.mxu0 0.0
        %1715 = vmatprep.subr.mxu0 0.0
        %1716 = vmatpush1.xpose.msra.mxu0 0.0
        %1717 = vmatprep.subr.mxu0 0.0
        %1718 = vmatpush1.xpose.msra.mxu0 0.0
        %1719 = vmatprep.subr.mxu0 0.0
        %1720 = vmatpush1.xpose.msra.mxu0 0.0
        %1721 = vmatprep.subr.mxu0 0.0
        %1722 = vmatpush1.xpose.msra.mxu0 0.0
        %1723 = vmatprep.subr.mxu0 0.0
        %1724 = vmatpush1.xpose.msra.mxu0 0.0
        %1725 = vmatprep.subr.mxu0 0.0
        %1726 = vmatpush1.xpose.msra.mxu0 0.0
        %1727 = vmatprep.subr.mxu0 0.0
        %1728 = vmatpush1.xpose.msra.mxu0 0.0
        %1729 = vmatprep.subr.mxu0 0.0
        %1730 = vmatpush1.xpose.msra.mxu0 0.0
        %1731 = vmatprep.subr.mxu0 0.0
        %1732 = vmatpush1.xpose.msra.mxu0 0.0
        %1733 = vmatprep.subr.mxu0 0.0
        %1734 = vmatpush1.xpose.msra.mxu0 0.0
        %1735 = vmatprep.subr.mxu0 0.0
        %1736 = vmatpush1.xpose.msra.mxu0 0.0
        %1737 = vmatprep.subr.mxu0 0.0
        %1738 = vmatpush1.xpose.msra.mxu0 0.0
        %1739 = vmatprep.subr.mxu0 0.0
        %1740 = vmatpush1.xpose.msra.mxu0 0.0
        %1741 = vmatprep.subr.mxu0 0.0
        %1742 = vmatpush1.xpose.msra.mxu0 0.0
        %1743 = vmatprep.subr.mxu0 0.0
        %1744 = vmatpush1.xpose.msra.mxu0 0.0
        %1745 = vmatprep.subr.mxu0 0.0
        %1746 = vmatpush1.xpose.msra.mxu0 0.0
        %1747 = vmatprep.subr.mxu0 0.0
        %1748 = vmatpush1.xpose.msra.mxu0 0.0
        %1749 = vmatprep.subr.mxu0 0.0
        %1750 = vmatpush1.xpose.msra.mxu0 0.0
        %1751 = vmatprep.subr.mxu0 0.0
        %1752 = vmatpush1.xpose.msra.mxu0 0.0
        %1753 = vmatprep.mubr.f32.mxu0 0.0
        %1754 = vmatmul.mubr.f32.gmra.mrb[0].mxu0 %v1685
        %v1755 = vpop.f32.mrb[0].mxu0
        %v1756 = vadd.f32 %v466, %v1755
        %v1757 = vpop.f32.mrb[0].mxu0
        %1758 = vdwg.mxu0
        %v1760 = vsel %vm468, %v1533, 0
        %v1762 = vsel %vm468, %v1517, 0
        %1764 = vmatprep.subr.mxu0 0.0
        %1765 = vmatpush1.xpose.msra.mxu0 %v1762
        %1766 = vmatprep.subr.mxu0 0.0
        %1767 = vmatpush1.xpose.msra.mxu0 0.0
        %1768 = vmatprep.subr.mxu0 0.0
        %1769 = vmatpush1.xpose.msra.mxu0 0.0
        %1770 = vmatprep.subr.mxu0 0.0
        %1771 = vmatpush1.xpose.msra.mxu0 0.0
        %1772 = vmatprep.subr.mxu0 0.0
        %1773 = vmatpush1.xpose.msra.mxu0 0.0
        %1774 = vmatprep.subr.mxu0 0.0
        %1775 = vmatpush1.xpose.msra.mxu0 0.0
        %1776 = vmatprep.subr.mxu0 0.0
        %1777 = vmatpush1.xpose.msra.mxu0 0.0
        %1778 = vmatprep.subr.mxu0 0.0
        %1779 = vmatpush1.xpose.msra.mxu0 0.0
        %1780 = vmatprep.subr.mxu0 0.0
        %1781 = vmatpush1.xpose.msra.mxu0 0.0
        %1782 = vmatprep.subr.mxu0 0.0
        %1783 = vmatpush1.xpose.msra.mxu0 0.0
        %1784 = vmatprep.subr.mxu0 0.0
        %1785 = vmatpush1.xpose.msra.mxu0 0.0
        %1786 = vmatprep.subr.mxu0 0.0
        %1787 = vmatpush1.xpose.msra.mxu0 0.0
        %1788 = vmatprep.subr.mxu0 0.0
        %1789 = vmatpush1.xpose.msra.mxu0 0.0
        %1790 = vmatprep.subr.mxu0 0.0
        %1791 = vmatpush1.xpose.msra.mxu0 0.0
        %1792 = vmatprep.subr.mxu0 0.0
        %1793 = vmatpush1.xpose.msra.mxu0 0.0
        %1794 = vmatprep.subr.mxu0 0.0
        %1795 = vmatpush1.xpose.msra.mxu0 0.0
        %1796 = vmatprep.subr.mxu0 0.0
        %1797 = vmatpush1.xpose.msra.mxu0 0.0
        %1798 = vmatprep.subr.mxu0 0.0
        %1799 = vmatpush1.xpose.msra.mxu0 0.0
        %1800 = vmatprep.subr.mxu0 0.0
        %1801 = vmatpush1.xpose.msra.mxu0 0.0
        %1802 = vmatprep.subr.mxu0 0.0
        %1803 = vmatpush1.xpose.msra.mxu0 0.0
        %1804 = vmatprep.subr.mxu0 0.0
        %1805 = vmatpush1.xpose.msra.mxu0 0.0
        %1806 = vmatprep.subr.mxu0 0.0
        %1807 = vmatpush1.xpose.msra.mxu0 0.0
        %1808 = vmatprep.subr.mxu0 0.0
        %1809 = vmatpush1.xpose.msra.mxu0 0.0
        %1810 = vmatprep.subr.mxu0 0.0
        %1811 = vmatpush1.xpose.msra.mxu0 0.0
        %1812 = vmatprep.subr.mxu0 0.0
        %1813 = vmatpush1.xpose.msra.mxu0 0.0
        %1814 = vmatprep.subr.mxu0 0.0
        %1815 = vmatpush1.xpose.msra.mxu0 0.0
        %1816 = vmatprep.subr.mxu0 0.0
        %1817 = vmatpush1.xpose.msra.mxu0 0.0
        %1818 = vmatprep.subr.mxu0 0.0
        %1819 = vmatpush1.xpose.msra.mxu0 0.0
        %1820 = vmatprep.subr.mxu0 0.0
        %1821 = vmatpush1.xpose.msra.mxu0 0.0
        %1822 = vmatprep.subr.mxu0 0.0
        %1823 = vmatpush1.xpose.msra.mxu0 0.0
        %1824 = vmatprep.subr.mxu0 0.0
        %1825 = vmatpush1.xpose.msra.mxu0 0.0
        %1826 = vmatprep.subr.mxu0 0.0
        %1827 = vmatpush1.xpose.msra.mxu0 0.0
        %1828 = vmatprep.mubr.f32.mxu0 0.0
        %1829 = vmatmul.mubr.f32.gmra.mrb[0].mxu0 %v1760
        %v1830 = vpop.f32.mrb[0].mxu0
        %v1831 = vadd.f32 %v466, %v1830
        %v1832 = vpop.f32.mrb[0].mxu0
        %1833 = vdwg.mxu0
        %v1834 = vsel %vm468, %v1606, -inf
        %1835 = vmax.xlane.f32.xlu0 %v1834
        %v1836 = vpop.xlane.xlu0 %1835
        %v1837 = vsel %vm468, %v1681, -inf
        %1838 = vmax.xlane.f32.xlu0 %v1837
        %v1839 = vpop.xlane.xlu0 %1838
        %v1840 = vsel %vm468, %v1756, -inf
        %1841 = vmax.xlane.f32.xlu0 %v1840
        %v1842 = vpop.xlane.xlu0 %1841
        %v1843 = vsel %vm468, %v1831, -inf
        %1844 = vmax.xlane.f32.xlu0 %v1843
        %v1845 = vpop.xlane.xlu0 %1844
        %v1846 = vsub.f32 %v1606, %v1836
        %v1847 = vsub.f32 %v1681, %v1839
        %v1848 = vsub.f32 %v1756, %v1842
        %v1849 = vsub.f32 %v1831, %v1845
        %v1850 = vmul.f32 %v1846, 1.442695
        %v1851 = vpow.pop %v1850
        %v1852 = vmul.f32 %v1847, 1.442695
        %v1853 = vpow.pop %v1852
        %v1854 = vmul.f32 %v1848, 1.442695
        %v1855 = vpow.pop %v1854
        %v1856 = vmul.f32 %v1849, 1.442695
        %v1857 = vpow.pop %v1856
        %v1858 = vsel %vm468, %v1851, 0.0
        %1859 = vadd.xlane.f32.xlu0 %v1858
        %v1860 = vpop.xlane.xlu0 %1859
        %v1861 = vsel %vm468, %v1853, 0.0
        %1862 = vadd.xlane.f32.xlu0 %v1861
        %v1863 = vpop.xlane.xlu0 %1862
        %v1864 = vsel %vm468, %v1855, 0.0
        %1865 = vadd.xlane.f32.xlu0 %v1864
        %v1866 = vpop.xlane.xlu0 %1865
        %v1867 = vsel %vm468, %v1857, 0.0
        %1868 = vadd.xlane.f32.xlu0 %v1867
        %v1869 = vpop.xlane.xlu0 %1868
        %v1870 = vrcp.pop %v1860
        %v1871 = vmul.f32 %v1851, %v1870
        %v1872 = vrcp.pop %v1863
        %v1873 = vmul.f32 %v1853, %v1872
        %v1874 = vrcp.pop %v1866
        %v1875 = vmul.f32 %v1855, %v1874
        %v1876 = vrcp.pop %v1869
        %v1877 = vmul.f32 %v1857, %v1876
        %v1879 = vsel %vm468, %v1871, 0
        %1881 = vmatprep.subr.mxu0 0.0
        %1882 = vmatpush1.msra.mxu0 %v1519
        %1883 = vmatprep.subr.mxu0 0.0
        %1884 = vmatpush1.msra.mxu0 0.0
        %1885 = vmatprep.subr.mxu0 0.0
        %1886 = vmatpush1.msra.mxu0 0.0
        %1887 = vmatprep.subr.mxu0 0.0
        %1888 = vmatpush1.msra.mxu0 0.0
        %1889 = vmatprep.subr.mxu0 0.0
        %1890 = vmatpush1.msra.mxu0 0.0
        %1891 = vmatprep.subr.mxu0 0.0
        %1892 = vmatpush1.msra.mxu0 0.0
        %1893 = vmatprep.subr.mxu0 0.0
        %1894 = vmatpush1.msra.mxu0 0.0
        %1895 = vmatprep.subr.mxu0 0.0
        %1896 = vmatpush1.msra.mxu0 0.0
        %1897 = vmatprep.subr.mxu0 0.0
        %1898 = vmatpush1.msra.mxu0 0.0
        %1899 = vmatprep.subr.mxu0 0.0
        %1900 = vmatpush1.msra.mxu0 0.0
        %1901 = vmatprep.subr.mxu0 0.0
        %1902 = vmatpush1.msra.mxu0 0.0
        %1903 = vmatprep.subr.mxu0 0.0
        %1904 = vmatpush1.msra.mxu0 0.0
        %1905 = vmatprep.subr.mxu0 0.0
        %1906 = vmatpush1.msra.mxu0 0.0
        %1907 = vmatprep.subr.mxu0 0.0
        %1908 = vmatpush1.msra.mxu0 0.0
        %1909 = vmatprep.subr.mxu0 0.0
        %1910 = vmatpush1.msra.mxu0 0.0
        %1911 = vmatprep.subr.mxu0 0.0
        %1912 = vmatpush1.msra.mxu0 0.0
        %1913 = vmatprep.subr.mxu0 0.0
        %1914 = vmatpush1.msra.mxu0 0.0
        %1915 = vmatprep.subr.mxu0 0.0
        %1916 = vmatpush1.msra.mxu0 0.0
        %1917 = vmatprep.subr.mxu0 0.0
        %1918 = vmatpush1.msra.mxu0 0.0
        %1919 = vmatprep.subr.mxu0 0.0
        %1920 = vmatpush1.msra.mxu0 0.0
        %1921 = vmatprep.subr.mxu0 0.0
        %1922 = vmatpush1.msra.mxu0 0.0
        %1923 = vmatprep.subr.mxu0 0.0
        %1924 = vmatpush1.msra.mxu0 0.0
        %1925 = vmatprep.subr.mxu0 0.0
        %1926 = vmatpush1.msra.mxu0 0.0
        %1927 = vmatprep.subr.mxu0 0.0
        %1928 = vmatpush1.msra.mxu0 0.0
        %1929 = vmatprep.subr.mxu0 0.0
        %1930 = vmatpush1.msra.mxu0 0.0
        %1931 = vmatprep.subr.mxu0 0.0
        %1932 = vmatpush1.msra.mxu0 0.0
        %1933 = vmatprep.subr.mxu0 0.0
        %1934 = vmatpush1.msra.mxu0 0.0
        %1935 = vmatprep.subr.mxu0 0.0
        %1936 = vmatpush1.msra.mxu0 0.0
        %1937 = vmatprep.subr.mxu0 0.0
        %1938 = vmatpush1.msra.mxu0 0.0
        %1939 = vmatprep.subr.mxu0 0.0
        %1940 = vmatpush1.msra.mxu0 0.0
        %1941 = vmatprep.subr.mxu0 0.0
        %1942 = vmatpush1.msra.mxu0 0.0
        %1943 = vmatprep.subr.mxu0 0.0
        %1944 = vmatpush1.msra.mxu0 0.0
        %1945 = vmatprep.mubr.f32.mxu0 0.0
        %1946 = vmatmul.mubr.f32.gmra.mrb[0].mxu0 %v1879
        %v1947 = vpop.f32.mrb[0].mxu0
        %v1948 = vadd.f32 0.0, %v1947
        %v1949 = vpop.f32.mrb[0].mxu0
        %1950 = vdwg.mxu0
        %v1952 = vsel %vm468, %v1873, 0
        %1954 = vmatprep.subr.mxu0 0.0
        %1955 = vmatpush1.msra.mxu0 %v1522
        %1956 = vmatprep.subr.mxu0 0.0
        %1957 = vmatpush1.msra.mxu0 0.0
        %1958 = vmatprep.subr.mxu0 0.0
        %1959 = vmatpush1.msra.mxu0 0.0
        %1960 = vmatprep.subr.mxu0 0.0
        %1961 = vmatpush1.msra.mxu0 0.0
        %1962 = vmatprep.subr.mxu0 0.0
        %1963 = vmatpush1.msra.mxu0 0.0
        %1964 = vmatprep.subr.mxu0 0.0
        %1965 = vmatpush1.msra.mxu0 0.0
        %1966 = vmatprep.subr.mxu0 0.0
        %1967 = vmatpush1.msra.mxu0 0.0
        %1968 = vmatprep.subr.mxu0 0.0
        %1969 = vmatpush1.msra.mxu0 0.0
        %1970 = vmatprep.subr.mxu0 0.0
        %1971 = vmatpush1.msra.mxu0 0.0
        %1972 = vmatprep.subr.mxu0 0.0
        %1973 = vmatpush1.msra.mxu0 0.0
        %1974 = vmatprep.subr.mxu0 0.0
        %1975 = vmatpush1.msra.mxu0 0.0
        %1976 = vmatprep.subr.mxu0 0.0
        %1977 = vmatpush1.msra.mxu0 0.0
        %1978 = vmatprep.subr.mxu0 0.0
        %1979 = vmatpush1.msra.mxu0 0.0
        %1980 = vmatprep.subr.mxu0 0.0
        %1981 = vmatpush1.msra.mxu0 0.0
        %1982 = vmatprep.subr.mxu0 0.0
        %1983 = vmatpush1.msra.mxu0 0.0
        %1984 = vmatprep.subr.mxu0 0.0
        %1985 = vmatpush1.msra.mxu0 0.0
        %1986 = vmatprep.subr.mxu0 0.0
        %1987 = vmatpush1.msra.mxu0 0.0
        %1988 = vmatprep.subr.mxu0 0.0
        %1989 = vmatpush1.msra.mxu0 0.0
        %1990 = vmatprep.subr.mxu0 0.0
        %1991 = vmatpush1.msra.mxu0 0.0
        %1992 = vmatprep.subr.mxu0 0.0
        %1993 = vmatpush1.msra.mxu0 0.0
        %1994 = vmatprep.subr.mxu0 0.0
        %1995 = vmatpush1.msra.mxu0 0.0
        %1996 = vmatprep.subr.mxu0 0.0
        %1997 = vmatpush1.msra.mxu0 0.0
        %1998 = vmatprep.subr.mxu0 0.0
        %1999 = vmatpush1.msra.mxu0 0.0
        %2000 = vmatprep.subr.mxu0 0.0
        %2001 = vmatpush1.msra.mxu0 0.0
        %2002 = vmatprep.subr.mxu0 0.0
        %2003 = vmatpush1.msra.mxu0 0.0
        %2004 = vmatprep.subr.mxu0 0.0
        %2005 = vmatpush1.msra.mxu0 0.0
        %2006 = vmatprep.subr.mxu0 0.0
        %2007 = vmatpush1.msra.mxu0 0.0
        %2008 = vmatprep.subr.mxu0 0.0
        %2009 = vmatpush1.msra.mxu0 0.0
        %2010 = vmatprep.subr.mxu0 0.0
        %2011 = vmatpush1.msra.mxu0 0.0
        %2012 = vmatprep.subr.mxu0 0.0
        %2013 = vmatpush1.msra.mxu0 0.0
        %2014 = vmatprep.subr.mxu0 0.0
        %2015 = vmatpush1.msra.mxu0 0.0
        %2016 = vmatprep.subr.mxu0 0.0
        %2017 = vmatpush1.msra.mxu0 0.0
        %2018 = vmatprep.mubr.f32.mxu0 0.0
        %2019 = vmatmul.mubr.f32.gmra.mrb[0].mxu0 %v1952
        %v2020 = vpop.f32.mrb[0].mxu0
        %v2021 = vadd.f32 0.0, %v2020
        %v2022 = vpop.f32.mrb[0].mxu0
        %2023 = vdwg.mxu0
        %v2025 = vsel %vm468, %v1875, 0
        %2027 = vmatprep.subr.mxu0 0.0
        %2028 = vmatpush1.msra.mxu0 %v1525
        %2029 = vmatprep.subr.mxu0 0.0
        %2030 = vmatpush1.msra.mxu0 0.0
        %2031 = vmatprep.subr.mxu0 0.0
        %2032 = vmatpush1.msra.mxu0 0.0
        %2033 = vmatprep.subr.mxu0 0.0
        %2034 = vmatpush1.msra.mxu0 0.0
        %2035 = vmatprep.subr.mxu0 0.0
        %2036 = vmatpush1.msra.mxu0 0.0
        %2037 = vmatprep.subr.mxu0 0.0
        %2038 = vmatpush1.msra.mxu0 0.0
        %2039 = vmatprep.subr.mxu0 0.0
        %2040 = vmatpush1.msra.mxu0 0.0
        %2041 = vmatprep.subr.mxu0 0.0
        %2042 = vmatpush1.msra.mxu0 0.0
        %2043 = vmatprep.subr.mxu0 0.0
        %2044 = vmatpush1.msra.mxu0 0.0
        %2045 = vmatprep.subr.mxu0 0.0
        %2046 = vmatpush1.msra.mxu0 0.0
        %2047 = vmatprep.subr.mxu0 0.0
        %2048 = vmatpush1.msra.mxu0 0.0
        %2049 = vmatprep.subr.mxu0 0.0
        %2050 = vmatpush1.msra.mxu0 0.0
        %2051 = vmatprep.subr.mxu0 0.0
        %2052 = vmatpush1.msra.mxu0 0.0
        %2053 = vmatprep.subr.mxu0 0.0
        %2054 = vmatpush1.msra.mxu0 0.0
        %2055 = vmatprep.subr.mxu0 0.0
        %2056 = vmatpush1.msra.mxu0 0.0
        %2057 = vmatprep.subr.mxu0 0.0
        %2058 = vmatpush1.msra.mxu0 0.0
        %2059 = vmatprep.subr.mxu0 0.0
        %2060 = vmatpush1.msra.mxu0 0.0
        %2061 = vmatprep.subr.mxu0 0.0
        %2062 = vmatpush1.msra.mxu0 0.0
        %2063 = vmatprep.subr.mxu0 0.0
        %2064 = vmatpush1.msra.mxu0 0.0
        %2065 = vmatprep.subr.mxu0 0.0
        %2066 = vmatpush1.msra.mxu0 0.0
        %2067 = vmatprep.subr.mxu0 0.0
        %2068 = vmatpush1.msra.mxu0 0.0
        %2069 = vmatprep.subr.mxu0 0.0
        %2070 = vmatpush1.msra.mxu0 0.0
        %2071 = vmatprep.subr.mxu0 0.0
        %2072 = vmatpush1.msra.mxu0 0.0
        %2073 = vmatprep.subr.mxu0 0.0
        %2074 = vmatpush1.msra.mxu0 0.0
        %2075 = vmatprep.subr.mxu0 0.0
        %2076 = vmatpush1.msra.mxu0 0.0
        %2077 = vmatprep.subr.mxu0 0.0
        %2078 = vmatpush1.msra.mxu0 0.0
        %2079 = vmatprep.subr.mxu0 0.0
        %2080 = vmatpush1.msra.mxu0 0.0
        %2081 = vmatprep.subr.mxu0 0.0
        %2082 = vmatpush1.msra.mxu0 0.0
        %2083 = vmatprep.subr.mxu0 0.0
        %2084 = vmatpush1.msra.mxu0 0.0
        %2085 = vmatprep.subr.mxu0 0.0
        %2086 = vmatpush1.msra.mxu0 0.0
        %2087 = vmatprep.subr.mxu0 0.0
        %2088 = vmatpush1.msra.mxu0 0.0
        %2089 = vmatprep.subr.mxu0 0.0
        %2090 = vmatpush1.msra.mxu0 0.0
        %2091 = vmatprep.mubr.f32.mxu0 0.0
        %2092 = vmatmul.mubr.f32.gmra.mrb[0].mxu0 %v2025
        %v2093 = vpop.f32.mrb[0].mxu0
        %v2094 = vadd.f32 0.0, %v2093
        %v2095 = vpop.f32.mrb[0].mxu0
        %2096 = vdwg.mxu0
        %v2098 = vsel %vm468, %v1877, 0
        %2100 = vmatprep.subr.mxu0 0.0
        %2101 = vmatpush1.msra.mxu0 %v1528
        %2102 = vmatprep.subr.mxu0 0.0
        %2103 = vmatpush1.msra.mxu0 0.0
        %2104 = vmatprep.subr.mxu0 0.0
        %2105 = vmatpush1.msra.mxu0 0.0
        %2106 = vmatprep.subr.mxu0 0.0
        %2107 = vmatpush1.msra.mxu0 0.0
        %2108 = vmatprep.subr.mxu0 0.0
        %2109 = vmatpush1.msra.mxu0 0.0
        %2110 = vmatprep.subr.mxu0 0.0
        %2111 = vmatpush1.msra.mxu0 0.0
        %2112 = vmatprep.subr.mxu0 0.0
        %2113 = vmatpush1.msra.mxu0 0.0
        %2114 = vmatprep.subr.mxu0 0.0
        %2115 = vmatpush1.msra.mxu0 0.0
        %2116 = vmatprep.subr.mxu0 0.0
        %2117 = vmatpush1.msra.mxu0 0.0
        %2118 = vmatprep.subr.mxu0 0.0
        %2119 = vmatpush1.msra.mxu0 0.0
        %2120 = vmatprep.subr.mxu0 0.0
        %2121 = vmatpush1.msra.mxu0 0.0
        %2122 = vmatprep.subr.mxu0 0.0
        %2123 = vmatpush1.msra.mxu0 0.0
        %2124 = vmatprep.subr.mxu0 0.0
        %2125 = vmatpush1.msra.mxu0 0.0
        %2126 = vmatprep.subr.mxu0 0.0
        %2127 = vmatpush1.msra.mxu0 0.0
        %2128 = vmatprep.subr.mxu0 0.0
        %2129 = vmatpush1.msra.mxu0 0.0
        %2130 = vmatprep.subr.mxu0 0.0
        %2131 = vmatpush1.msra.mxu0 0.0
        %2132 = vmatprep.subr.mxu0 0.0
        %2133 = vmatpush1.msra.mxu0 0.0
        %2134 = vmatprep.subr.mxu0 0.0
        %2135 = vmatpush1.msra.mxu0 0.0
        %2136 = vmatprep.subr.mxu0 0.0
        %2137 = vmatpush1.msra.mxu0 0.0
        %2138 = vmatprep.subr.mxu0 0.0
        %2139 = vmatpush1.msra.mxu0 0.0
        %2140 = vmatprep.subr.mxu0 0.0
        %2141 = vmatpush1.msra.mxu0 0.0
        %2142 = vmatprep.subr.mxu0 0.0
        %2143 = vmatpush1.msra.mxu0 0.0
        %2144 = vmatprep.subr.mxu0 0.0
        %2145 = vmatpush1.msra.mxu0 0.0
        %2146 = vmatprep.subr.mxu0 0.0
        %2147 = vmatpush1.msra.mxu0 0.0
        %2148 = vmatprep.subr.mxu0 0.0
        %2149 = vmatpush1.msra.mxu0 0.0
        %2150 = vmatprep.subr.mxu0 0.0
        %2151 = vmatpush1.msra.mxu0 0.0
        %2152 = vmatprep.subr.mxu0 0.0
        %2153 = vmatpush1.msra.mxu0 0.0
        %2154 = vmatprep.subr.mxu0 0.0
        %2155 = vmatpush1.msra.mxu0 0.0
        %2156 = vmatprep.subr.mxu0 0.0
        %2157 = vmatpush1.msra.mxu0 0.0
        %2158 = vmatprep.subr.mxu0 0.0
        %2159 = vmatpush1.msra.mxu0 0.0
        %2160 = vmatprep.subr.mxu0 0.0
        %2161 = vmatpush1.msra.mxu0 0.0
        %2162 = vmatprep.subr.mxu0 0.0
        %2163 = vmatpush1.msra.mxu0 0.0
        %2164 = vmatprep.mubr.f32.mxu0 0.0
        %2165 = vmatmul.mubr.f32.gmra.mrb[0].mxu0 %v2098
        %v2166 = vpop.f32.mrb[0].mxu0
        %v2167 = vadd.f32 0.0, %v2166
        %v2168 = vpop.f32.mrb[0].mxu0
        %2169 = vdwg.mxu0
        %2171 = vrot.lane.b32.xlu0 %v2021, 8
        %v2172 = vpop.permute.xlu0 %2171
        %2175 = vrot.lane.b32.xlu0 %v2094, 16
        %v2176 = vpop.permute.xlu0 %2175
        %2179 = vrot.lane.b32.xlu0 %v2167, 24
        %v2180 = vpop.permute.xlu0 %2179
        %v2182 = vsel %vm468, %v1948, %v2172
        %v2183 = vsel %vm1118, %v2182, %v2176
        %v2184 = vsel %vm1120, %v2183, %v2180
        %s2185 = scalar_lea.vmem %s3, 32
        %v2186 = vld [vmem:[%s2185] sm:$0xff]
        %v2187 = vld [vmem:[%s2185 + $0x8] sm:$0xff]
        %v2188 = vld [vmem:[%s2185 + $0x10] sm:$0xff]
        %v2189 = vld [vmem:[%s2185 + $0x18] sm:$0xff]
        %v2191 = vsel %vm326, %v2184, 0
        %2193 = vmatprep.subr.mxu0 0.0
        %2194 = vmatpush1.msra.mxu0 %v2186
        %2195 = vmatprep.subr.mxu0 0.0
        %2196 = vmatpush1.msra.mxu0 %v2187
        %2197 = vmatprep.subr.mxu0 0.0
        %2198 = vmatpush1.msra.mxu0 %v2188
        %2199 = vmatprep.subr.mxu0 0.0
        %2200 = vmatpush1.msra.mxu0 %v2189
        %2201 = vmatprep.subr.mxu0 0.0
        %2202 = vmatpush1.msra.mxu0 0.0
        %2203 = vmatprep.subr.mxu0 0.0
        %2204 = vmatpush1.msra.mxu0 0.0
        %2205 = vmatprep.subr.mxu0 0.0
        %2206 = vmatpush1.msra.mxu0 0.0
        %2207 = vmatprep.subr.mxu0 0.0
        %2208 = vmatpush1.msra.mxu0 0.0
        %2209 = vmatprep.subr.mxu0 0.0
        %2210 = vmatpush1.msra.mxu0 0.0
        %2211 = vmatprep.subr.mxu0 0.0
        %2212 = vmatpush1.msra.mxu0 0.0
        %2213 = vmatprep.subr.mxu0 0.0
        %2214 = vmatpush1.msra.mxu0 0.0
        %2215 = vmatprep.subr.mxu0 0.0
        %2216 = vmatpush1.msra.mxu0 0.0
        %2217 = vmatprep.subr.mxu0 0.0
        %2218 = vmatpush1.msra.mxu0 0.0
        %2219 = vmatprep.subr.mxu0 0.0
        %2220 = vmatpush1.msra.mxu0 0.0
        %2221 = vmatprep.subr.mxu0 0.0
        %2222 = vmatpush1.msra.mxu0 0.0
        %2223 = vmatprep.subr.mxu0 0.0
        %2224 = vmatpush1.msra.mxu0 0.0
        %2225 = vmatprep.subr.mxu0 0.0
        %2226 = vmatpush1.msra.mxu0 0.0
        %2227 = vmatprep.subr.mxu0 0.0
        %2228 = vmatpush1.msra.mxu0 0.0
        %2229 = vmatprep.subr.mxu0 0.0
        %2230 = vmatpush1.msra.mxu0 0.0
        %2231 = vmatprep.subr.mxu0 0.0
        %2232 = vmatpush1.msra.mxu0 0.0
        %2233 = vmatprep.subr.mxu0 0.0
        %2234 = vmatpush1.msra.mxu0 0.0
        %2235 = vmatprep.subr.mxu0 0.0
        %2236 = vmatpush1.msra.mxu0 0.0
        %2237 = vmatprep.subr.mxu0 0.0
        %2238 = vmatpush1.msra.mxu0 0.0
        %2239 = vmatprep.subr.mxu0 0.0
        %2240 = vmatpush1.msra.mxu0 0.0
        %2241 = vmatprep.subr.mxu0 0.0
        %2242 = vmatpush1.msra.mxu0 0.0
        %2243 = vmatprep.subr.mxu0 0.0
        %2244 = vmatpush1.msra.mxu0 0.0
        %2245 = vmatprep.subr.mxu0 0.0
        %2246 = vmatpush1.msra.mxu0 0.0
        %2247 = vmatprep.subr.mxu0 0.0
        %2248 = vmatpush1.msra.mxu0 0.0
        %2249 = vmatprep.subr.mxu0 0.0
        %2250 = vmatpush1.msra.mxu0 0.0
        %2251 = vmatprep.subr.mxu0 0.0
        %2252 = vmatpush1.msra.mxu0 0.0
        %2253 = vmatprep.subr.mxu0 0.0
        %2254 = vmatpush1.msra.mxu0 0.0
        %2255 = vmatprep.subr.mxu0 0.0
        %2256 = vmatpush1.msra.mxu0 0.0
        %2257 = vmatprep.mubr.f32.mxu0 0.0
        %2258 = vmatmul.mubr.f32.gmra.mrb[0].mxu0 %v2191
        %v2259 = vpop.f32.mrb[0].mxu0
        %v2260 = vadd.f32 0.0, %v2259
        %v2261 = vpop.f32.mrb[0].mxu0
        %2262 = vdwg.mxu0
        %v2263 = vadd.f32 %v1392, %v2260
        %v2264 = vsel %vm326, %v2263, 0.0
        %2265 = vadd.xlane.f32.xlu0 %v2264
        %v2266 = vpop.xlane.xlu0 %2265
        %v2267 = vmul.f32 %v2266, %v330
        %v2268 = vsub.f32 %v2263, %v2267
        %v2269 = vmul.f32 %v2268, %v2268
        %v2270 = vsel %vm326, %v2269, 0.0
        %2271 = vadd.xlane.f32.xlu0 %v2270
        %v2272 = vpop.xlane.xlu0 %2271
        %v2273 = vmul.f32 %v2272, %v330
        %v2274 = vadd.f32 %v2273, 1e-05
        %v2275 = vrsqrt.pop %v2274
        %v2276 = vmul.f32 %v2268, %v2275
        %v2277 = vlaneseq
        %v2278 = vshrl.u32 %v2277, 7
        %v2279 = vsub.s32 0, %v2278
        %v2280 = vrot.slane %v1395, %v2279
        %v2281 = vmul.f32 %v2276, %v2280
        %v2282 = vlaneseq
        %v2283 = vshrl.u32 %v2282, 7
        %v2284 = vsub.s32 0, %v2283
        %v2285 = vrot.slane %v1396, %v2284
        %v2286 = vadd.f32 %v2281, %v2285
        %s2287 = scalar_lea.vmem %s4, 32
        %v2288 = vld [vmem:[%s2287] sm:$0xff]
        %v2289 = vld [vmem:[%s2287 + $0x8] sm:$0xff]
        %v2290 = vld [vmem:[%s2287 + $0x10] sm:$0xff]
        %v2291 = vld [vmem:[%s2287 + $0x18] sm:$0xff]
        %v2292 = vlaneseq
        %v2293 = vshrl.u32 %v2292, 7
        %v2294 = vsub.s32 0, %v2293
        %v2295 = vrot.slane %v1398, %v2294
        %v2297 = vsel %vm326, %v2286, 0
        %2299 = vmatprep.subr.mxu0 0.0
        %2300 = vmatpush1.msra.mxu0 %v2288
        %2301 = vmatprep.subr.mxu0 0.0
        %2302 = vmatpush1.msra.mxu0 %v2289
        %2303 = vmatprep.subr.mxu0 0.0
        %2304 = vmatpush1.msra.mxu0 %v2290
        %2305 = vmatprep.subr.mxu0 0.0
        %2306 = vmatpush1.msra.mxu0 %v2291
        %2307 = vmatprep.subr.mxu0 0.0
        %2308 = vmatpush1.msra.mxu0 0.0
        %2309 = vmatprep.subr.mxu0 0.0
        %2310 = vmatpush1.msra.mxu0 0.0
        %2311 = vmatprep.subr.mxu0 0.0
        %2312 = vmatpush1.msra.mxu0 0.0
        %2313 = vmatprep.subr.mxu0 0.0
        %2314 = vmatpush1.msra.mxu0 0.0
        %2315 = vmatprep.subr.mxu0 0.0
        %2316 = vmatpush1.msra.mxu0 0.0
        %2317 = vmatprep.subr.mxu0 0.0
        %2318 = vmatpush1.msra.mxu0 0.0
        %2319 = vmatprep.subr.mxu0 0.0
        %2320 = vmatpush1.msra.mxu0 0.0
        %2321 = vmatprep.subr.mxu0 0.0
        %2322 = vmatpush1.msra.mxu0 0.0
        %2323 = vmatprep.subr.mxu0 0.0
        %2324 = vmatpush1.msra.mxu0 0.0
        %2325 = vmatprep.subr.mxu0 0.0
        %2326 = vmatpush1.msra.mxu0 0.0
        %2327 = vmatprep.subr.mxu0 0.0
        %2328 = vmatpush1.msra.mxu0 0.0
        %2329 = vmatprep.subr.mxu0 0.0
        %2330 = vmatpush1.msra.mxu0 0.0
        %2331 = vmatprep.subr.mxu0 0.0
        %2332 = vmatpush1.msra.mxu0 0.0
        %2333 = vmatprep.subr.mxu0 0.0
        %2334 = vmatpush1.msra.mxu0 0.0
        %2335 = vmatprep.subr.mxu0 0.0
        %2336 = vmatpush1.msra.mxu0 0.0
        %2337 = vmatprep.subr.mxu0 0.0
        %2338 = vmatpush1.msra.mxu0 0.0
        %2339 = vmatprep.subr.mxu0 0.0
        %2340 = vmatpush1.msra.mxu0 0.0
        %2341 = vmatprep.subr.mxu0 0.0
        %2342 = vmatpush1.msra.mxu0 0.0
        %2343 = vmatprep.subr.mxu0 0.0
        %2344 = vmatpush1.msra.mxu0 0.0
        %2345 = vmatprep.subr.mxu0 0.0
        %2346 = vmatpush1.msra.mxu0 0.0
        %2347 = vmatprep.subr.mxu0 0.0
        %2348 = vmatpush1.msra.mxu0 0.0
        %2349 = vmatprep.subr.mxu0 0.0
        %2350 = vmatpush1.msra.mxu0 0.0
        %2351 = vmatprep.subr.mxu0 0.0
        %2352 = vmatpush1.msra.mxu0 0.0
        %2353 = vmatprep.subr.mxu0 0.0
        %2354 = vmatpush1.msra.mxu0 0.0
        %2355 = vmatprep.subr.mxu0 0.0
        %2356 = vmatpush1.msra.mxu0 0.0
        %2357 = vmatprep.subr.mxu0 0.0
        %2358 = vmatpush1.msra.mxu0 0.0
        %2359 = vmatprep.subr.mxu0 0.0
        %2360 = vmatpush1.msra.mxu0 0.0
        %2361 = vmatprep.subr.mxu0 0.0
        %2362 = vmatpush1.msra.mxu0 0.0
        %2363 = vmatprep.mubr.f32.mxu0 0.0
        %2364 = vmatmul.mubr.f32.gmra.mrb[0].mxu0 %v2297
        %v2365 = vpop.f32.mrb[0].mxu0
        %v2366 = vadd.f32 %v2295, %v2365
        %v2367 = vpop.f32.mrb[0].mxu0
        %2368 = vdwg.mxu0
        %v2369 = vmax.f32 %v2366, 0.0
        %s2370 = scalar_lea.vmem %s5, 64
        %v2371 = vld [vmem:[%s2370] sm:$0xff]
        %v2372 = vld [vmem:[%s2370 + $0x8] sm:$0xff]
        %v2373 = vld [vmem:[%s2370 + $0x10] sm:$0xff]
        %v2374 = vld [vmem:[%s2370 + $0x18] sm:$0xff]
        %v2375 = vld [vmem:[%s2370 + $0x20] sm:$0xff]
        %v2376 = vld [vmem:[%s2370 + $0x28] sm:$0xff]
        %v2377 = vld [vmem:[%s2370 + $0x30] sm:$0xff]
        %v2378 = vld [vmem:[%s2370 + $0x38] sm:$0xff]
        %v2380 = vsel %vm1313, %v2369, 0
        %2382 = vmatprep.subr.mxu0 0.0
        %2383 = vmatpush1.msra.mxu0 %v2371
        %2384 = vmatprep.subr.mxu0 0.0
        %2385 = vmatpush1.msra.mxu0 %v2372
        %2386 = vmatprep.subr.mxu0 0.0
        %2387 = vmatpush1.msra.mxu0 %v2373
        %2388 = vmatprep.subr.mxu0 0.0
        %2389 = vmatpush1.msra.mxu0 %v2374
        %2390 = vmatprep.subr.mxu0 0.0
        %2391 = vmatpush1.msra.mxu0 %v2375
        %2392 = vmatprep.subr.mxu0 0.0
        %2393 = vmatpush1.msra.mxu0 %v2376
        %2394 = vmatprep.subr.mxu0 0.0
        %2395 = vmatpush1.msra.mxu0 %v2377
        %2396 = vmatprep.subr.mxu0 0.0
        %2397 = vmatpush1.msra.mxu0 %v2378
        %2398 = vmatprep.subr.mxu0 0.0
        %2399 = vmatpush1.msra.mxu0 0.0
        %2400 = vmatprep.subr.mxu0 0.0
        %2401 = vmatpush1.msra.mxu0 0.0
        %2402 = vmatprep.subr.mxu0 0.0
        %2403 = vmatpush1.msra.mxu0 0.0
        %2404 = vmatprep.subr.mxu0 0.0
        %2405 = vmatpush1.msra.mxu0 0.0
        %2406 = vmatprep.subr.mxu0 0.0
        %2407 = vmatpush1.msra.mxu0 0.0
        %2408 = vmatprep.subr.mxu0 0.0
        %2409 = vmatpush1.msra.mxu0 0.0
        %2410 = vmatprep.subr.mxu0 0.0
        %2411 = vmatpush1.msra.mxu0 0.0
        %2412 = vmatprep.subr.mxu0 0.0
        %2413 = vmatpush1.msra.mxu0 0.0
        %2414 = vmatprep.subr.mxu0 0.0
        %2415 = vmatpush1.msra.mxu0 0.0
        %2416 = vmatprep.subr.mxu0 0.0
        %2417 = vmatpush1.msra.mxu0 0.0
        %2418 = vmatprep.subr.mxu0 0.0
        %2419 = vmatpush1.msra.mxu0 0.0
        %2420 = vmatprep.subr.mxu0 0.0
        %2421 = vmatpush1.msra.mxu0 0.0
        %2422 = vmatprep.subr.mxu0 0.0
        %2423 = vmatpush1.msra.mxu0 0.0
        %2424 = vmatprep.subr.mxu0 0.0
        %2425 = vmatpush1.msra.mxu0 0.0
        %2426 = vmatprep.subr.mxu0 0.0
        %2427 = vmatpush1.msra.mxu0 0.0
        %2428 = vmatprep.subr.mxu0 0.0
        %2429 = vmatpush1.msra.mxu0 0.0
        %2430 = vmatprep.subr.mxu0 0.0
        %2431 = vmatpush1.msra.mxu0 0.0
        %2432 = vmatprep.subr.mxu0 0.0
        %2433 = vmatpush1.msra.mxu0 0.0
        %2434 = vmatprep.subr.mxu0 0.0
        %2435 = vmatpush1.msra.mxu0 0.0
        %2436 = vmatprep.subr.mxu0 0.0
        %2437 = vmatpush1.msra.mxu0 0.0
        %2438 = vmatprep.subr.mxu0 0.0
        %2439 = vmatpush1.msra.mxu0 0.0
        %2440 = vmatprep.subr.mxu0 0.0
        %2441 = vmatpush1.msra.mxu0 0.0
        %2442 = vmatprep.subr.mxu0 0.0
        %2443 = vmatpush1.msra.mxu0 0.0
        %2444 = vmatprep.subr.mxu0 0.0
        %2445 = vmatpush1.msra.mxu0 0.0
        %2446 = vmatprep.mubr.f32.mxu0 0.0
        %2447 = vmatmul.mubr.f32.gmra.mrb[0].mxu0 %v2380
        %v2448 = vpop.f32.mrb[0].mxu0
        %v2449 = vadd.f32 0.0, %v2448
        %v2450 = vpop.f32.mrb[0].mxu0
        %2451 = vdwg.mxu0
        %v2452 = vadd.f32 %v2263, %v2449
        %v2453 = vlaneseq
        %v2454 = vshrl.u32 %v2453, 7
        %v2455 = vsub.s32 0, %v2454
        %v2456 = vrot.slane %v1397, %v2455
        %v2457 = vadd.f32 %v2452, %v2456
        %v2458 = vld [vmem:[%s7 + $0x12] sm:$0x1]
        %v2459 = vld [vmem:[%s7 + $0x13] sm:$0x1]
        %v2460 = vsel %vm326, %v2457, 0.0
        %2461 = vadd.xlane.f32.xlu0 %v2460
        %v2462 = vpop.xlane.xlu0 %2461
        %v2463 = vmul.f32 %v2462, %v330
        %v2464 = vsub.f32 %v2457, %v2463
        %v2465 = vmul.f32 %v2464, %v2464
        %v2466 = vsel %vm326, %v2465, 0.0
        %2467 = vadd.xlane.f32.xlu0 %v2466
        %v2468 = vpop.xlane.xlu0 %2467
        %v2469 = vmul.f32 %v2468, %v330
        %v2470 = vadd.f32 %v2469, 1e-05
        %v2471 = vrsqrt.pop %v2470
        %v2472 = vmul.f32 %v2464, %v2471
        %v2473 = vlaneseq
        %v2474 = vshrl.u32 %v2473, 7
        %v2475 = vsub.s32 0, %v2474
        %v2476 = vrot.slane %v2458, %v2475
        %v2477 = vmul.f32 %v2472, %v2476
        %v2478 = vlaneseq
        %v2479 = vshrl.u32 %v2478, 7
        %v2480 = vsub.s32 0, %v2479
        %v2481 = vrot.slane %v2459, %v2480
        %v2482 = vadd.f32 %v2477, %v2481
        %2483 = vst.msk [vmem:[%s307] sm:$0xff] %vm326, %v2482
        %s2484 = sand.u32 %s208, 1
        %s2485 = scalar_lea.sflag [#allocation3], %s2484
        %s2486 = sand.u32 %s208, 1
        %s2487 = smul.addr %s2486, 8
        %s2488 = scalar_lea.vmem [#allocation2], %s2487
        // Predicated region
        $region53: #{encoder_tower_forward.1} parent=51 // pred_check
          %p2489 = pneg %p218
        $region54: #{encoder_tower_forward.1} parent=51 // pred_check_branch
          %2491 = sbr.rel (%p2489) target = $region56
        $region55: #{encoder_tower_forward.1} parent=51 // pred_region
          %s2493 = ssub.s32 128, 128
          %2494 = vsyncadd %s2485, %s2493
          %s2495 = smul.addr %s22, 128
          %s2496 = scalar_lea.hbm %s8, %s2495
          %s2498 = sshll.u32 %s2488, 4
          %s2499 = int_to_ptr.vmem [resolvable:$true] %s2498
          %2501 = dma.vmem_to_hbm [thread:$0]  %s2499, 128, %s2496, %s2485
        $region56: #{encoder_tower_forward.1} parent=51 // pred_fallthru
          _
      $region52: #{encoder_tower_forward.1} parent=5 // pred_fallthru
        _
      %p2502 = scmp.le.s32.totalorder 2, %s17
      // Predicated region
      $region57: #{encoder_tower_forward.1} parent=5 // pred_check
        %p2503 = pneg %p2502
      $region58: #{encoder_tower_forward.1} parent=5 // pred_check_branch
        %2505 = sbr.rel (%p2503) target = $region60
      $region59: #{encoder_tower_forward.1} parent=5 // pred_region
        %s2506 = ssub.s32 %s17, 2
        // Predicated region
        $region61: #{encoder_tower_forward.1} parent=59 // pred_check
          %p2507 = pneg %p224
        $region62: #{encoder_tower_forward.1} parent=59 // pred_check_branch
          %2509 = sbr.rel (%p2507) target = $region64
        $region63: #{encoder_tower_forward.1} parent=59 // pred_region
          %s2510 = sand.u32 %s209, 1
          %s2511 = scalar_lea.sflag [#allocation3], %s2510
          %s2512 = sand.u32 %s209, 1
          %s2513 = smul.addr %s2512, 8
          %s2514 = scalar_lea.vmem [#allocation2], %s2513
          %2515 = dma.done %s2511, 128
        $region64: #{encoder_tower_forward.1} parent=59 // pred_fallthru
          _
      $region60: #{encoder_tower_forward.1} parent=5 // pred_fallthru
        _
    $region6: #{encoder_tower_forward.1} parent=1 // loop_footer
      %s21 = sadd.s32 1, %s17
    $region7: #{encoder_tower_forward.1} parent=1 // loop_footer_branch
      %16 = sbr.rel target = $region3
    $region8: #{encoder_tower_forward.1} parent=1 // loop_exit
      _
    %2516 = vsyncpa [#allocation3], 1
    %s2517 = scalar_lea.sflag [#allocation3], 1
    %2518 = vsyncpa %s2517, 1

</llo_original>
